<compile_context>
chip_gen: v7x
topology: tpu7x:2x2x1
jax: 0.10.0
libtpu: 0.0.40
codegen_flags: <defaults>
</compile_context>

<pallas_src>
import functools

import jax
import jax.numpy as jnp
from jax.experimental import pallas as pl
from jax.experimental.pallas import tpu as pltpu


# ------------------------------ Pallas kernel ------------------------------ #
def _ssh_conv3x3_kernel(x_ref, w_ref, b_ref, *o_refs, couts, acts, slope):
    """Fused 3x3 conv (stride 1, pad 1) + folded BN + per-branch activation.

    x_ref : (1, H, W, Cin)        bf16 input tile (one batch element, unpadded)
    w_ref : (9*Cin, sum(couts))   bf16 weights, tap-major, BN scale pre-folded
    b_ref : (1, sum(couts))       f32 folded BN bias
    o_refs: one (1, H, W, cout_i) output per fused branch
    """
    _, H, W, Cin = x_ref.shape

    x = x_ref[0]                                           # (H, W, Cin) bf16

    # In-kernel halo (zero) padding -- no extra HBM round trip via jnp.pad.
    zrow = jnp.zeros((1, W, Cin), x.dtype)
    zcol = jnp.zeros((H + 2, 1, Cin), x.dtype)
    xp = jnp.concatenate([zrow, x, zrow], axis=0)          # (H+2, W,   Cin)
    xp = jnp.concatenate([zcol, xp, zcol], axis=1)         # (H+2, W+2, Cin)

    # im2col slab: one MXU matmul over K = 9*Cin instead of 9 small dots.
    patches = [xp[ky:ky + H, kx:kx + W, :].reshape(H * W, Cin)
               for ky in range(3) for kx in range(3)]
    col = jnp.concatenate(patches, axis=-1)                # (H*W, 9*Cin) bf16

    y = jnp.dot(col, w_ref[...], preferred_element_type=jnp.float32)
    y = y + b_ref[...]                                     # folded BN bias (f32)

    off = 0
    for o_ref, cout, act in zip(o_refs, couts, acts):
        z = y[:, off:off + cout]
        off += cout
        if act == "relu":
            z = jnp.maximum(z, 0.0)
        else:  # "leaky"; slope == 0.0 degenerates to ReLU (out_channel > 64)
            z = jnp.where(z >= 0.0, z, z * slope)
        o_ref[0] = z.reshape(H, W, cout).astype(o_ref.dtype)


def ssh_fused_conv(x_nhwc, w, bias, *, couts, acts, out_dtypes, slope):
    """x_nhwc: (N, H, W, Cin) bf16, unpadded. Returns one array per branch."""
    N, H, W, Cin = x_nhwc.shape
    K, Ctot = w.shape
    assert K == 9 * Cin and Ctot == sum(couts)

    kern = functools.partial(_ssh_conv3x3_kernel, couts=tuple(couts),
                             acts=tuple(acts), slope=float(slope))
    out_shape = tuple(jax.ShapeDtypeStruct((N, H, W, c), dt)
                      for c, dt in zip(couts, out_dtypes))
    out_specs = tuple(pl.BlockSpec((1, H, W, c), lambda n: (n, 0, 0, 0))
                      for c in couts)
    # NOTE: for production RetinaFace feature maps (e.g. 80x80x256) add a
    # row-block grid axis with a 2-row halo so per-step VMEM stays within the
    # v7x 64 MiB budget and both v7x TensorCores are busy at batch=1.
    return pl.pallas_call(
        kern,
        out_shape=out_shape,
        grid=(N,),
        in_specs=[
            pl.BlockSpec((1, H, W, Cin), lambda n: (n, 0, 0, 0)),
            pl.BlockSpec((K, Ctot), lambda n: (0, 0)),
            pl.BlockSpec((1, Ctot), lambda n: (0, 0)),
        ],
        out_specs=out_specs,
        compiler_params=pltpu.CompilerParams(
            dimension_semantics=("parallel",)),
    )(x_nhwc, w, bias)


# ------------------------- parameter construction ------------------------- #
def _make_conv_bn_params(key, cin, cout):
    """Deterministic synthetic Conv2d(3x3, no bias) + BatchNorm2d params."""
    kw, kg, kb, km, kv = jax.random.split(key, 5)
    w_oihw = jax.random.normal(kw, (cout, cin, 3, 3), jnp.float32) * 0.1
    gamma = 1.0 + 0.1 * jax.random.normal(kg, (cout,), jnp.float32)
    beta = 0.1 * jax.random.normal(kb, (cout,), jnp.float32)
    mean = 0.1 * jax.random.normal(km, (cout,), jnp.float32)
    var = jnp.abs(jax.random.normal(kv, (cout,), jnp.float32)) + 0.5
    eps = 1e-5
    scale = gamma / jnp.sqrt(var + eps)                    # eval-mode BN fold
    bias = beta - mean * scale
    # (O,I,3,3) -> (3,3,I,O) -> (9*I, O) tap-major; fold BN scale into weights.
    w_folded = (jnp.transpose(w_oihw, (2, 3, 1, 0)).reshape(9 * cin, cout)
                * scale[None, :])
    return {"w_folded": w_folded, "bias": bias,
            "w_oihw": w_oihw, "scale": scale}


def _pack(branches):
    """Concatenate branch weights/biases along Cout for one fused pallas_call."""
    w = jnp.concatenate([b["w_folded"] for b in branches], axis=-1)
    bias = jnp.concatenate([b["bias"] for b in branches], axis=-1)
    return {"w": w.astype(jnp.bfloat16),
            "b": bias.reshape(1, -1).astype(jnp.float32)}


def init_ssh_params(key, in_channel, out_channel):
    assert out_channel % 4 == 0
    ks = jax.random.split(key, 5)
    raw = {
        "conv3X3":   _make_conv_bn_params(ks[0], in_channel, out_channel // 2),
        "conv5X5_1": _make_conv_bn_params(ks[1], in_channel, out_channel // 4),
        "conv5X5_2": _make_conv_bn_params(ks[2], out_channel // 4, out_channel // 4),
        "conv7X7_2": _make_conv_bn_params(ks[3], out_channel // 4, out_channel // 4),
        "conv7x7_3": _make_conv_bn_params(ks[4], out_channel // 4, out_channel // 4),
    }
    packs = {
        "A": _pack([raw["conv3X3"], raw["conv5X5_1"]]),
        "B": _pack([raw["conv5X5_2"], raw["conv7X7_2"]]),
        "C": _pack([raw["conv7x7_3"]]),
    }
    return {"raw": raw, "packs": packs}


# ------------------------------ SSH forward -------------------------------- #
@functools.partial(jax.jit, static_argnums=(2,))
def ssh_forward(x_nchw, packs, out_channel):
    oc = out_channel
    slope = 0.1 if oc <= 64 else 0.0
    # NCHW -> NHWC once at the module boundary; bf16 activations inside.
    x = jnp.transpose(x_nchw, (0, 2, 3, 1)).astype(jnp.bfloat16)

    c3, c5_1 = ssh_fused_conv(
        x, packs["A"]["w"], packs["A"]["b"],
        couts=(oc // 2, oc // 4), acts=("relu", "leaky"),
        out_dtypes=(jnp.float32, jnp.bfloat16), slope=slope)

    c5, c7_2 = ssh_fused_conv(
        c5_1, packs["B"]["w"], packs["B"]["b"],
        couts=(oc // 4, oc // 4), acts=("relu", "leaky"),
        out_dtypes=(jnp.float32, jnp.bfloat16), slope=slope)

    (c7,) = ssh_fused_conv(
        c7_2, packs["C"]["w"], packs["C"]["b"],
        couts=(oc // 4,), acts=("relu",),
        out_dtypes=(jnp.float32,), slope=slope)

    out = jnp.concatenate([c3, c5, c7], axis=-1)
    return jnp.transpose(out, (0, 3, 1, 2))                # NHWC -> NCHW


# --------------------------- pure-JAX reference ---------------------------- #
def _ref_conv3x3_bn(x_nhwc, p, act, slope):
    # Mirror the kernel's quantization points: BN scale folded into weights,
    # weights and activations rounded to bf16, math in f32.
    w_hwio = jnp.transpose(p["w_oihw"], (2, 3, 1, 0)) * p["scale"]
    w_hwio = w_hwio.astype(jnp.bfloat16).astype(jnp.float32)
    x = x_nhwc.astype(jnp.bfloat16).astype(jnp.float32)
    y = jax.lax.conv_general_dilated(
        x, w_hwio, window_strides=(1, 1), padding="SAME",
        dimension_numbers=("NHWC", "HWIO", "NHWC"))
    y = y + p["bias"]
    if act == "leaky":
        y = jnp.where(y >= 0.0, y, y * slope)
    return y


def ssh_forward_ref(x_nchw, raw, out_channel):
    slope = 0.1 if out_channel <= 64 else 0.0
    x = jnp.transpose(x_nchw, (0, 2, 3, 1))
    c3 = _ref_conv3x3_bn(x, raw["conv3X3"], "none", slope)
    c5_1 = _ref_conv3x3_bn(x, raw["conv5X5_1"], "leaky", slope)
    c5 = _ref_conv3x3_bn(c5_1, raw["conv5X5_2"], "none", slope)
    c7_2 = _ref_conv3x3_bn(c5_1, raw["conv7X7_2"], "leaky", slope)
    c7 = _ref_conv3x3_bn(c7_2, raw["conv7x7_3"], "none", slope)
    out = jnp.maximum(jnp.concatenate([c3, c5, c7], axis=-1), 0.0)
    return jnp.transpose(out, (0, 3, 1, 2))


# ---------------------------------- main ----------------------------------- #
if __name__ == "__main__":
    N, IN_CH, OUT_CH, H, W = 2, 8, 16, 16, 16

    key = jax.random.PRNGKey(0)
    kx_, kp = jax.random.split(key)
    x = jax.random.normal(kx_, (N, IN_CH, H, W), jnp.float32)   # NCHW like torch
    params = init_ssh_params(kp, IN_CH, OUT_CH)

    out = jax.block_until_ready(ssh_forward(x, params["packs"], OUT_CH))
    ref = jax.block_until_ready(ssh_forward_ref(x, params["raw"], OUT_CH))

    assert out.shape == (N, OUT_CH, H, W), out.shape
    max_err = float(jnp.max(jnp.abs(out - ref)))
    assert jnp.allclose(out, ref, atol=1e-2, rtol=1e-2), max_err

    print("KERNEL_OK")
</pallas_src>

<mosaic_0001>
module attributes {stable_mosaic.version = 11 : i64} {
  func.func @_ssh_conv3x3_kernel(%arg0: i32, %arg1: memref<1x16x16x4xbf16, #tpu.memory_space<vmem>>, %arg2: memref<36x8xbf16, #tpu.memory_space<vmem>>, %arg3: memref<1x8xf32, #tpu.memory_space<vmem>>, %arg4: memref<1x16x16x4xf32, #tpu.memory_space<vmem>>, %arg5: memref<1x16x16x4xbf16, #tpu.memory_space<vmem>>) attributes {dimension_semantics = [#tpu.dimension_semantics<parallel>], iteration_bounds = array<i64: 2>, scalar_prefetch = 0 : i64, scratch_operands = 0 : i64, tpu.core_type = #tpu.core_type<tc>, window_params = [{transform_indices = @transform_0, window_bounds = array<i64: 1, 16, 16, 4>}, {pipeline_mode = #tpu.pipeline_mode<synchronous>, transform_indices = @transform_1, window_bounds = array<i64: 36, 8>}, {pipeline_mode = #tpu.pipeline_mode<synchronous>, transform_indices = @transform_2, window_bounds = array<i64: 1, 8>}, {transform_indices = @transform_3, window_bounds = array<i64: 1, 16, 16, 4>}, {transform_indices = @transform_4, window_bounds = array<i64: 1, 16, 16, 4>}]} {
    %c0 = arith.constant 0 : index
    %c0_0 = arith.constant 0 : index
    %c0_1 = arith.constant 0 : index
    %c0_2 = arith.constant 0 : index
    %0 = vector.load %arg1[%c0, %c0_0, %c0_1, %c0_2] : memref<1x16x16x4xbf16, #tpu.memory_space<vmem>>, vector<1x16x16x4xbf16>
    %1 = vector.shape_cast %0 : vector<1x16x16x4xbf16> to vector<16x16x4xbf16>
    %cst = arith.constant 0.000000e+00 : bf16
    %2 = vector.broadcast %cst : bf16 to vector<1x16x4xbf16>
    %cst_3 = arith.constant 0.000000e+00 : bf16
    %3 = vector.broadcast %cst_3 : bf16 to vector<18x1x4xbf16>
    %4 = tpu.concatenate %2, %1, %2 in 0 : vector<1x16x4xbf16>, vector<16x16x4xbf16>, vector<1x16x4xbf16> -> vector<18x16x4xbf16>
    %5 = tpu.concatenate %3, %4, %3 in 1 : vector<18x1x4xbf16>, vector<18x16x4xbf16>, vector<18x1x4xbf16> -> vector<18x18x4xbf16>
    %6 = vector.extract_strided_slice %5 {offsets = [0, 0, 0], sizes = [16, 16, 4], strides = [1, 1, 1]} : vector<18x18x4xbf16> to vector<16x16x4xbf16>
    %7 = vector.shape_cast %6 : vector<16x16x4xbf16> to vector<256x4xbf16>
    %8 = vector.extract_strided_slice %5 {offsets = [0, 1, 0], sizes = [16, 16, 4], strides = [1, 1, 1]} : vector<18x18x4xbf16> to vector<16x16x4xbf16>
    %9 = vector.shape_cast %8 : vector<16x16x4xbf16> to vector<256x4xbf16>
    %10 = vector.extract_strided_slice %5 {offsets = [0, 2, 0], sizes = [16, 16, 4], strides = [1, 1, 1]} : vector<18x18x4xbf16> to vector<16x16x4xbf16>
    %11 = vector.shape_cast %10 : vector<16x16x4xbf16> to vector<256x4xbf16>
    %12 = vector.extract_strided_slice %5 {offsets = [1, 0, 0], sizes = [16, 16, 4], strides = [1, 1, 1]} : vector<18x18x4xbf16> to vector<16x16x4xbf16>
    %13 = vector.shape_cast %12 : vector<16x16x4xbf16> to vector<256x4xbf16>
    %14 = vector.extract_strided_slice %5 {offsets = [1, 1, 0], sizes = [16, 16, 4], strides = [1, 1, 1]} : vector<18x18x4xbf16> to vector<16x16x4xbf16>
    %15 = vector.shape_cast %14 : vector<16x16x4xbf16> to vector<256x4xbf16>
    %16 = vector.extract_strided_slice %5 {offsets = [1, 2, 0], sizes = [16, 16, 4], strides = [1, 1, 1]} : vector<18x18x4xbf16> to vector<16x16x4xbf16>
    %17 = vector.shape_cast %16 : vector<16x16x4xbf16> to vector<256x4xbf16>
    %18 = vector.extract_strided_slice %5 {offsets = [2, 0, 0], sizes = [16, 16, 4], strides = [1, 1, 1]} : vector<18x18x4xbf16> to vector<16x16x4xbf16>
    %19 = vector.shape_cast %18 : vector<16x16x4xbf16> to vector<256x4xbf16>
    %20 = vector.extract_strided_slice %5 {offsets = [2, 1, 0], sizes = [16, 16, 4], strides = [1, 1, 1]} : vector<18x18x4xbf16> to vector<16x16x4xbf16>
    %21 = vector.shape_cast %20 : vector<16x16x4xbf16> to vector<256x4xbf16>
    %22 = vector.extract_strided_slice %5 {offsets = [2, 2, 0], sizes = [16, 16, 4], strides = [1, 1, 1]} : vector<18x18x4xbf16> to vector<16x16x4xbf16>
    %23 = vector.shape_cast %22 : vector<16x16x4xbf16> to vector<256x4xbf16>
    %24 = tpu.concatenate %7, %9, %11, %13, %15, %17, %19, %21, %23 in 1 : vector<256x4xbf16>, vector<256x4xbf16>, vector<256x4xbf16>, vector<256x4xbf16>, vector<256x4xbf16>, vector<256x4xbf16>, vector<256x4xbf16>, vector<256x4xbf16>, vector<256x4xbf16> -> vector<256x36xbf16>
    %c0_4 = arith.constant 0 : index
    %c0_5 = arith.constant 0 : index
    %25 = vector.load %arg2[%c0_4, %c0_5] : memref<36x8xbf16, #tpu.memory_space<vmem>>, vector<36x8xbf16>
    %cst_6 = arith.constant dense<0.000000e+00> : vector<256x8xf32>
    %26 = tpu.matmul %24, %25, %cst_6 {dimension_numbers = #tpu.dot_dimension_numbers<[1], [0], [0], [1], [0, 0, 1, 1], [], []>} : vector<256x36xbf16>, vector<36x8xbf16>, vector<256x8xf32> -> vector<256x8xf32>
    %c0_7 = arith.constant 0 : index
    %c0_8 = arith.constant 0 : index
    %27 = vector.load %arg3[%c0_7, %c0_8] : memref<1x8xf32, #tpu.memory_space<vmem>>, vector<1x8xf32>
    %28 = vector.broadcast %27 : vector<1x8xf32> to vector<256x8xf32>
    %29 = arith.addf %26, %28 : vector<256x8xf32>
    %30 = vector.extract_strided_slice %29 {offsets = [0, 0], sizes = [256, 4], strides = [1, 1]} : vector<256x8xf32> to vector<256x4xf32>
    %cst_9 = arith.constant 0.000000e+00 : f32
    %31 = vector.broadcast %cst_9 : f32 to vector<256x4xf32>
    %32 = arith.maximumf %30, %31 : vector<256x4xf32>
    %33 = vector.shape_cast %32 : vector<256x4xf32> to vector<16x16x4xf32>
    %c0_10 = arith.constant 0 : index
    %c0_11 = arith.constant 0 : index
    %c0_12 = arith.constant 0 : index
    %c0_13 = arith.constant 0 : index
    %34 = vector.load %arg4[%c0_10, %c0_11, %c0_12, %c0_13] : memref<1x16x16x4xf32, #tpu.memory_space<vmem>>, vector<1x16x16x4xf32>
    %35 = vector.shape_cast %34 : vector<1x16x16x4xf32> to vector<16x16x4xf32>
    %36 = vector.shape_cast %33 : vector<16x16x4xf32> to vector<1x16x16x4xf32>
    tpu.vector_store %arg4[%c0_10, %c0_11, %c0_12, %c0_13], %36 {strides = array<i32>} : memref<1x16x16x4xf32, #tpu.memory_space<vmem>>, vector<1x16x16x4xf32>,
    %37 = vector.extract_strided_slice %29 {offsets = [0, 4], sizes = [256, 4], strides = [1, 1]} : vector<256x8xf32> to vector<256x4xf32>
    %cst_14 = arith.constant 0.000000e+00 : f32
    %38 = vector.broadcast %cst_14 : f32 to vector<256x4xf32>
    %39 = arith.cmpf oge, %37, %38 : vector<256x4xf32>
    %cst_15 = arith.constant 1.000000e-01 : f32
    %40 = vector.broadcast %cst_15 : f32 to vector<256x4xf32>
    %41 = arith.mulf %37, %40 : vector<256x4xf32>
    %42 = arith.select %39, %37, %41 : vector<256x4xi1>, vector<256x4xf32>
    %43 = vector.shape_cast %42 : vector<256x4xf32> to vector<16x16x4xf32>
    %44 = arith.truncf %43 : vector<16x16x4xf32> to vector<16x16x4xbf16>
    %c0_16 = arith.constant 0 : index
    %c0_17 = arith.constant 0 : index
    %c0_18 = arith.constant 0 : index
    %c0_19 = arith.constant 0 : index
    %45 = vector.load %arg5[%c0_16, %c0_17, %c0_18, %c0_19] : memref<1x16x16x4xbf16, #tpu.memory_space<vmem>>, vector<1x16x16x4xbf16>
    %46 = vector.shape_cast %45 : vector<1x16x16x4xbf16> to vector<16x16x4xbf16>
    %47 = vector.shape_cast %44 : vector<16x16x4xbf16> to vector<1x16x16x4xbf16>
    tpu.vector_store %arg5[%c0_16, %c0_17, %c0_18, %c0_19], %47 {strides = array<i32>} : memref<1x16x16x4xbf16, #tpu.memory_space<vmem>>, vector<1x16x16x4xbf16>,
    return
  }
  func.func @transform_0(%arg0: i32) -> (i32, i32, i32, i32) {
    %c0_i32 = arith.constant 0 : i32
    %c0_i32_0 = arith.constant 0 : i32
    %c0_i32_1 = arith.constant 0 : i32
    %c0_i32_2 = arith.constant 0 : i32
    return %arg0, %c0_i32, %c0_i32_0, %c0_i32_1 : i32, i32, i32, i32
  }
  func.func @transform_1(%arg0: i32) -> (i32, i32) {
    %c0_i32 = arith.constant 0 : i32
    %c0_i32_0 = arith.constant 0 : i32
    %c0_i32_1 = arith.constant 0 : i32
    return %c0_i32, %c0_i32_0 : i32, i32
  }
  func.func @transform_2(%arg0: i32) -> (i32, i32) {
    %c0_i32 = arith.constant 0 : i32
    %c0_i32_0 = arith.constant 0 : i32
    %c0_i32_1 = arith.constant 0 : i32
    return %c0_i32, %c0_i32_0 : i32, i32
  }
  func.func @transform_3(%arg0: i32) -> (i32, i32, i32, i32) {
    %c0_i32 = arith.constant 0 : i32
    %c0_i32_0 = arith.constant 0 : i32
    %c0_i32_1 = arith.constant 0 : i32
    %c0_i32_2 = arith.constant 0 : i32
    return %arg0, %c0_i32, %c0_i32_0, %c0_i32_1 : i32, i32, i32, i32
  }
  func.func @transform_4(%arg0: i32) -> (i32, i32, i32, i32) {
    %c0_i32 = arith.constant 0 : i32
    %c0_i32_0 = arith.constant 0 : i32
    %c0_i32_1 = arith.constant 0 : i32
    %c0_i32_2 = arith.constant 0 : i32
    return %arg0, %c0_i32, %c0_i32_0, %c0_i32_1 : i32, i32, i32, i32
  }
}

module attributes {stable_mosaic.version = 11 : i64} {
  func.func @_ssh_conv3x3_kernel(%arg0: i32, %arg1: memref<1x16x16x8xbf16, #tpu.memory_space<vmem>>, %arg2: memref<72x12xbf16, #tpu.memory_space<vmem>>, %arg3: memref<1x12xf32, #tpu.memory_space<vmem>>, %arg4: memref<1x16x16x8xf32, #tpu.memory_space<vmem>>, %arg5: memref<1x16x16x4xbf16, #tpu.memory_space<vmem>>) attributes {dimension_semantics = [#tpu.dimension_semantics<parallel>], iteration_bounds = array<i64: 2>, scalar_prefetch = 0 : i64, scratch_operands = 0 : i64, tpu.core_type = #tpu.core_type<tc>, window_params = [{transform_indices = @transform_0, window_bounds = array<i64: 1, 16, 16, 8>}, {pipeline_mode = #tpu.pipeline_mode<synchronous>, transform_indices = @transform_1, window_bounds = array<i64: 72, 12>}, {pipeline_mode = #tpu.pipeline_mode<synchronous>, transform_indices = @transform_2, window_bounds = array<i64: 1, 12>}, {transform_indices = @transform_3, window_bounds = array<i64: 1, 16, 16, 8>}, {transform_indices = @transform_4, window_bounds = array<i64: 1, 16, 16, 4>}]} {
    %c0 = arith.constant 0 : index
    %c0_0 = arith.constant 0 : index
    %c0_1 = arith.constant 0 : index
    %c0_2 = arith.constant 0 : index
    %0 = vector.load %arg1[%c0, %c0_0, %c0_1, %c0_2] : memref<1x16x16x8xbf16, #tpu.memory_space<vmem>>, vector<1x16x16x8xbf16>
    %1 = vector.shape_cast %0 : vector<1x16x16x8xbf16> to vector<16x16x8xbf16>
    %cst = arith.constant 0.000000e+00 : bf16
    %2 = vector.broadcast %cst : bf16 to vector<1x16x8xbf16>
    %cst_3 = arith.constant 0.000000e+00 : bf16
    %3 = vector.broadcast %cst_3 : bf16 to vector<18x1x8xbf16>
    %4 = tpu.concatenate %2, %1, %2 in 0 : vector<1x16x8xbf16>, vector<16x16x8xbf16>, vector<1x16x8xbf16> -> vector<18x16x8xbf16>
    %5 = tpu.concatenate %3, %4, %3 in 1 : vector<18x1x8xbf16>, vector<18x16x8xbf16>, vector<18x1x8xbf16> -> vector<18x18x8xbf16>
    %6 = vector.extract_strided_slice %5 {offsets = [0, 0, 0], sizes = [16, 16, 8], strides = [1, 1, 1]} : vector<18x18x8xbf16> to vector<16x16x8xbf16>
    %7 = vector.shape_cast %6 : vector<16x16x8xbf16> to vector<256x8xbf16>
    %8 = vector.extract_strided_slice %5 {offsets = [0, 1, 0], sizes = [16, 16, 8], strides = [1, 1, 1]} : vector<18x18x8xbf16> to vector<16x16x8xbf16>
    %9 = vector.shape_cast %8 : vector<16x16x8xbf16> to vector<256x8xbf16>
    %10 = vector.extract_strided_slice %5 {offsets = [0, 2, 0], sizes = [16, 16, 8], strides = [1, 1, 1]} : vector<18x18x8xbf16> to vector<16x16x8xbf16>
    %11 = vector.shape_cast %10 : vector<16x16x8xbf16> to vector<256x8xbf16>
    %12 = vector.extract_strided_slice %5 {offsets = [1, 0, 0], sizes = [16, 16, 8], strides = [1, 1, 1]} : vector<18x18x8xbf16> to vector<16x16x8xbf16>
    %13 = vector.shape_cast %12 : vector<16x16x8xbf16> to vector<256x8xbf16>
    %14 = vector.extract_strided_slice %5 {offsets = [1, 1, 0], sizes = [16, 16, 8], strides = [1, 1, 1]} : vector<18x18x8xbf16> to vector<16x16x8xbf16>
    %15 = vector.shape_cast %14 : vector<16x16x8xbf16> to vector<256x8xbf16>
    %16 = vector.extract_strided_slice %5 {offsets = [1, 2, 0], sizes = [16, 16, 8], strides = [1, 1, 1]} : vector<18x18x8xbf16> to vector<16x16x8xbf16>
    %17 = vector.shape_cast %16 : vector<16x16x8xbf16> to vector<256x8xbf16>
    %18 = vector.extract_strided_slice %5 {offsets = [2, 0, 0], sizes = [16, 16, 8], strides = [1, 1, 1]} : vector<18x18x8xbf16> to vector<16x16x8xbf16>
    %19 = vector.shape_cast %18 : vector<16x16x8xbf16> to vector<256x8xbf16>
    %20 = vector.extract_strided_slice %5 {offsets = [2, 1, 0], sizes = [16, 16, 8], strides = [1, 1, 1]} : vector<18x18x8xbf16> to vector<16x16x8xbf16>
    %21 = vector.shape_cast %20 : vector<16x16x8xbf16> to vector<256x8xbf16>
    %22 = vector.extract_strided_slice %5 {offsets = [2, 2, 0], sizes = [16, 16, 8], strides = [1, 1, 1]} : vector<18x18x8xbf16> to vector<16x16x8xbf16>
    %23 = vector.shape_cast %22 : vector<16x16x8xbf16> to vector<256x8xbf16>
    %24 = tpu.concatenate %7, %9, %11, %13, %15, %17, %19, %21, %23 in 1 : vector<256x8xbf16>, vector<256x8xbf16>, vector<256x8xbf16>, vector<256x8xbf16>, vector<256x8xbf16>, vector<256x8xbf16>, vector<256x8xbf16>, vector<256x8xbf16>, vector<256x8xbf16> -> vector<256x72xbf16>
    %c0_4 = arith.constant 0 : index
    %c0_5 = arith.constant 0 : index
    %25 = vector.load %arg2[%c0_4, %c0_5] : memref<72x12xbf16, #tpu.memory_space<vmem>>, vector<72x12xbf16>
    %cst_6 = arith.constant dense<0.000000e+00> : vector<256x12xf32>
    %26 = tpu.matmul %24, %25, %cst_6 {dimension_numbers = #tpu.dot_dimension_numbers<[1], [0], [0], [1], [0, 0, 1, 1], [], []>} : vector<256x72xbf16>, vector<72x12xbf16>, vector<256x12xf32> -> vector<256x12xf32>
    %c0_7 = arith.constant 0 : index
    %c0_8 = arith.constant 0 : index
    %27 = vector.load %arg3[%c0_7, %c0_8] : memref<1x12xf32, #tpu.memory_space<vmem>>, vector<1x12xf32>
    %28 = vector.broadcast %27 : vector<1x12xf32> to vector<256x12xf32>
    %29 = arith.addf %26, %28 : vector<256x12xf32>
    %30 = vector.extract_strided_slice %29 {offsets = [0, 0], sizes = [256, 8], strides = [1, 1]} : vector<256x12xf32> to vector<256x8xf32>
    %cst_9 = arith.constant 0.000000e+00 : f32
    %31 = vector.broadcast %cst_9 : f32 to vector<256x8xf32>
    %32 = arith.maximumf %30, %31 : vector<256x8xf32>
    %33 = vector.shape_cast %32 : vector<256x8xf32> to vector<16x16x8xf32>
    %c0_10 = arith.constant 0 : index
    %c0_11 = arith.constant 0 : index
    %c0_12 = arith.constant 0 : index
    %c0_13 = arith.constant 0 : index
    %34 = vector.load %arg4[%c0_10, %c0_11, %c0_12, %c0_13] : memref<1x16x16x8xf32, #tpu.memory_space<vmem>>, vector<1x16x16x8xf32>
    %35 = vector.shape_cast %34 : vector<1x16x16x8xf32> to vector<16x16x8xf32>
    %36 = vector.shape_cast %33 : vector<16x16x8xf32> to vector<1x16x16x8xf32>
    tpu.vector_store %arg4[%c0_10, %c0_11, %c0_12, %c0_13], %36 {strides = array<i32>} : memref<1x16x16x8xf32, #tpu.memory_space<vmem>>, vector<1x16x16x8xf32>,
    %37 = vector.extract_strided_slice %29 {offsets = [0, 8], sizes = [256, 4], strides = [1, 1]} : vector<256x12xf32> to vector<256x4xf32>
    %cst_14 = arith.constant 0.000000e+00 : f32
    %38 = vector.broadcast %cst_14 : f32 to vector<256x4xf32>
    %39 = arith.cmpf oge, %37, %38 : vector<256x4xf32>
    %cst_15 = arith.constant 1.000000e-01 : f32
    %40 = vector.broadcast %cst_15 : f32 to vector<256x4xf32>
    %41 = arith.mulf %37, %40 : vector<256x4xf32>
    %42 = arith.select %39, %37, %41 : vector<256x4xi1>, vector<256x4xf32>
    %43 = vector.shape_cast %42 : vector<256x4xf32> to vector<16x16x4xf32>
    %44 = arith.truncf %43 : vector<16x16x4xf32> to vector<16x16x4xbf16>
    %c0_16 = arith.constant 0 : index
    %c0_17 = arith.constant 0 : index
    %c0_18 = arith.constant 0 : index
    %c0_19 = arith.constant 0 : index
    %45 = vector.load %arg5[%c0_16, %c0_17, %c0_18, %c0_19] : memref<1x16x16x4xbf16, #tpu.memory_space<vmem>>, vector<1x16x16x4xbf16>
    %46 = vector.shape_cast %45 : vector<1x16x16x4xbf16> to vector<16x16x4xbf16>
    %47 = vector.shape_cast %44 : vector<16x16x4xbf16> to vector<1x16x16x4xbf16>
    tpu.vector_store %arg5[%c0_16, %c0_17, %c0_18, %c0_19], %47 {strides = array<i32>} : memref<1x16x16x4xbf16, #tpu.memory_space<vmem>>, vector<1x16x16x4xbf16>,
    return
  }
  func.func @transform_0(%arg0: i32) -> (i32, i32, i32, i32) {
    %c0_i32 = arith.constant 0 : i32
    %c0_i32_0 = arith.constant 0 : i32
    %c0_i32_1 = arith.constant 0 : i32
    %c0_i32_2 = arith.constant 0 : i32
    return %arg0, %c0_i32, %c0_i32_0, %c0_i32_1 : i32, i32, i32, i32
  }
  func.func @transform_1(%arg0: i32) -> (i32, i32) {
    %c0_i32 = arith.constant 0 : i32
    %c0_i32_0 = arith.constant 0 : i32
    %c0_i32_1 = arith.constant 0 : i32
    return %c0_i32, %c0_i32_0 : i32, i32
  }
  func.func @transform_2(%arg0: i32) -> (i32, i32) {
    %c0_i32 = arith.constant 0 : i32
    %c0_i32_0 = arith.constant 0 : i32
    %c0_i32_1 = arith.constant 0 : i32
    return %c0_i32, %c0_i32_0 : i32, i32
  }
  func.func @transform_3(%arg0: i32) -> (i32, i32, i32, i32) {
    %c0_i32 = arith.constant 0 : i32
    %c0_i32_0 = arith.constant 0 : i32
    %c0_i32_1 = arith.constant 0 : i32
    %c0_i32_2 = arith.constant 0 : i32
    return %arg0, %c0_i32, %c0_i32_0, %c0_i32_1 : i32, i32, i32, i32
  }
  func.func @transform_4(%arg0: i32) -> (i32, i32, i32, i32) {
    %c0_i32 = arith.constant 0 : i32
    %c0_i32_0 = arith.constant 0 : i32
    %c0_i32_1 = arith.constant 0 : i32
    %c0_i32_2 = arith.constant 0 : i32
    return %arg0, %c0_i32, %c0_i32_0, %c0_i32_1 : i32, i32, i32, i32
  }
}

module attributes {stable_mosaic.version = 11 : i64} {
  func.func @_ssh_conv3x3_kernel(%arg0: i32, %arg1: memref<1x16x16x4xbf16, #tpu.memory_space<vmem>>, %arg2: memref<36x4xbf16, #tpu.memory_space<vmem>>, %arg3: memref<1x4xf32, #tpu.memory_space<vmem>>, %arg4: memref<1x16x16x4xf32, #tpu.memory_space<vmem>>) attributes {dimension_semantics = [#tpu.dimension_semantics<parallel>], iteration_bounds = array<i64: 2>, scalar_prefetch = 0 : i64, scratch_operands = 0 : i64, tpu.core_type = #tpu.core_type<tc>, window_params = [{transform_indices = @transform_0, window_bounds = array<i64: 1, 16, 16, 4>}, {pipeline_mode = #tpu.pipeline_mode<synchronous>, transform_indices = @transform_1, window_bounds = array<i64: 36, 4>}, {pipeline_mode = #tpu.pipeline_mode<synchronous>, transform_indices = @transform_2, window_bounds = array<i64: 1, 4>}, {transform_indices = @transform_3, window_bounds = array<i64: 1, 16, 16, 4>}]} {
    %c0 = arith.constant 0 : index
    %c0_0 = arith.constant 0 : index
    %c0_1 = arith.constant 0 : index
    %c0_2 = arith.constant 0 : index
    %0 = vector.load %arg1[%c0, %c0_0, %c0_1, %c0_2] : memref<1x16x16x4xbf16, #tpu.memory_space<vmem>>, vector<1x16x16x4xbf16>
    %1 = vector.shape_cast %0 : vector<1x16x16x4xbf16> to vector<16x16x4xbf16>
    %cst = arith.constant 0.000000e+00 : bf16
    %2 = vector.broadcast %cst : bf16 to vector<1x16x4xbf16>
    %cst_3 = arith.constant 0.000000e+00 : bf16
    %3 = vector.broadcast %cst_3 : bf16 to vector<18x1x4xbf16>
    %4 = tpu.concatenate %2, %1, %2 in 0 : vector<1x16x4xbf16>, vector<16x16x4xbf16>, vector<1x16x4xbf16> -> vector<18x16x4xbf16>
    %5 = tpu.concatenate %3, %4, %3 in 1 : vector<18x1x4xbf16>, vector<18x16x4xbf16>, vector<18x1x4xbf16> -> vector<18x18x4xbf16>
    %6 = vector.extract_strided_slice %5 {offsets = [0, 0, 0], sizes = [16, 16, 4], strides = [1, 1, 1]} : vector<18x18x4xbf16> to vector<16x16x4xbf16>
    %7 = vector.shape_cast %6 : vector<16x16x4xbf16> to vector<256x4xbf16>
    %8 = vector.extract_strided_slice %5 {offsets = [0, 1, 0], sizes = [16, 16, 4], strides = [1, 1, 1]} : vector<18x18x4xbf16> to vector<16x16x4xbf16>
    %9 = vector.shape_cast %8 : vector<16x16x4xbf16> to vector<256x4xbf16>
    %10 = vector.extract_strided_slice %5 {offsets = [0, 2, 0], sizes = [16, 16, 4], strides = [1, 1, 1]} : vector<18x18x4xbf16> to vector<16x16x4xbf16>
    %11 = vector.shape_cast %10 : vector<16x16x4xbf16> to vector<256x4xbf16>
    %12 = vector.extract_strided_slice %5 {offsets = [1, 0, 0], sizes = [16, 16, 4], strides = [1, 1, 1]} : vector<18x18x4xbf16> to vector<16x16x4xbf16>
    %13 = vector.shape_cast %12 : vector<16x16x4xbf16> to vector<256x4xbf16>
    %14 = vector.extract_strided_slice %5 {offsets = [1, 1, 0], sizes = [16, 16, 4], strides = [1, 1, 1]} : vector<18x18x4xbf16> to vector<16x16x4xbf16>
    %15 = vector.shape_cast %14 : vector<16x16x4xbf16> to vector<256x4xbf16>
    %16 = vector.extract_strided_slice %5 {offsets = [1, 2, 0], sizes = [16, 16, 4], strides = [1, 1, 1]} : vector<18x18x4xbf16> to vector<16x16x4xbf16>
    %17 = vector.shape_cast %16 : vector<16x16x4xbf16> to vector<256x4xbf16>
    %18 = vector.extract_strided_slice %5 {offsets = [2, 0, 0], sizes = [16, 16, 4], strides = [1, 1, 1]} : vector<18x18x4xbf16> to vector<16x16x4xbf16>
    %19 = vector.shape_cast %18 : vector<16x16x4xbf16> to vector<256x4xbf16>
    %20 = vector.extract_strided_slice %5 {offsets = [2, 1, 0], sizes = [16, 16, 4], strides = [1, 1, 1]} : vector<18x18x4xbf16> to vector<16x16x4xbf16>
    %21 = vector.shape_cast %20 : vector<16x16x4xbf16> to vector<256x4xbf16>
    %22 = vector.extract_strided_slice %5 {offsets = [2, 2, 0], sizes = [16, 16, 4], strides = [1, 1, 1]} : vector<18x18x4xbf16> to vector<16x16x4xbf16>
    %23 = vector.shape_cast %22 : vector<16x16x4xbf16> to vector<256x4xbf16>
    %24 = tpu.concatenate %7, %9, %11, %13, %15, %17, %19, %21, %23 in 1 : vector<256x4xbf16>, vector<256x4xbf16>, vector<256x4xbf16>, vector<256x4xbf16>, vector<256x4xbf16>, vector<256x4xbf16>, vector<256x4xbf16>, vector<256x4xbf16>, vector<256x4xbf16> -> vector<256x36xbf16>
    %c0_4 = arith.constant 0 : index
    %c0_5 = arith.constant 0 : index
    %25 = vector.load %arg2[%c0_4, %c0_5] : memref<36x4xbf16, #tpu.memory_space<vmem>>, vector<36x4xbf16>
    %cst_6 = arith.constant dense<0.000000e+00> : vector<256x4xf32>
    %26 = tpu.matmul %24, %25, %cst_6 {dimension_numbers = #tpu.dot_dimension_numbers<[1], [0], [0], [1], [0, 0, 1, 1], [], []>} : vector<256x36xbf16>, vector<36x4xbf16>, vector<256x4xf32> -> vector<256x4xf32>
    %c0_7 = arith.constant 0 : index
    %c0_8 = arith.constant 0 : index
    %27 = vector.load %arg3[%c0_7, %c0_8] : memref<1x4xf32, #tpu.memory_space<vmem>>, vector<1x4xf32>
    %28 = vector.broadcast %27 : vector<1x4xf32> to vector<256x4xf32>
    %29 = arith.addf %26, %28 : vector<256x4xf32>
    %cst_9 = arith.constant 0.000000e+00 : f32
    %30 = vector.broadcast %cst_9 : f32 to vector<256x4xf32>
    %31 = arith.maximumf %29, %30 : vector<256x4xf32>
    %32 = vector.shape_cast %31 : vector<256x4xf32> to vector<16x16x4xf32>
    %c0_10 = arith.constant 0 : index
    %c0_11 = arith.constant 0 : index
    %c0_12 = arith.constant 0 : index
    %c0_13 = arith.constant 0 : index
    %33 = vector.load %arg4[%c0_10, %c0_11, %c0_12, %c0_13] : memref<1x16x16x4xf32, #tpu.memory_space<vmem>>, vector<1x16x16x4xf32>
    %34 = vector.shape_cast %33 : vector<1x16x16x4xf32> to vector<16x16x4xf32>
    %35 = vector.shape_cast %32 : vector<16x16x4xf32> to vector<1x16x16x4xf32>
    tpu.vector_store %arg4[%c0_10, %c0_11, %c0_12, %c0_13], %35 {strides = array<i32>} : memref<1x16x16x4xf32, #tpu.memory_space<vmem>>, vector<1x16x16x4xf32>,
    return
  }
  func.func @transform_0(%arg0: i32) -> (i32, i32, i32, i32) {
    %c0_i32 = arith.constant 0 : i32
    %c0_i32_0 = arith.constant 0 : i32
    %c0_i32_1 = arith.constant 0 : i32
    %c0_i32_2 = arith.constant 0 : i32
    return %arg0, %c0_i32, %c0_i32_0, %c0_i32_1 : i32, i32, i32, i32
  }
  func.func @transform_1(%arg0: i32) -> (i32, i32) {
    %c0_i32 = arith.constant 0 : i32
    %c0_i32_0 = arith.constant 0 : i32
    %c0_i32_1 = arith.constant 0 : i32
    return %c0_i32, %c0_i32_0 : i32, i32
  }
  func.func @transform_2(%arg0: i32) -> (i32, i32) {
    %c0_i32 = arith.constant 0 : i32
    %c0_i32_0 = arith.constant 0 : i32
    %c0_i32_1 = arith.constant 0 : i32
    return %c0_i32, %c0_i32_0 : i32, i32
  }
  func.func @transform_3(%arg0: i32) -> (i32, i32, i32, i32) {
    %c0_i32 = arith.constant 0 : i32
    %c0_i32_0 = arith.constant 0 : i32
    %c0_i32_1 = arith.constant 0 : i32
    %c0_i32_2 = arith.constant 0 : i32
    return %arg0, %c0_i32, %c0_i32_0, %c0_i32_1 : i32, i32, i32, i32
  }
}

</mosaic_0001>

<llo_original>
// kernel: ssh_forward.5
$region0: #{ssh_forward.5}
  #allocation0 [shape = 'u32[]', space=smem, size = 0x4, offset = 0x4, fixed_abs, tag = 'smem constant byte address 0x4 - core index']
  #allocation1 [shape = 'u32[144,128]{1,0:T(1,128)}', space=vmem, size = 0x12000, scoped, tag = 'internal scratch']
  %s0 = inlined_call_operand.vmem [shape: bf16[2,16,16,4], index: 0, kind: input, shape index: {}]
  %s1 = inlined_call_operand.vmem [shape: bf16[36,4], index: 1, kind: input, shape index: {}]
  %s2 = inlined_call_operand.vmem [shape: f32[1,4], index: 2, kind: input, shape index: {}]
  %s3 = inlined_call_operand.vmem [shape: f32[2,16,16,4], index: 3, kind: output, shape index: {}]
  %s4 = sld [smem:[#allocation0]]
  $region45: #{ssh_forward.5} parent=0
    _
  %s6 = ssub.s32 1, %s4
  %s7 = scalar_select 0, %s6, %s4
  loop: start=0, step=1, limit=4
  $region2: #{ssh_forward.5} parent=0 // loop_pre_header
    _
  $region3: #{ssh_forward.5} parent=0 // loop_header
    %s9 = sphi 0, %s13
    %p10 = scmp.ge.s32.totalorder %s9, 4
    %s19 = sphi 0, %s21
    %s22 = sphi 0, %s19
    %s23 = sphi 0, %s22
    %s39 = sphi 0, %s23
    %s43 = sphi 0, %s43
    %s45 = sphi 0, %s43
    %s46 = sphi 0, %s45
    %s60 = sphi 0, %s46
    %s64 = sphi 0, %s64
    %s66 = sphi 0, %s64
    %s67 = sphi 0, %s66
    %s81 = sphi 0, %s67
    %s87 = sphi 0, %s89
    %s90 = sphi 0, %s87
    %s91 = sphi 0, %s90
    %s107 = sphi 0, %s91
  $region4: #{ssh_forward.5} parent=0 // loop_header_branch
    %12 = sbr.rel (%p10) target = $region8
  $region5: #{ssh_forward.5} parent=0 // loop_body
    %s14 = ssub.s32 %s9, 1
    %s15 = ssub.s32 %s9, 2
    %s16 = sadd.s32 %s9, 1
    %s17 = ssub.s32 %s9, %s16
    %p18 = scmp.eq.s32.totalorder %s17, 0
    %s20 = sadd.s32 %s19, 1
    %s21 = scalar_select %p18, %s19, %s20
    %p24 = pneg %p18
    %p25 = scmp.eq.s32.totalorder %s9, 1
    %p26 = por %p24, %p25
    %p27 = scmp.ne.s32.totalorder %s19, %s22
    %p28 = scmp.eq.s32.totalorder %s9, 0
    %p29 = por %p27, %p28
    %p30 = scmp.ne.s32.totalorder %s19, %s22
    %p31 = scmp.eq.s32.totalorder %s14, 1
    %p32 = por %p30, %p31
    %p33 = scmp.ne.s32.totalorder %s22, %s23
    %p34 = scmp.eq.s32.totalorder %s14, 0
    %p35 = por %p33, %p34
    %p36 = scmp.ne.s32.totalorder %s22, %s23
    %p37 = scmp.eq.s32.totalorder %s15, 1
    %p38 = por %p36, %p37
    %p40 = scmp.ne.s32.totalorder %s23, %s39
    %p41 = scmp.eq.s32.totalorder %s15, 0
    %p42 = por %p40, %p41
    %s44 = sadd.s32 %s43, 1
    %p47 = scmp.eq.s32.totalorder %s9, 1
    %p48 = scmp.ne.s32.totalorder %s43, %s45
    %p49 = scmp.eq.s32.totalorder %s9, 0
    %p50 = por %p48, %p49
    %p51 = scmp.ne.s32.totalorder %s43, %s45
    %p52 = scmp.eq.s32.totalorder %s14, 1
    %p53 = por %p51, %p52
    %p54 = scmp.ne.s32.totalorder %s45, %s46
    %p55 = scmp.eq.s32.totalorder %s14, 0
    %p56 = por %p54, %p55
    %p57 = scmp.ne.s32.totalorder %s45, %s46
    %p58 = scmp.eq.s32.totalorder %s15, 1
    %p59 = por %p57, %p58
    %p61 = scmp.ne.s32.totalorder %s46, %s60
    %p62 = scmp.eq.s32.totalorder %s15, 0
    %p63 = por %p61, %p62
    %s65 = sadd.s32 %s64, 1
    %p68 = scmp.eq.s32.totalorder %s9, 1
    %p69 = scmp.ne.s32.totalorder %s64, %s66
    %p70 = scmp.eq.s32.totalorder %s9, 0
    %p71 = por %p69, %p70
    %p72 = scmp.ne.s32.totalorder %s64, %s66
    %p73 = scmp.eq.s32.totalorder %s14, 1
    %p74 = por %p72, %p73
    %p75 = scmp.ne.s32.totalorder %s66, %s67
    %p76 = scmp.eq.s32.totalorder %s14, 0
    %p77 = por %p75, %p76
    %p78 = scmp.ne.s32.totalorder %s66, %s67
    %p79 = scmp.eq.s32.totalorder %s15, 1
    %p80 = por %p78, %p79
    %p82 = scmp.ne.s32.totalorder %s67, %s81
    %p83 = scmp.eq.s32.totalorder %s15, 0
    %p84 = por %p82, %p83
    %s85 = ssub.s32 %s9, %s16
    %p86 = scmp.eq.s32.totalorder %s85, 0
    %s88 = sadd.s32 %s87, 1
    %s89 = scalar_select %p86, %s87, %s88
    %p92 = pneg %p86
    %p93 = scmp.eq.s32.totalorder %s9, 1
    %p94 = por %p92, %p93
    %p95 = scmp.ne.s32.totalorder %s87, %s90
    %p96 = scmp.eq.s32.totalorder %s9, 0
    %p97 = por %p95, %p96
    %p98 = scmp.ne.s32.totalorder %s87, %s90
    %p99 = scmp.eq.s32.totalorder %s14, 1
    %p100 = por %p98, %p99
    %p101 = scmp.ne.s32.totalorder %s90, %s91
    %p102 = scmp.eq.s32.totalorder %s14, 0
    %p103 = por %p101, %p102
    %p104 = scmp.ne.s32.totalorder %s90, %s91
    %p105 = scmp.eq.s32.totalorder %s15, 1
    %p106 = por %p104, %p105
    %p108 = scmp.ne.s32.totalorder %s91, %s107
    %p109 = scmp.eq.s32.totalorder %s15, 0
    %p110 = por %p108, %p109
    %p111 = scmp.le.s32.totalorder 1, %s9
    %p112 = scmp.lt.s32.totalorder %s9, 3
    %p113 = pnand %p111, %p112
    %p114 = pneg %p113
    // Predicated region
    $region9: #{ssh_forward.5} parent=5 // pred_check
      _
    $region10: #{ssh_forward.5} parent=5 // pred_check_branch
      %116 = sbr.rel (%p113) target = $region12
    $region11: #{ssh_forward.5} parent=5 // pred_region
      %s117 = ssub.s32 %s9, 1
      // Predicated region
      $region13: #{ssh_forward.5} parent=11 // pred_check
        %p118 = pneg %p56
      $region14: #{ssh_forward.5} parent=11 // pred_check_branch
        %120 = sbr.rel (%p118) target = $region16
      $region15: #{ssh_forward.5} parent=11 // pred_region
        _
      $region16: #{ssh_forward.5} parent=11 // pred_fallthru
        _
      // Predicated region
      $region17: #{ssh_forward.5} parent=11 // pred_check
        %p121 = pneg %p77
      $region18: #{ssh_forward.5} parent=11 // pred_check_branch
        %123 = sbr.rel (%p121) target = $region20
      $region19: #{ssh_forward.5} parent=11 // pred_region
        _
      $region20: #{ssh_forward.5} parent=11 // pred_fallthru
        _
    $region12: #{ssh_forward.5} parent=5 // pred_fallthru
      _
    %p124 = scmp.lt.s32.totalorder %s9, 2
    // Predicated region
    $region21: #{ssh_forward.5} parent=5 // pred_check
      %p125 = pneg %p124
    $region22: #{ssh_forward.5} parent=5 // pred_check_branch
      %127 = sbr.rel (%p125) target = $region24
    $region23: #{ssh_forward.5} parent=5 // pred_region
      // Predicated region
      $region25: #{ssh_forward.5} parent=23 // pred_check
        %p128 = pneg %p29
      $region26: #{ssh_forward.5} parent=23 // pred_check_branch
        %130 = sbr.rel (%p128) target = $region28
      $region27: #{ssh_forward.5} parent=23 // pred_region
        %p131 = scmp.lt.s32.totalorder %s9, 1
        %s132 = scalar_select %p131, %s9, 1
        %s133 = smul.addr %s132, 32
        %s134 = smul.addr %s133, 4
        %s135 = scalar_lea.vmem %s0, %s134
      $region28: #{ssh_forward.5} parent=23 // pred_fallthru
        _
    $region24: #{ssh_forward.5} parent=5 // pred_fallthru
      _
    %p136 = scmp.le.s32.totalorder 1, %s9
    %p137 = scmp.lt.s32.totalorder %s9, 3
    %p138 = pnand %p136, %p137
    %p139 = pneg %p138
    // Predicated region
    $region29: #{ssh_forward.5} parent=5 // pred_check
      _
    $region30: #{ssh_forward.5} parent=5 // pred_check_branch
      %141 = sbr.rel (%p138) target = $region32
    $region31: #{ssh_forward.5} parent=5 // pred_region
      %s142 = ssub.s32 %s9, 1
      %p143 = scmp.lt.s32.totalorder %s14, 1
      %s144 = scalar_select %p143, %s14, 1
      %s145 = smul.addr %s144, 32
      %s146 = smul.addr %s145, 4
      %s147 = scalar_lea.vmem %s0, %s146
      %p148 = pneg %p35
      %p149 = pneg %p32
      %p150 = pneg %p56
      %p151 = pneg %p53
      %p152 = pneg %p77
      %p153 = pneg %p74
      %p154 = pneg %p103
      %p155 = pneg %p100
      %p156 = scmp.lt.s32.totalorder %s14, 1
      %s157 = scalar_select %p156, %s14, 1
      %s158 = smul.addr %s157, 32
      %s159 = smul.addr %s158, 8
      %s160 = scalar_lea.vmem %s3, %s159
      %p161 = scmp.lt.s32.totalorder %s14, 1
      %s162 = scalar_select %p161, %s14, 1
      %s163 = smul.addr %s162, 32
      %s164 = smul.addr %s163, 4
      %s165 = scalar_lea.vmem %s0, %s164
      %p166 = scmp.lt.s32.totalorder %s14, 1
      %s167 = scalar_select %p166, %s14, 1
      %s168 = smul.addr %s167, 32
      %s169 = smul.addr %s168, 8
      %s170 = scalar_lea.vmem %s3, %s169
      %v172 = vld [vmem:[%s165] sm:$0xf]
      %v173 = vld [vmem:[%s165 + $0x4] sm:$0xf]
      %v174 = vld [vmem:[%s165 + $0x8] sm:$0xf]
      %v175 = vld [vmem:[%s165 + $0xc] sm:$0xf]
      %v176 = vld [vmem:[%s165 + $0x10] sm:$0xf]
      %v177 = vld [vmem:[%s165 + $0x14] sm:$0xf]
      %v178 = vld [vmem:[%s165 + $0x18] sm:$0xf]
      %v179 = vld [vmem:[%s165 + $0x1c] sm:$0xf]
      %v180 = vld [vmem:[%s165 + $0x20] sm:$0xf]
      %v181 = vld [vmem:[%s165 + $0x24] sm:$0xf]
      %v182 = vld [vmem:[%s165 + $0x28] sm:$0xf]
      %v183 = vld [vmem:[%s165 + $0x2c] sm:$0xf]
      %v184 = vld [vmem:[%s165 + $0x30] sm:$0xf]
      %v185 = vld [vmem:[%s165 + $0x34] sm:$0xf]
      %v186 = vld [vmem:[%s165 + $0x38] sm:$0xf]
      %v187 = vld [vmem:[%s165 + $0x3c] sm:$0xf]
      %v188 = vld [vmem:[%s165 + $0x40] sm:$0xf]
      %v189 = vld [vmem:[%s165 + $0x44] sm:$0xf]
      %v190 = vld [vmem:[%s165 + $0x48] sm:$0xf]
      %v191 = vld [vmem:[%s165 + $0x4c] sm:$0xf]
      %v192 = vld [vmem:[%s165 + $0x50] sm:$0xf]
      %v193 = vld [vmem:[%s165 + $0x54] sm:$0xf]
      %v194 = vld [vmem:[%s165 + $0x58] sm:$0xf]
      %v195 = vld [vmem:[%s165 + $0x5c] sm:$0xf]
      %v196 = vld [vmem:[%s165 + $0x60] sm:$0xf]
      %v197 = vld [vmem:[%s165 + $0x64] sm:$0xf]
      %v198 = vld [vmem:[%s165 + $0x68] sm:$0xf]
      %v199 = vld [vmem:[%s165 + $0x6c] sm:$0xf]
      %v200 = vld [vmem:[%s165 + $0x70] sm:$0xf]
      %v201 = vld [vmem:[%s165 + $0x74] sm:$0xf]
      %v202 = vld [vmem:[%s165 + $0x78] sm:$0xf]
      %v203 = vld [vmem:[%s165 + $0x7c] sm:$0xf]
      %v236 = vunpack.c.l.b16 %v172
      %v237 = vunpack.c.l.b16 %v173
      %v238 = vunpack.c.l.b16 %v174
      %v239 = vunpack.c.l.b16 %v175
      %v240 = vunpack.c.l.b16 %v176
      %v241 = vunpack.c.l.b16 %v177
      %v242 = vunpack.c.l.b16 %v178
      %v243 = vunpack.c.l.b16 %v179
      %v244 = vunpack.c.l.b16 %v180
      %v245 = vunpack.c.l.b16 %v181
      %v246 = vunpack.c.l.b16 %v182
      %v247 = vunpack.c.l.b16 %v183
      %v248 = vunpack.c.l.b16 %v184
      %v249 = vunpack.c.l.b16 %v185
      %v250 = vunpack.c.l.b16 %v186
      %v251 = vunpack.c.l.b16 %v187
      %v252 = vunpack.c.l.b16 %v188
      %v253 = vunpack.c.l.b16 %v189
      %v254 = vunpack.c.l.b16 %v190
      %v255 = vunpack.c.l.b16 %v191
      %v256 = vunpack.c.l.b16 %v192
      %v257 = vunpack.c.l.b16 %v193
      %v258 = vunpack.c.l.b16 %v194
      %v259 = vunpack.c.l.b16 %v195
      %v260 = vunpack.c.l.b16 %v196
      %v261 = vunpack.c.l.b16 %v197
      %v262 = vunpack.c.l.b16 %v198
      %v263 = vunpack.c.l.b16 %v199
      %v264 = vunpack.c.l.b16 %v200
      %v265 = vunpack.c.l.b16 %v201
      %v266 = vunpack.c.l.b16 %v202
      %v267 = vunpack.c.l.b16 %v203
      %v268 = vpack.c.b16 %v237, %v236
      %v269 = vpack.c.b16 %v239, %v238
      %v270 = vpack.c.b16 %v241, %v240
      %v271 = vpack.c.b16 %v243, %v242
      %v272 = vpack.c.b16 %v245, %v244
      %v273 = vpack.c.b16 %v247, %v246
      %v274 = vpack.c.b16 %v249, %v248
      %v275 = vpack.c.b16 %v251, %v250
      %v276 = vpack.c.b16 %v253, %v252
      %v277 = vpack.c.b16 %v255, %v254
      %v278 = vpack.c.b16 %v257, %v256
      %v279 = vpack.c.b16 %v259, %v258
      %v280 = vpack.c.b16 %v261, %v260
      %v281 = vpack.c.b16 %v263, %v262
      %v282 = vpack.c.b16 %v265, %v264
      %v283 = vpack.c.b16 %v267, %v266
      %v285 = vshrl.u32 0, 16
      %v287 = vrot.slane %v285, 7
      %v288 = vshll.u32 0, 16
      %v290 = vor.u32 %v287, %v288
      %v292 = vshrl.u32 %v268, 16
      %v294 = vrot.slane %v292, 7
      %v295 = vshll.u32 %v268, 16
      %v297 = vor.u32 %v294, %v295
      %v299 = vshrl.u32 %v269, 16
      %v301 = vrot.slane %v299, 7
      %v302 = vshll.u32 %v269, 16
      %v304 = vor.u32 %v301, %v302
      %v306 = vshrl.u32 %v270, 16
      %v308 = vrot.slane %v306, 7
      %v309 = vshll.u32 %v270, 16
      %v311 = vor.u32 %v308, %v309
      %v313 = vshrl.u32 %v271, 16
      %v315 = vrot.slane %v313, 7
      %v316 = vshll.u32 %v271, 16
      %v318 = vor.u32 %v315, %v316
      %v320 = vshrl.u32 %v272, 16
      %v322 = vrot.slane %v320, 7
      %v323 = vshll.u32 %v272, 16
      %v325 = vor.u32 %v322, %v323
      %v327 = vshrl.u32 %v273, 16
      %v329 = vrot.slane %v327, 7
      %v330 = vshll.u32 %v273, 16
      %v332 = vor.u32 %v329, %v330
      %v334 = vshrl.u32 %v274, 16
      %v336 = vrot.slane %v334, 7
      %v337 = vshll.u32 %v274, 16
      %v339 = vor.u32 %v336, %v337
      %v341 = vshrl.u32 %v275, 16
      %v343 = vrot.slane %v341, 7
      %v344 = vshll.u32 %v275, 16
      %v346 = vor.u32 %v343, %v344
      %v348 = vshrl.u32 %v276, 16
      %v350 = vrot.slane %v348, 7
      %v351 = vshll.u32 %v276, 16
      %v353 = vor.u32 %v350, %v351
      %v355 = vshrl.u32 %v277, 16
      %v357 = vrot.slane %v355, 7
      %v358 = vshll.u32 %v277, 16
      %v360 = vor.u32 %v357, %v358
      %v362 = vshrl.u32 %v278, 16
      %v364 = vrot.slane %v362, 7
      %v365 = vshll.u32 %v278, 16
      %v367 = vor.u32 %v364, %v365
      %v369 = vshrl.u32 %v279, 16
      %v371 = vrot.slane %v369, 7
      %v372 = vshll.u32 %v279, 16
      %v374 = vor.u32 %v371, %v372
      %v376 = vshrl.u32 %v280, 16
      %v378 = vrot.slane %v376, 7
      %v379 = vshll.u32 %v280, 16
      %v381 = vor.u32 %v378, %v379
      %v383 = vshrl.u32 %v281, 16
      %v385 = vrot.slane %v383, 7
      %v386 = vshll.u32 %v281, 16
      %v388 = vor.u32 %v385, %v386
      %v390 = vshrl.u32 %v282, 16
      %v392 = vrot.slane %v390, 7
      %v393 = vshll.u32 %v282, 16
      %v395 = vor.u32 %v392, %v393
      %v397 = vshrl.u32 %v283, 16
      %v399 = vrot.slane %v397, 7
      %v400 = vshll.u32 %v283, 16
      %v402 = vor.u32 %v399, %v400
      %vm437 = vcmask 1040384
      %vm438 = vsmask.f32 256
      %vm439 = vmand %vm437, %vm438
      %v440 = vsel %vm439, 0, %v290
      %v441 = vsel %vm439, 0, %v297
      %v442 = vsel %vm439, 0, %v304
      %v443 = vsel %vm439, 0, %v311
      %v444 = vsel %vm439, 0, %v318
      %v445 = vsel %vm439, 0, %v325
      %v446 = vsel %vm439, 0, %v332
      %v447 = vsel %vm439, 0, %v339
      %v448 = vsel %vm439, 0, %v346
      %v449 = vsel %vm439, 0, %v353
      %v450 = vsel %vm439, 0, %v360
      %v451 = vsel %vm439, 0, %v367
      %v452 = vsel %vm439, 0, %v374
      %v453 = vsel %vm439, 0, %v381
      %v454 = vsel %vm439, 0, %v388
      %v455 = vsel %vm439, 0, %v395
      %v456 = vsel %vm439, 0, %v402
      %v457 = vsel %vm439, %v287, 0
      %v458 = vsel %vm439, %v294, 0
      %v459 = vsel %vm439, %v301, 0
      %v460 = vsel %vm439, %v308, 0
      %v461 = vsel %vm439, %v315, 0
      %v462 = vsel %vm439, %v322, 0
      %v463 = vsel %vm439, %v329, 0
      %v464 = vsel %vm439, %v336, 0
      %v465 = vsel %vm439, %v343, 0
      %v466 = vsel %vm439, %v350, 0
      %v467 = vsel %vm439, %v357, 0
      %v468 = vsel %vm439, %v364, 0
      %v469 = vsel %vm439, %v371, 0
      %v470 = vsel %vm439, %v378, 0
      %v471 = vsel %vm439, %v385, 0
      %v472 = vsel %vm439, %v392, 0
      %v473 = vsel %vm439, %v399, 0
      %vm474 = vsmask.f32 7424
      %v476 = vshrl.u32 %v440, 16
      %v478 = vshll.u32 %v440, 16
      %v480 = vrot.slane %v478, 1
      %v481 = vor.u32 %v476, %v480
      %v483 = vshll.u32 %v457, 16
      %v485 = vrot.slane %v483, 1
      %v486 = vsel %vm474, %v481, %v485
      %v488 = vshrl.u32 %v441, 16
      %v490 = vshll.u32 %v441, 16
      %v492 = vrot.slane %v490, 1
      %v493 = vor.u32 %v488, %v492
      %v495 = vshll.u32 %v458, 16
      %v497 = vrot.slane %v495, 1
      %v498 = vsel %vm474, %v493, %v497
      %v500 = vshrl.u32 %v442, 16
      %v502 = vshll.u32 %v442, 16
      %v504 = vrot.slane %v502, 1
      %v505 = vor.u32 %v500, %v504
      %v507 = vshll.u32 %v459, 16
      %v509 = vrot.slane %v507, 1
      %v510 = vsel %vm474, %v505, %v509
      %v512 = vshrl.u32 %v443, 16
      %v514 = vshll.u32 %v443, 16
      %v516 = vrot.slane %v514, 1
      %v517 = vor.u32 %v512, %v516
      %v519 = vshll.u32 %v460, 16
      %v521 = vrot.slane %v519, 1
      %v522 = vsel %vm474, %v517, %v521
      %v524 = vshrl.u32 %v444, 16
      %v526 = vshll.u32 %v444, 16
      %v528 = vrot.slane %v526, 1
      %v529 = vor.u32 %v524, %v528
      %v531 = vshll.u32 %v461, 16
      %v533 = vrot.slane %v531, 1
      %v534 = vsel %vm474, %v529, %v533
      %v536 = vshrl.u32 %v445, 16
      %v538 = vshll.u32 %v445, 16
      %v540 = vrot.slane %v538, 1
      %v541 = vor.u32 %v536, %v540
      %v543 = vshll.u32 %v462, 16
      %v545 = vrot.slane %v543, 1
      %v546 = vsel %vm474, %v541, %v545
      %v548 = vshrl.u32 %v446, 16
      %v550 = vshll.u32 %v446, 16
      %v552 = vrot.slane %v550, 1
      %v553 = vor.u32 %v548, %v552
      %v555 = vshll.u32 %v463, 16
      %v557 = vrot.slane %v555, 1
      %v558 = vsel %vm474, %v553, %v557
      %v560 = vshrl.u32 %v447, 16
      %v562 = vshll.u32 %v447, 16
      %v564 = vrot.slane %v562, 1
      %v565 = vor.u32 %v560, %v564
      %v567 = vshll.u32 %v464, 16
      %v569 = vrot.slane %v567, 1
      %v570 = vsel %vm474, %v565, %v569
      %v572 = vshrl.u32 %v448, 16
      %v574 = vshll.u32 %v448, 16
      %v576 = vrot.slane %v574, 1
      %v577 = vor.u32 %v572, %v576
      %v579 = vshll.u32 %v465, 16
      %v581 = vrot.slane %v579, 1
      %v582 = vsel %vm474, %v577, %v581
      %v584 = vshrl.u32 %v449, 16
      %v586 = vshll.u32 %v449, 16
      %v588 = vrot.slane %v586, 1
      %v589 = vor.u32 %v584, %v588
      %v591 = vshll.u32 %v466, 16
      %v593 = vrot.slane %v591, 1
      %v594 = vsel %vm474, %v589, %v593
      %v596 = vshrl.u32 %v450, 16
      %v598 = vshll.u32 %v450, 16
      %v600 = vrot.slane %v598, 1
      %v601 = vor.u32 %v596, %v600
      %v603 = vshll.u32 %v467, 16
      %v605 = vrot.slane %v603, 1
      %v606 = vsel %vm474, %v601, %v605
      %v608 = vshrl.u32 %v451, 16
      %v610 = vshll.u32 %v451, 16
      %v612 = vrot.slane %v610, 1
      %v613 = vor.u32 %v608, %v612
      %v615 = vshll.u32 %v468, 16
      %v617 = vrot.slane %v615, 1
      %v618 = vsel %vm474, %v613, %v617
      %v620 = vshrl.u32 %v452, 16
      %v622 = vshll.u32 %v452, 16
      %v624 = vrot.slane %v622, 1
      %v625 = vor.u32 %v620, %v624
      %v627 = vshll.u32 %v469, 16
      %v629 = vrot.slane %v627, 1
      %v630 = vsel %vm474, %v625, %v629
      %v632 = vshrl.u32 %v453, 16
      %v634 = vshll.u32 %v453, 16
      %v636 = vrot.slane %v634, 1
      %v637 = vor.u32 %v632, %v636
      %v639 = vshll.u32 %v470, 16
      %v641 = vrot.slane %v639, 1
      %v642 = vsel %vm474, %v637, %v641
      %v644 = vshrl.u32 %v454, 16
      %v646 = vshll.u32 %v454, 16
      %v648 = vrot.slane %v646, 1
      %v649 = vor.u32 %v644, %v648
      %v651 = vshll.u32 %v471, 16
      %v653 = vrot.slane %v651, 1
      %v654 = vsel %vm474, %v649, %v653
      %v656 = vshrl.u32 %v455, 16
      %v658 = vshll.u32 %v455, 16
      %v660 = vrot.slane %v658, 1
      %v661 = vor.u32 %v656, %v660
      %v663 = vshll.u32 %v472, 16
      %v665 = vrot.slane %v663, 1
      %v666 = vsel %vm474, %v661, %v665
      %vm699 = vcmask 1046528
      %v700 = vrot.slane %v440, 1
      %v701 = vrot.slane %v457, 1
      %v702 = vsel %vm699, %v700, %v701
      %v703 = vrot.slane %v441, 1
      %v704 = vrot.slane %v458, 1
      %v705 = vsel %vm699, %v703, %v704
      %v706 = vrot.slane %v442, 1
      %v707 = vrot.slane %v459, 1
      %v708 = vsel %vm699, %v706, %v707
      %v709 = vrot.slane %v443, 1
      %v710 = vrot.slane %v460, 1
      %v711 = vsel %vm699, %v709, %v710
      %v712 = vrot.slane %v444, 1
      %v713 = vrot.slane %v461, 1
      %v714 = vsel %vm699, %v712, %v713
      %v715 = vrot.slane %v445, 1
      %v716 = vrot.slane %v462, 1
      %v717 = vsel %vm699, %v715, %v716
      %v718 = vrot.slane %v446, 1
      %v719 = vrot.slane %v463, 1
      %v720 = vsel %vm699, %v718, %v719
      %v721 = vrot.slane %v447, 1
      %v722 = vrot.slane %v464, 1
      %v723 = vsel %vm699, %v721, %v722
      %v724 = vrot.slane %v448, 1
      %v725 = vrot.slane %v465, 1
      %v726 = vsel %vm699, %v724, %v725
      %v727 = vrot.slane %v449, 1
      %v728 = vrot.slane %v466, 1
      %v729 = vsel %vm699, %v727, %v728
      %v730 = vrot.slane %v450, 1
      %v731 = vrot.slane %v467, 1
      %v732 = vsel %vm699, %v730, %v731
      %v733 = vrot.slane %v451, 1
      %v734 = vrot.slane %v468, 1
      %v735 = vsel %vm699, %v733, %v734
      %v736 = vrot.slane %v452, 1
      %v737 = vrot.slane %v469, 1
      %v738 = vsel %vm699, %v736, %v737
      %v739 = vrot.slane %v453, 1
      %v740 = vrot.slane %v470, 1
      %v741 = vsel %vm699, %v739, %v740
      %v742 = vrot.slane %v454, 1
      %v743 = vrot.slane %v471, 1
      %v744 = vsel %vm699, %v742, %v743
      %v745 = vrot.slane %v455, 1
      %v746 = vrot.slane %v472, 1
      %v747 = vsel %vm699, %v745, %v746
      %v749 = vshrl.u32 %v456, 16
      %v751 = vshll.u32 %v456, 16
      %v753 = vrot.slane %v751, 1
      %v754 = vor.u32 %v749, %v753
      %v756 = vshll.u32 %v473, 16
      %v758 = vrot.slane %v756, 1
      %v759 = vsel %vm474, %v754, %v758
      %v762 = vrot.slane %v456, 1
      %v763 = vrot.slane %v473, 1
      %v764 = vsel %vm699, %v762, %v763
      %765 = vrot.lane.b32.xlu0 %v486, 4
      %v766 = vpop.permute.xlu0 %765
      %767 = vrot.lane.b32.xlu0 %v498, 4
      %v768 = vpop.permute.xlu0 %767
      %769 = vrot.lane.b32.xlu0 %v510, 4
      %v770 = vpop.permute.xlu0 %769
      %771 = vrot.lane.b32.xlu0 %v522, 4
      %v772 = vpop.permute.xlu0 %771
      %773 = vrot.lane.b32.xlu0 %v534, 4
      %v774 = vpop.permute.xlu0 %773
      %775 = vrot.lane.b32.xlu0 %v546, 4
      %v776 = vpop.permute.xlu0 %775
      %777 = vrot.lane.b32.xlu0 %v558, 4
      %v778 = vpop.permute.xlu0 %777
      %779 = vrot.lane.b32.xlu0 %v570, 4
      %v780 = vpop.permute.xlu0 %779
      %781 = vrot.lane.b32.xlu0 %v582, 4
      %v782 = vpop.permute.xlu0 %781
      %783 = vrot.lane.b32.xlu0 %v594, 4
      %v784 = vpop.permute.xlu0 %783
      %785 = vrot.lane.b32.xlu0 %v606, 4
      %v786 = vpop.permute.xlu0 %785
      %787 = vrot.lane.b32.xlu0 %v618, 4
      %v788 = vpop.permute.xlu0 %787
      %789 = vrot.lane.b32.xlu0 %v630, 4
      %v790 = vpop.permute.xlu0 %789
      %791 = vrot.lane.b32.xlu0 %v642, 4
      %v792 = vpop.permute.xlu0 %791
      %793 = vrot.lane.b32.xlu0 %v654, 4
      %v794 = vpop.permute.xlu0 %793
      %795 = vrot.lane.b32.xlu0 %v666, 4
      %v796 = vpop.permute.xlu0 %795
      %797 = vrot.lane.b32.xlu0 %v702, 8
      %v798 = vpop.permute.xlu0 %797
      %799 = vrot.lane.b32.xlu0 %v705, 8
      %v800 = vpop.permute.xlu0 %799
      %801 = vrot.lane.b32.xlu0 %v708, 8
      %v802 = vpop.permute.xlu0 %801
      %803 = vrot.lane.b32.xlu0 %v711, 8
      %v804 = vpop.permute.xlu0 %803
      %805 = vrot.lane.b32.xlu0 %v714, 8
      %v806 = vpop.permute.xlu0 %805
      %807 = vrot.lane.b32.xlu0 %v717, 8
      %v808 = vpop.permute.xlu0 %807
      %809 = vrot.lane.b32.xlu0 %v720, 8
      %v810 = vpop.permute.xlu0 %809
      %811 = vrot.lane.b32.xlu0 %v723, 8
      %v812 = vpop.permute.xlu0 %811
      %813 = vrot.lane.b32.xlu0 %v726, 8
      %v814 = vpop.permute.xlu0 %813
      %815 = vrot.lane.b32.xlu0 %v729, 8
      %v816 = vpop.permute.xlu0 %815
      %817 = vrot.lane.b32.xlu0 %v732, 8
      %v818 = vpop.permute.xlu0 %817
      %819 = vrot.lane.b32.xlu0 %v735, 8
      %v820 = vpop.permute.xlu0 %819
      %821 = vrot.lane.b32.xlu0 %v738, 8
      %v822 = vpop.permute.xlu0 %821
      %823 = vrot.lane.b32.xlu0 %v741, 8
      %v824 = vpop.permute.xlu0 %823
      %825 = vrot.lane.b32.xlu0 %v744, 8
      %v826 = vpop.permute.xlu0 %825
      %827 = vrot.lane.b32.xlu0 %v747, 8
      %v828 = vpop.permute.xlu0 %827
      %829 = vrot.lane.b32.xlu0 %v441, 12
      %v830 = vpop.permute.xlu0 %829
      %831 = vrot.lane.b32.xlu0 %v442, 12
      %v832 = vpop.permute.xlu0 %831
      %833 = vrot.lane.b32.xlu0 %v443, 12
      %v834 = vpop.permute.xlu0 %833
      %835 = vrot.lane.b32.xlu0 %v444, 12
      %v836 = vpop.permute.xlu0 %835
      %837 = vrot.lane.b32.xlu0 %v445, 12
      %v838 = vpop.permute.xlu0 %837
      %839 = vrot.lane.b32.xlu0 %v446, 12
      %v840 = vpop.permute.xlu0 %839
      %841 = vrot.lane.b32.xlu0 %v447, 12
      %v842 = vpop.permute.xlu0 %841
      %843 = vrot.lane.b32.xlu0 %v448, 12
      %v844 = vpop.permute.xlu0 %843
      %845 = vrot.lane.b32.xlu0 %v449, 12
      %v846 = vpop.permute.xlu0 %845
      %847 = vrot.lane.b32.xlu0 %v450, 12
      %v848 = vpop.permute.xlu0 %847
      %849 = vrot.lane.b32.xlu0 %v451, 12
      %v850 = vpop.permute.xlu0 %849
      %851 = vrot.lane.b32.xlu0 %v452, 12
      %v852 = vpop.permute.xlu0 %851
      %853 = vrot.lane.b32.xlu0 %v453, 12
      %v854 = vpop.permute.xlu0 %853
      %855 = vrot.lane.b32.xlu0 %v454, 12
      %v856 = vpop.permute.xlu0 %855
      %857 = vrot.lane.b32.xlu0 %v455, 12
      %v858 = vpop.permute.xlu0 %857
      %859 = vrot.lane.b32.xlu0 %v456, 12
      %v860 = vpop.permute.xlu0 %859
      %861 = vrot.lane.b32.xlu0 %v498, 16
      %v862 = vpop.permute.xlu0 %861
      %863 = vrot.lane.b32.xlu0 %v510, 16
      %v864 = vpop.permute.xlu0 %863
      %865 = vrot.lane.b32.xlu0 %v522, 16
      %v866 = vpop.permute.xlu0 %865
      %867 = vrot.lane.b32.xlu0 %v534, 16
      %v868 = vpop.permute.xlu0 %867
      %869 = vrot.lane.b32.xlu0 %v546, 16
      %v870 = vpop.permute.xlu0 %869
      %871 = vrot.lane.b32.xlu0 %v558, 16
      %v872 = vpop.permute.xlu0 %871
      %873 = vrot.lane.b32.xlu0 %v570, 16
      %v874 = vpop.permute.xlu0 %873
      %875 = vrot.lane.b32.xlu0 %v582, 16
      %v876 = vpop.permute.xlu0 %875
      %877 = vrot.lane.b32.xlu0 %v594, 16
      %v878 = vpop.permute.xlu0 %877
      %879 = vrot.lane.b32.xlu0 %v606, 16
      %v880 = vpop.permute.xlu0 %879
      %881 = vrot.lane.b32.xlu0 %v618, 16
      %v882 = vpop.permute.xlu0 %881
      %883 = vrot.lane.b32.xlu0 %v630, 16
      %v884 = vpop.permute.xlu0 %883
      %885 = vrot.lane.b32.xlu0 %v642, 16
      %v886 = vpop.permute.xlu0 %885
      %887 = vrot.lane.b32.xlu0 %v654, 16
      %v888 = vpop.permute.xlu0 %887
      %889 = vrot.lane.b32.xlu0 %v666, 16
      %v890 = vpop.permute.xlu0 %889
      %891 = vrot.lane.b32.xlu0 %v759, 16
      %v892 = vpop.permute.xlu0 %891
      %893 = vrot.lane.b32.xlu0 %v705, 20
      %v894 = vpop.permute.xlu0 %893
      %895 = vrot.lane.b32.xlu0 %v708, 20
      %v896 = vpop.permute.xlu0 %895
      %897 = vrot.lane.b32.xlu0 %v711, 20
      %v898 = vpop.permute.xlu0 %897
      %899 = vrot.lane.b32.xlu0 %v714, 20
      %v900 = vpop.permute.xlu0 %899
      %901 = vrot.lane.b32.xlu0 %v717, 20
      %v902 = vpop.permute.xlu0 %901
      %903 = vrot.lane.b32.xlu0 %v720, 20
      %v904 = vpop.permute.xlu0 %903
      %905 = vrot.lane.b32.xlu0 %v723, 20
      %v906 = vpop.permute.xlu0 %905
      %907 = vrot.lane.b32.xlu0 %v726, 20
      %v908 = vpop.permute.xlu0 %907
      %909 = vrot.lane.b32.xlu0 %v729, 20
      %v910 = vpop.permute.xlu0 %909
      %911 = vrot.lane.b32.xlu0 %v732, 20
      %v912 = vpop.permute.xlu0 %911
      %913 = vrot.lane.b32.xlu0 %v735, 20
      %v914 = vpop.permute.xlu0 %913
      %915 = vrot.lane.b32.xlu0 %v738, 20
      %v916 = vpop.permute.xlu0 %915
      %917 = vrot.lane.b32.xlu0 %v741, 20
      %v918 = vpop.permute.xlu0 %917
      %919 = vrot.lane.b32.xlu0 %v744, 20
      %v920 = vpop.permute.xlu0 %919
      %921 = vrot.lane.b32.xlu0 %v747, 20
      %v922 = vpop.permute.xlu0 %921
      %923 = vrot.lane.b32.xlu0 %v764, 20
      %v924 = vpop.permute.xlu0 %923
      %925 = vrot.lane.b32.xlu0 %v442, 24
      %v926 = vpop.permute.xlu0 %925
      %927 = vrot.lane.b32.xlu0 %v443, 24
      %v928 = vpop.permute.xlu0 %927
      %929 = vrot.lane.b32.xlu0 %v444, 24
      %v930 = vpop.permute.xlu0 %929
      %931 = vrot.lane.b32.xlu0 %v445, 24
      %v932 = vpop.permute.xlu0 %931
      %933 = vrot.lane.b32.xlu0 %v446, 24
      %v934 = vpop.permute.xlu0 %933
      %935 = vrot.lane.b32.xlu0 %v447, 24
      %v936 = vpop.permute.xlu0 %935
      %937 = vrot.lane.b32.xlu0 %v448, 24
      %v938 = vpop.permute.xlu0 %937
      %939 = vrot.lane.b32.xlu0 %v449, 24
      %v940 = vpop.permute.xlu0 %939
      %941 = vrot.lane.b32.xlu0 %v450, 24
      %v942 = vpop.permute.xlu0 %941
      %943 = vrot.lane.b32.xlu0 %v451, 24
      %v944 = vpop.permute.xlu0 %943
      %945 = vrot.lane.b32.xlu0 %v452, 24
      %v946 = vpop.permute.xlu0 %945
      %947 = vrot.lane.b32.xlu0 %v453, 24
      %v948 = vpop.permute.xlu0 %947
      %949 = vrot.lane.b32.xlu0 %v454, 24
      %v950 = vpop.permute.xlu0 %949
      %951 = vrot.lane.b32.xlu0 %v455, 24
      %v952 = vpop.permute.xlu0 %951
      %953 = vrot.lane.b32.xlu0 %v456, 24
      %v954 = vpop.permute.xlu0 %953
      %955 = vrot.lane.b32.xlu0 %v440, 24
      %v956 = vpop.permute.xlu0 %955
      %957 = vrot.lane.b32.xlu0 %v510, 28
      %v958 = vpop.permute.xlu0 %957
      %959 = vrot.lane.b32.xlu0 %v522, 28
      %v960 = vpop.permute.xlu0 %959
      %961 = vrot.lane.b32.xlu0 %v534, 28
      %v962 = vpop.permute.xlu0 %961
      %963 = vrot.lane.b32.xlu0 %v546, 28
      %v964 = vpop.permute.xlu0 %963
      %965 = vrot.lane.b32.xlu0 %v558, 28
      %v966 = vpop.permute.xlu0 %965
      %967 = vrot.lane.b32.xlu0 %v570, 28
      %v968 = vpop.permute.xlu0 %967
      %969 = vrot.lane.b32.xlu0 %v582, 28
      %v970 = vpop.permute.xlu0 %969
      %971 = vrot.lane.b32.xlu0 %v594, 28
      %v972 = vpop.permute.xlu0 %971
      %973 = vrot.lane.b32.xlu0 %v606, 28
      %v974 = vpop.permute.xlu0 %973
      %975 = vrot.lane.b32.xlu0 %v618, 28
      %v976 = vpop.permute.xlu0 %975
      %977 = vrot.lane.b32.xlu0 %v630, 28
      %v978 = vpop.permute.xlu0 %977
      %979 = vrot.lane.b32.xlu0 %v642, 28
      %v980 = vpop.permute.xlu0 %979
      %981 = vrot.lane.b32.xlu0 %v654, 28
      %v982 = vpop.permute.xlu0 %981
      %983 = vrot.lane.b32.xlu0 %v666, 28
      %v984 = vpop.permute.xlu0 %983
      %985 = vrot.lane.b32.xlu0 %v759, 28
      %v986 = vpop.permute.xlu0 %985
      %987 = vrot.lane.b32.xlu0 %v486, 28
      %v988 = vpop.permute.xlu0 %987
      %989 = vrot.lane.b32.xlu0 %v708, 32
      %v990 = vpop.permute.xlu0 %989
      %991 = vrot.lane.b32.xlu0 %v711, 32
      %v992 = vpop.permute.xlu0 %991
      %993 = vrot.lane.b32.xlu0 %v714, 32
      %v994 = vpop.permute.xlu0 %993
      %995 = vrot.lane.b32.xlu0 %v717, 32
      %v996 = vpop.permute.xlu0 %995
      %997 = vrot.lane.b32.xlu0 %v720, 32
      %v998 = vpop.permute.xlu0 %997
      %999 = vrot.lane.b32.xlu0 %v723, 32
      %v1000 = vpop.permute.xlu0 %999
      %1001 = vrot.lane.b32.xlu0 %v726, 32
      %v1002 = vpop.permute.xlu0 %1001
      %1003 = vrot.lane.b32.xlu0 %v729, 32
      %v1004 = vpop.permute.xlu0 %1003
      %1005 = vrot.lane.b32.xlu0 %v732, 32
      %v1006 = vpop.permute.xlu0 %1005
      %1007 = vrot.lane.b32.xlu0 %v735, 32
      %v1008 = vpop.permute.xlu0 %1007
      %1009 = vrot.lane.b32.xlu0 %v738, 32
      %v1010 = vpop.permute.xlu0 %1009
      %1011 = vrot.lane.b32.xlu0 %v741, 32
      %v1012 = vpop.permute.xlu0 %1011
      %1013 = vrot.lane.b32.xlu0 %v744, 32
      %v1014 = vpop.permute.xlu0 %1013
      %1015 = vrot.lane.b32.xlu0 %v747, 32
      %v1016 = vpop.permute.xlu0 %1015
      %1017 = vrot.lane.b32.xlu0 %v764, 32
      %v1018 = vpop.permute.xlu0 %1017
      %1019 = vrot.lane.b32.xlu0 %v702, 32
      %v1020 = vpop.permute.xlu0 %1019
      %vm1021 = vcmask 31744
      %v1023 = vsel %vm1021, %v440, %v766
      %v1025 = vsel %vm1021, %v441, %v768
      %v1027 = vsel %vm1021, %v442, %v770
      %v1029 = vsel %vm1021, %v443, %v772
      %v1031 = vsel %vm1021, %v444, %v774
      %v1033 = vsel %vm1021, %v445, %v776
      %v1035 = vsel %vm1021, %v446, %v778
      %v1037 = vsel %vm1021, %v447, %v780
      %v1039 = vsel %vm1021, %v448, %v782
      %v1041 = vsel %vm1021, %v449, %v784
      %v1043 = vsel %vm1021, %v450, %v786
      %v1045 = vsel %vm1021, %v451, %v788
      %v1047 = vsel %vm1021, %v452, %v790
      %v1049 = vsel %vm1021, %v453, %v792
      %v1051 = vsel %vm1021, %v454, %v794
      %v1053 = vsel %vm1021, %v455, %v796
      %vm1054 = vcmask 64512
      %v1056 = vsel %vm1054, %v1023, %v798
      %v1058 = vsel %vm1054, %v1025, %v800
      %v1060 = vsel %vm1054, %v1027, %v802
      %v1062 = vsel %vm1054, %v1029, %v804
      %v1064 = vsel %vm1054, %v1031, %v806
      %v1066 = vsel %vm1054, %v1033, %v808
      %v1068 = vsel %vm1054, %v1035, %v810
      %v1070 = vsel %vm1054, %v1037, %v812
      %v1072 = vsel %vm1054, %v1039, %v814
      %v1074 = vsel %vm1054, %v1041, %v816
      %v1076 = vsel %vm1054, %v1043, %v818
      %v1078 = vsel %vm1054, %v1045, %v820
      %v1080 = vsel %vm1054, %v1047, %v822
      %v1082 = vsel %vm1054, %v1049, %v824
      %v1084 = vsel %vm1054, %v1051, %v826
      %v1086 = vsel %vm1054, %v1053, %v828
      %vm1087 = vcmask 97280
      %v1089 = vsel %vm1087, %v1056, %v830
      %v1091 = vsel %vm1087, %v1058, %v832
      %v1093 = vsel %vm1087, %v1060, %v834
      %v1095 = vsel %vm1087, %v1062, %v836
      %v1097 = vsel %vm1087, %v1064, %v838
      %v1099 = vsel %vm1087, %v1066, %v840
      %v1101 = vsel %vm1087, %v1068, %v842
      %v1103 = vsel %vm1087, %v1070, %v844
      %v1105 = vsel %vm1087, %v1072, %v846
      %v1107 = vsel %vm1087, %v1074, %v848
      %v1109 = vsel %vm1087, %v1076, %v850
      %v1111 = vsel %vm1087, %v1078, %v852
      %v1113 = vsel %vm1087, %v1080, %v854
      %v1115 = vsel %vm1087, %v1082, %v856
      %v1117 = vsel %vm1087, %v1084, %v858
      %v1119 = vsel %vm1087, %v1086, %v860
      %vm1120 = vcmask 130048
      %v1122 = vsel %vm1120, %v1089, %v862
      %v1124 = vsel %vm1120, %v1091, %v864
      %v1126 = vsel %vm1120, %v1093, %v866
      %v1128 = vsel %vm1120, %v1095, %v868
      %v1130 = vsel %vm1120, %v1097, %v870
      %v1132 = vsel %vm1120, %v1099, %v872
      %v1134 = vsel %vm1120, %v1101, %v874
      %v1136 = vsel %vm1120, %v1103, %v876
      %v1138 = vsel %vm1120, %v1105, %v878
      %v1140 = vsel %vm1120, %v1107, %v880
      %v1142 = vsel %vm1120, %v1109, %v882
      %v1144 = vsel %vm1120, %v1111, %v884
      %v1146 = vsel %vm1120, %v1113, %v886
      %v1148 = vsel %vm1120, %v1115, %v888
      %v1150 = vsel %vm1120, %v1117, %v890
      %v1152 = vsel %vm1120, %v1119, %v892
      %vm1153 = vcmask 162816
      %v1155 = vsel %vm1153, %v1122, %v894
      %v1157 = vsel %vm1153, %v1124, %v896
      %v1159 = vsel %vm1153, %v1126, %v898
      %v1161 = vsel %vm1153, %v1128, %v900
      %v1163 = vsel %vm1153, %v1130, %v902
      %v1165 = vsel %vm1153, %v1132, %v904
      %v1167 = vsel %vm1153, %v1134, %v906
      %v1169 = vsel %vm1153, %v1136, %v908
      %v1171 = vsel %vm1153, %v1138, %v910
      %v1173 = vsel %vm1153, %v1140, %v912
      %v1175 = vsel %vm1153, %v1142, %v914
      %v1177 = vsel %vm1153, %v1144, %v916
      %v1179 = vsel %vm1153, %v1146, %v918
      %v1181 = vsel %vm1153, %v1148, %v920
      %v1183 = vsel %vm1153, %v1150, %v922
      %v1185 = vsel %vm1153, %v1152, %v924
      %vm1186 = vcmask 195584
      %v1188 = vsel %vm1186, %v1155, %v926
      %v1190 = vsel %vm1186, %v1157, %v928
      %v1192 = vsel %vm1186, %v1159, %v930
      %v1194 = vsel %vm1186, %v1161, %v932
      %v1196 = vsel %vm1186, %v1163, %v934
      %v1198 = vsel %vm1186, %v1165, %v936
      %v1200 = vsel %vm1186, %v1167, %v938
      %v1202 = vsel %vm1186, %v1169, %v940
      %v1204 = vsel %vm1186, %v1171, %v942
      %v1206 = vsel %vm1186, %v1173, %v944
      %v1208 = vsel %vm1186, %v1175, %v946
      %v1210 = vsel %vm1186, %v1177, %v948
      %v1212 = vsel %vm1186, %v1179, %v950
      %v1214 = vsel %vm1186, %v1181, %v952
      %v1216 = vsel %vm1186, %v1183, %v954
      %v1218 = vsel %vm1186, %v1185, %v956
      %vm1219 = vcmask 228352
      %v1221 = vsel %vm1219, %v1188, %v958
      %v1223 = vsel %vm1219, %v1190, %v960
      %v1225 = vsel %vm1219, %v1192, %v962
      %v1227 = vsel %vm1219, %v1194, %v964
      %v1229 = vsel %vm1219, %v1196, %v966
      %v1231 = vsel %vm1219, %v1198, %v968
      %v1233 = vsel %vm1219, %v1200, %v970
      %v1235 = vsel %vm1219, %v1202, %v972
      %v1237 = vsel %vm1219, %v1204, %v974
      %v1239 = vsel %vm1219, %v1206, %v976
      %v1241 = vsel %vm1219, %v1208, %v978
      %v1243 = vsel %vm1219, %v1210, %v980
      %v1245 = vsel %vm1219, %v1212, %v982
      %v1247 = vsel %vm1219, %v1214, %v984
      %v1249 = vsel %vm1219, %v1216, %v986
      %v1251 = vsel %vm1219, %v1218, %v988
      %vm1252 = vcmask 261120
      %v1254 = vsel %vm1252, %v1221, %v990
      %v1256 = vsel %vm1252, %v1223, %v992
      %v1258 = vsel %vm1252, %v1225, %v994
      %v1260 = vsel %vm1252, %v1227, %v996
      %v1262 = vsel %vm1252, %v1229, %v998
      %v1264 = vsel %vm1252, %v1231, %v1000
      %v1266 = vsel %vm1252, %v1233, %v1002
      %v1268 = vsel %vm1252, %v1235, %v1004
      %v1270 = vsel %vm1252, %v1237, %v1006
      %v1272 = vsel %vm1252, %v1239, %v1008
      %v1274 = vsel %vm1252, %v1241, %v1010
      %v1276 = vsel %vm1252, %v1243, %v1012
      %v1278 = vsel %vm1252, %v1245, %v1014
      %v1280 = vsel %vm1252, %v1247, %v1016
      %v1282 = vsel %vm1252, %v1249, %v1018
      %v1284 = vsel %vm1252, %v1251, %v1020
      %v1285 = vld [vmem:[%s1] sm:$0xf]
      %v1286 = vld [vmem:[%s1 + $0x4] sm:$0xf]
      %v1287 = vld [vmem:[%s1 + $0x8] sm:$0xf]
      %v1288 = vld [vmem:[%s1 + $0xc] sm:$0xf]
      %v1289 = vld [vmem:[%s1 + $0x10] sm:$0x3]
      %v1290 = vld [vmem:[%s2] sm:$0x1]
      %v1292 = vlaneseq
      %v1293 = vshrl.u32 %v1292, 7
      %v1294 = vsub.s32 0, %v1293
      %v1295 = vrot.slane %v1290, %v1294
      %v1302 = vunpack.c.l.b16 %v1285
      %v1303 = vunpack.c.l.b16 %v1286
      %v1304 = vunpack.c.l.b16 %v1287
      %v1305 = vunpack.c.l.b16 %v1288
      %v1306 = vunpack.c.l.b16 %v1289
      %v1307 = vpack.c.b16 %v1303, %v1302
      %v1308 = vpack.c.b16 %v1305, %v1304
      %v1309 = vpack.c.b16 %v1306, %v1306
      %vm1312 = vcmask 293888
      %v1313 = vsel %vm1312, %v1254, 0
      %v1315 = vsel %vm1312, %v1256, 0
      %v1317 = vsel %vm1312, %v1258, 0
      %v1319 = vsel %vm1312, %v1260, 0
      %v1321 = vsel %vm1312, %v1262, 0
      %v1323 = vsel %vm1312, %v1264, 0
      %v1325 = vsel %vm1312, %v1266, 0
      %v1327 = vsel %vm1312, %v1268, 0
      %v1329 = vsel %vm1312, %v1270, 0
      %v1331 = vsel %vm1312, %v1272, 0
      %v1333 = vsel %vm1312, %v1274, 0
      %v1335 = vsel %vm1312, %v1276, 0
      %v1337 = vsel %vm1312, %v1278, 0
      %v1339 = vsel %vm1312, %v1280, 0
      %v1341 = vsel %vm1312, %v1282, 0
      %v1343 = vsel %vm1312, %v1284, 0
      %vm1345 = vcmask 1041408
      %v1347 = vsel %vm1345, %v1309, 0
      %1349 = vmatprep.subr.bf16.mxu0 0
      %1350 = vmatpush1.bf16.msra.mxu0 %v1307
      %1351 = vmatprep.subr.bf16.mxu0 0
      %1352 = vmatpush1.bf16.msra.mxu0 %v1308
      %1353 = vmatprep.subr.bf16.mxu0 0
      %1354 = vmatpush1.bf16.msra.mxu0 %v1347
      %1355 = vmatprep.subr.bf16.mxu0 0
      %1356 = vmatpush1.bf16.msra.mxu0 0
      %1357 = vmatprep.subr.bf16.mxu0 0
      %1358 = vmatpush1.bf16.msra.mxu0 0
      %1359 = vmatprep.subr.bf16.mxu0 0
      %1360 = vmatpush1.bf16.msra.mxu0 0
      %1361 = vmatprep.subr.bf16.mxu0 0
      %1362 = vmatpush1.bf16.msra.mxu0 0
      %1363 = vmatprep.subr.bf16.mxu0 0
      %1364 = vmatpush1.bf16.msra.mxu0 0
      %1365 = vmatprep.subr.bf16.mxu0 0
      %1366 = vmatpush1.bf16.msra.mxu0 0
      %1367 = vmatprep.subr.bf16.mxu0 0
      %1368 = vmatpush1.bf16.msra.mxu0 0
      %1369 = vmatprep.subr.bf16.mxu0 0
      %1370 = vmatpush1.bf16.msra.mxu0 0
      %1371 = vmatprep.subr.bf16.mxu0 0
      %1372 = vmatpush1.bf16.msra.mxu0 0
      %1373 = vmatprep.subr.bf16.mxu0 0
      %1374 = vmatpush1.bf16.msra.mxu0 0
      %1375 = vmatprep.subr.bf16.mxu0 0
      %1376 = vmatpush1.bf16.msra.mxu0 0
      %1377 = vmatprep.subr.bf16.mxu0 0
      %1378 = vmatpush1.bf16.msra.mxu0 0
      %1379 = vmatprep.subr.bf16.mxu0 0
      %1380 = vmatpush1.bf16.msra.mxu0 0
      %1381 = vmatprep.mubr.bf16.mxu0 0
      %1382 = vmatmul.mubr.bf16.gmra.mrb[0].mxu0 %v1313
      %v1383 = vpop.f32.mrb[0].mxu0
      %v1384 = vadd.f32 %v1295, %v1383
      %v1385 = vpop.f32.mrb[0].mxu0
      %v1386 = vpop.f32.mrb[0].mxu0
      %v1387 = vadd.f32 %v1295, %v1386
      %v1388 = vpop.f32.mrb[0].mxu0
      %1389 = vmatprep.mubr.bf16.mxu0 0
      %1390 = vmatmul.mubr.bf16.gmra.mrb[0].mxu0 %v1315
      %v1391 = vpop.f32.mrb[0].mxu0
      %v1392 = vadd.f32 %v1295, %v1391
      %v1393 = vpop.f32.mrb[0].mxu0
      %v1394 = vpop.f32.mrb[0].mxu0
      %v1395 = vadd.f32 %v1295, %v1394
      %v1396 = vpop.f32.mrb[0].mxu0
      %1397 = vmatprep.mubr.bf16.mxu0 0
      %1398 = vmatmul.mubr.bf16.gmra.mrb[0].mxu0 %v1317
      %v1399 = vpop.f32.mrb[0].mxu0
      %v1400 = vadd.f32 %v1295, %v1399
      %v1401 = vpop.f32.mrb[0].mxu0
      %v1402 = vpop.f32.mrb[0].mxu0
      %v1403 = vadd.f32 %v1295, %v1402
      %v1404 = vpop.f32.mrb[0].mxu0
      %1405 = vmatprep.mubr.bf16.mxu0 0
      %1406 = vmatmul.mubr.bf16.gmra.mrb[0].mxu0 %v1319
      %v1407 = vpop.f32.mrb[0].mxu0
      %v1408 = vadd.f32 %v1295, %v1407
      %v1409 = vpop.f32.mrb[0].mxu0
      %v1410 = vpop.f32.mrb[0].mxu0
      %v1411 = vadd.f32 %v1295, %v1410
      %v1412 = vpop.f32.mrb[0].mxu0
      %1413 = vmatprep.mubr.bf16.mxu0 0
      %1414 = vmatmul.mubr.bf16.gmra.mrb[0].mxu0 %v1321
      %v1415 = vpop.f32.mrb[0].mxu0
      %v1416 = vadd.f32 %v1295, %v1415
      %v1417 = vpop.f32.mrb[0].mxu0
      %v1418 = vpop.f32.mrb[0].mxu0
      %v1419 = vadd.f32 %v1295, %v1418
      %v1420 = vpop.f32.mrb[0].mxu0
      %1421 = vmatprep.mubr.bf16.mxu0 0
      %1422 = vmatmul.mubr.bf16.gmra.mrb[0].mxu0 %v1323
      %v1423 = vpop.f32.mrb[0].mxu0
      %v1424 = vadd.f32 %v1295, %v1423
      %v1425 = vpop.f32.mrb[0].mxu0
      %v1426 = vpop.f32.mrb[0].mxu0
      %v1427 = vadd.f32 %v1295, %v1426
      %v1428 = vpop.f32.mrb[0].mxu0
      %1429 = vmatprep.mubr.bf16.mxu0 0
      %1430 = vmatmul.mubr.bf16.gmra.mrb[0].mxu0 %v1325
      %v1431 = vpop.f32.mrb[0].mxu0
      %v1432 = vadd.f32 %v1295, %v1431
      %v1433 = vpop.f32.mrb[0].mxu0
      %v1434 = vpop.f32.mrb[0].mxu0
      %v1435 = vadd.f32 %v1295, %v1434
      %v1436 = vpop.f32.mrb[0].mxu0
      %1437 = vmatprep.mubr.bf16.mxu0 0
      %1438 = vmatmul.mubr.bf16.gmra.mrb[0].mxu0 %v1327
      %v1439 = vpop.f32.mrb[0].mxu0
      %v1440 = vadd.f32 %v1295, %v1439
      %v1441 = vpop.f32.mrb[0].mxu0
      %v1442 = vpop.f32.mrb[0].mxu0
      %v1443 = vadd.f32 %v1295, %v1442
      %v1444 = vpop.f32.mrb[0].mxu0
      %1445 = vmatprep.mubr.bf16.mxu0 0
      %1446 = vmatmul.mubr.bf16.gmra.mrb[0].mxu0 %v1329
      %v1447 = vpop.f32.mrb[0].mxu0
      %v1448 = vadd.f32 %v1295, %v1447
      %v1449 = vpop.f32.mrb[0].mxu0
      %v1450 = vpop.f32.mrb[0].mxu0
      %v1451 = vadd.f32 %v1295, %v1450
      %v1452 = vpop.f32.mrb[0].mxu0
      %1453 = vmatprep.mubr.bf16.mxu0 0
      %1454 = vmatmul.mubr.bf16.gmra.mrb[0].mxu0 %v1331
      %v1455 = vpop.f32.mrb[0].mxu0
      %v1456 = vadd.f32 %v1295, %v1455
      %v1457 = vpop.f32.mrb[0].mxu0
      %v1458 = vpop.f32.mrb[0].mxu0
      %v1459 = vadd.f32 %v1295, %v1458
      %v1460 = vpop.f32.mrb[0].mxu0
      %1461 = vmatprep.mubr.bf16.mxu0 0
      %1462 = vmatmul.mubr.bf16.gmra.mrb[0].mxu0 %v1333
      %v1463 = vpop.f32.mrb[0].mxu0
      %v1464 = vadd.f32 %v1295, %v1463
      %v1465 = vpop.f32.mrb[0].mxu0
      %v1466 = vpop.f32.mrb[0].mxu0
      %v1467 = vadd.f32 %v1295, %v1466
      %v1468 = vpop.f32.mrb[0].mxu0
      %1469 = vmatprep.mubr.bf16.mxu0 0
      %1470 = vmatmul.mubr.bf16.gmra.mrb[0].mxu0 %v1335
      %v1471 = vpop.f32.mrb[0].mxu0
      %v1472 = vadd.f32 %v1295, %v1471
      %v1473 = vpop.f32.mrb[0].mxu0
      %v1474 = vpop.f32.mrb[0].mxu0
      %v1475 = vadd.f32 %v1295, %v1474
      %v1476 = vpop.f32.mrb[0].mxu0
      %1477 = vmatprep.mubr.bf16.mxu0 0
      %1478 = vmatmul.mubr.bf16.gmra.mrb[0].mxu0 %v1337
      %v1479 = vpop.f32.mrb[0].mxu0
      %v1480 = vadd.f32 %v1295, %v1479
      %v1481 = vpop.f32.mrb[0].mxu0
      %v1482 = vpop.f32.mrb[0].mxu0
      %v1483 = vadd.f32 %v1295, %v1482
      %v1484 = vpop.f32.mrb[0].mxu0
      %1485 = vmatprep.mubr.bf16.mxu0 0
      %1486 = vmatmul.mubr.bf16.gmra.mrb[0].mxu0 %v1339
      %v1487 = vpop.f32.mrb[0].mxu0
      %v1488 = vadd.f32 %v1295, %v1487
      %v1489 = vpop.f32.mrb[0].mxu0
      %v1490 = vpop.f32.mrb[0].mxu0
      %v1491 = vadd.f32 %v1295, %v1490
      %v1492 = vpop.f32.mrb[0].mxu0
      %1493 = vmatprep.mubr.bf16.mxu0 0
      %1494 = vmatmul.mubr.bf16.gmra.mrb[0].mxu0 %v1341
      %v1495 = vpop.f32.mrb[0].mxu0
      %v1496 = vadd.f32 %v1295, %v1495
      %v1497 = vpop.f32.mrb[0].mxu0
      %v1498 = vpop.f32.mrb[0].mxu0
      %v1499 = vadd.f32 %v1295, %v1498
      %v1500 = vpop.f32.mrb[0].mxu0
      %1501 = vmatprep.mubr.bf16.mxu0 0
      %1502 = vmatmul.mubr.bf16.gmra.mrb[0].mxu0 %v1343
      %v1503 = vpop.f32.mrb[0].mxu0
      %v1504 = vadd.f32 %v1295, %v1503
      %v1505 = vpop.f32.mrb[0].mxu0
      %v1506 = vpop.f32.mrb[0].mxu0
      %v1507 = vadd.f32 %v1295, %v1506
      %v1508 = vpop.f32.mrb[0].mxu0
      %1509 = vdwg.mxu0
      %v1510 = vmax.f32 %v1384, 0.0
      %v1511 = vmax.f32 %v1387, 0.0
      %v1512 = vmax.f32 %v1392, 0.0
      %v1513 = vmax.f32 %v1395, 0.0
      %v1514 = vmax.f32 %v1400, 0.0
      %v1515 = vmax.f32 %v1403, 0.0
      %v1516 = vmax.f32 %v1408, 0.0
      %v1517 = vmax.f32 %v1411, 0.0
      %v1518 = vmax.f32 %v1416, 0.0
      %v1519 = vmax.f32 %v1419, 0.0
      %v1520 = vmax.f32 %v1424, 0.0
      %v1521 = vmax.f32 %v1427, 0.0
      %v1522 = vmax.f32 %v1432, 0.0
      %v1523 = vmax.f32 %v1435, 0.0
      %v1524 = vmax.f32 %v1440, 0.0
      %v1525 = vmax.f32 %v1443, 0.0
      %v1526 = vmax.f32 %v1448, 0.0
      %v1527 = vmax.f32 %v1451, 0.0
      %v1528 = vmax.f32 %v1456, 0.0
      %v1529 = vmax.f32 %v1459, 0.0
      %v1530 = vmax.f32 %v1464, 0.0
      %v1531 = vmax.f32 %v1467, 0.0
      %v1532 = vmax.f32 %v1472, 0.0
      %v1533 = vmax.f32 %v1475, 0.0
      %v1534 = vmax.f32 %v1480, 0.0
      %v1535 = vmax.f32 %v1483, 0.0
      %v1536 = vmax.f32 %v1488, 0.0
      %v1537 = vmax.f32 %v1491, 0.0
      %v1538 = vmax.f32 %v1496, 0.0
      %v1539 = vmax.f32 %v1499, 0.0
      %v1540 = vmax.f32 %v1504, 0.0
      %v1541 = vmax.f32 %v1507, 0.0
      %1542 = vst.msk [vmem:[%s170] sm:$0xff] %vm1021, %v1510
      %1543 = vst.msk [vmem:[%s170 + $0x8] sm:$0xff] %vm1021, %v1511
      %1544 = vst.msk [vmem:[%s170 + $0x10] sm:$0xff] %vm1021, %v1512
      %1545 = vst.msk [vmem:[%s170 + $0x18] sm:$0xff] %vm1021, %v1513
      %1546 = vst.msk [vmem:[%s170 + $0x20] sm:$0xff] %vm1021, %v1514
      %1547 = vst.msk [vmem:[%s170 + $0x28] sm:$0xff] %vm1021, %v1515
      %1548 = vst.msk [vmem:[%s170 + $0x30] sm:$0xff] %vm1021, %v1516
      %1549 = vst.msk [vmem:[%s170 + $0x38] sm:$0xff] %vm1021, %v1517
      %1550 = vst.msk [vmem:[%s170 + $0x40] sm:$0xff] %vm1021, %v1518
      %1551 = vst.msk [vmem:[%s170 + $0x48] sm:$0xff] %vm1021, %v1519
      %1552 = vst.msk [vmem:[%s170 + $0x50] sm:$0xff] %vm1021, %v1520
      %1553 = vst.msk [vmem:[%s170 + $0x58] sm:$0xff] %vm1021, %v1521
      %1554 = vst.msk [vmem:[%s170 + $0x60] sm:$0xff] %vm1021, %v1522
      %1555 = vst.msk [vmem:[%s170 + $0x68] sm:$0xff] %vm1021, %v1523
      %1556 = vst.msk [vmem:[%s170 + $0x70] sm:$0xff] %vm1021, %v1524
      %1557 = vst.msk [vmem:[%s170 + $0x78] sm:$0xff] %vm1021, %v1525
      %1558 = vst.msk [vmem:[%s170 + $0x80] sm:$0xff] %vm1021, %v1526
      %1559 = vst.msk [vmem:[%s170 + $0x88] sm:$0xff] %vm1021, %v1527
      %1560 = vst.msk [vmem:[%s170 + $0x90] sm:$0xff] %vm1021, %v1528
      %1561 = vst.msk [vmem:[%s170 + $0x98] sm:$0xff] %vm1021, %v1529
      %1562 = vst.msk [vmem:[%s170 + $0xa0] sm:$0xff] %vm1021, %v1530
      %1563 = vst.msk [vmem:[%s170 + $0xa8] sm:$0xff] %vm1021, %v1531
      %1564 = vst.msk [vmem:[%s170 + $0xb0] sm:$0xff] %vm1021, %v1532
      %1565 = vst.msk [vmem:[%s170 + $0xb8] sm:$0xff] %vm1021, %v1533
      %1566 = vst.msk [vmem:[%s170 + $0xc0] sm:$0xff] %vm1021, %v1534
      %1567 = vst.msk [vmem:[%s170 + $0xc8] sm:$0xff] %vm1021, %v1535
      %1568 = vst.msk [vmem:[%s170 + $0xd0] sm:$0xff] %vm1021, %v1536
      %1569 = vst.msk [vmem:[%s170 + $0xd8] sm:$0xff] %vm1021, %v1537
      %1570 = vst.msk [vmem:[%s170 + $0xe0] sm:$0xff] %vm1021, %v1538
      %1571 = vst.msk [vmem:[%s170 + $0xe8] sm:$0xff] %vm1021, %v1539
      %1572 = vst.msk [vmem:[%s170 + $0xf0] sm:$0xff] %vm1021, %v1540
      %1573 = vst.msk [vmem:[%s170 + $0xf8] sm:$0xff] %vm1021, %v1541
      %p1574 = scmp.lt.s32.totalorder %s14, 1
      %s1575 = scalar_select %p1574, %s14, 1
      %s1576 = smul.addr %s1575, 32
      %s1577 = smul.addr %s1576, 8
      %s1578 = scalar_lea.vmem %s3, %s1577
      // Predicated region
      $region33: #{ssh_forward.5} parent=31 // pred_check
        %p1579 = pneg %p100
      $region34: #{ssh_forward.5} parent=31 // pred_check_branch
        %1581 = sbr.rel (%p1579) target = $region36
      $region35: #{ssh_forward.5} parent=31 // pred_region
        _
      $region36: #{ssh_forward.5} parent=31 // pred_fallthru
        _
    $region32: #{ssh_forward.5} parent=5 // pred_fallthru
      _
    %p1582 = scmp.le.s32.totalorder 2, %s9
    // Predicated region
    $region37: #{ssh_forward.5} parent=5 // pred_check
      %p1583 = pneg %p1582
    $region38: #{ssh_forward.5} parent=5 // pred_check_branch
      %1585 = sbr.rel (%p1583) target = $region40
    $region39: #{ssh_forward.5} parent=5 // pred_region
      %s1586 = ssub.s32 %s9, 2
      // Predicated region
      $region41: #{ssh_forward.5} parent=39 // pred_check
        %p1587 = pneg %p106
      $region42: #{ssh_forward.5} parent=39 // pred_check_branch
        %1589 = sbr.rel (%p1587) target = $region44
      $region43: #{ssh_forward.5} parent=39 // pred_region
        %p1590 = scmp.lt.s32.totalorder %s15, 1
        %s1591 = scalar_select %p1590, %s15, 1
        %s1592 = smul.addr %s1591, 32
        %s1593 = smul.addr %s1592, 8
        %s1594 = scalar_lea.vmem %s3, %s1593
      $region44: #{ssh_forward.5} parent=39 // pred_fallthru
        _
    $region40: #{ssh_forward.5} parent=5 // pred_fallthru
      _
  $region6: #{ssh_forward.5} parent=0 // loop_footer
    %s13 = sadd.s32 1, %s9
  $region7: #{ssh_forward.5} parent=0 // loop_footer_branch
    %8 = sbr.rel target = $region3
  $region8: #{ssh_forward.5} parent=0 // loop_exit
    _

// kernel: ssh_forward.4
$region0: #{ssh_forward.4}
  #allocation0 [shape = 'u32[]', space=smem, size = 0x4, offset = 0x4, fixed_abs, tag = 'smem constant byte address 0x4 - core index']
  #allocation1 [shape = 'u32[144,128]{1,0:T(1,128)}', space=vmem, size = 0x12000, scoped, tag = 'internal scratch']
  %s0 = inlined_call_operand.vmem [shape: bf16[2,16,16,4], index: 0, kind: input, shape index: {}]
  %s1 = inlined_call_operand.vmem [shape: bf16[36,8], index: 1, kind: input, shape index: {}]
  %s2 = inlined_call_operand.vmem [shape: f32[1,8], index: 2, kind: input, shape index: {}]
  %s3 = inlined_call_operand.vmem [shape: f32[2,16,16,4], index: 3, kind: output, shape index: {0}]
  %s4 = inlined_call_operand.vmem [shape: bf16[2,16,16,4], index: 4, kind: output, shape index: {1}]
  %5 = xla_tuple %s3, %s4
  %s6 = sld [smem:[#allocation0]]
  $region53: #{ssh_forward.4} parent=0
    _
  %s8 = ssub.s32 1, %s6
  %s9 = scalar_select 0, %s8, %s6
  loop: start=0, step=1, limit=4
  $region2: #{ssh_forward.4} parent=0 // loop_pre_header
    _
  $region3: #{ssh_forward.4} parent=0 // loop_header
    %s11 = sphi 0, %s15
    %p12 = scmp.ge.s32.totalorder %s11, 4
    %s21 = sphi 0, %s23
    %s24 = sphi 0, %s21
    %s25 = sphi 0, %s24
    %s41 = sphi 0, %s25
    %s45 = sphi 0, %s45
    %s47 = sphi 0, %s45
    %s48 = sphi 0, %s47
    %s62 = sphi 0, %s48
    %s66 = sphi 0, %s66
    %s68 = sphi 0, %s66
    %s69 = sphi 0, %s68
    %s83 = sphi 0, %s69
    %s89 = sphi 0, %s91
    %s92 = sphi 0, %s89
    %s93 = sphi 0, %s92
    %s109 = sphi 0, %s93
    %s115 = sphi 0, %s117
    %s118 = sphi 0, %s115
    %s119 = sphi 0, %s118
    %s135 = sphi 0, %s119
  $region4: #{ssh_forward.4} parent=0 // loop_header_branch
    %14 = sbr.rel (%p12) target = $region8
  $region5: #{ssh_forward.4} parent=0 // loop_body
    %s16 = ssub.s32 %s11, 1
    %s17 = ssub.s32 %s11, 2
    %s18 = sadd.s32 %s11, 1
    %s19 = ssub.s32 %s11, %s18
    %p20 = scmp.eq.s32.totalorder %s19, 0
    %s22 = sadd.s32 %s21, 1
    %s23 = scalar_select %p20, %s21, %s22
    %p26 = pneg %p20
    %p27 = scmp.eq.s32.totalorder %s11, 1
    %p28 = por %p26, %p27
    %p29 = scmp.ne.s32.totalorder %s21, %s24
    %p30 = scmp.eq.s32.totalorder %s11, 0
    %p31 = por %p29, %p30
    %p32 = scmp.ne.s32.totalorder %s21, %s24
    %p33 = scmp.eq.s32.totalorder %s16, 1
    %p34 = por %p32, %p33
    %p35 = scmp.ne.s32.totalorder %s24, %s25
    %p36 = scmp.eq.s32.totalorder %s16, 0
    %p37 = por %p35, %p36
    %p38 = scmp.ne.s32.totalorder %s24, %s25
    %p39 = scmp.eq.s32.totalorder %s17, 1
    %p40 = por %p38, %p39
    %p42 = scmp.ne.s32.totalorder %s25, %s41
    %p43 = scmp.eq.s32.totalorder %s17, 0
    %p44 = por %p42, %p43
    %s46 = sadd.s32 %s45, 1
    %p49 = scmp.eq.s32.totalorder %s11, 1
    %p50 = scmp.ne.s32.totalorder %s45, %s47
    %p51 = scmp.eq.s32.totalorder %s11, 0
    %p52 = por %p50, %p51
    %p53 = scmp.ne.s32.totalorder %s45, %s47
    %p54 = scmp.eq.s32.totalorder %s16, 1
    %p55 = por %p53, %p54
    %p56 = scmp.ne.s32.totalorder %s47, %s48
    %p57 = scmp.eq.s32.totalorder %s16, 0
    %p58 = por %p56, %p57
    %p59 = scmp.ne.s32.totalorder %s47, %s48
    %p60 = scmp.eq.s32.totalorder %s17, 1
    %p61 = por %p59, %p60
    %p63 = scmp.ne.s32.totalorder %s48, %s62
    %p64 = scmp.eq.s32.totalorder %s17, 0
    %p65 = por %p63, %p64
    %s67 = sadd.s32 %s66, 1
    %p70 = scmp.eq.s32.totalorder %s11, 1
    %p71 = scmp.ne.s32.totalorder %s66, %s68
    %p72 = scmp.eq.s32.totalorder %s11, 0
    %p73 = por %p71, %p72
    %p74 = scmp.ne.s32.totalorder %s66, %s68
    %p75 = scmp.eq.s32.totalorder %s16, 1
    %p76 = por %p74, %p75
    %p77 = scmp.ne.s32.totalorder %s68, %s69
    %p78 = scmp.eq.s32.totalorder %s16, 0
    %p79 = por %p77, %p78
    %p80 = scmp.ne.s32.totalorder %s68, %s69
    %p81 = scmp.eq.s32.totalorder %s17, 1
    %p82 = por %p80, %p81
    %p84 = scmp.ne.s32.totalorder %s69, %s83
    %p85 = scmp.eq.s32.totalorder %s17, 0
    %p86 = por %p84, %p85
    %s87 = ssub.s32 %s11, %s18
    %p88 = scmp.eq.s32.totalorder %s87, 0
    %s90 = sadd.s32 %s89, 1
    %s91 = scalar_select %p88, %s89, %s90
    %p94 = pneg %p88
    %p95 = scmp.eq.s32.totalorder %s11, 1
    %p96 = por %p94, %p95
    %p97 = scmp.ne.s32.totalorder %s89, %s92
    %p98 = scmp.eq.s32.totalorder %s11, 0
    %p99 = por %p97, %p98
    %p100 = scmp.ne.s32.totalorder %s89, %s92
    %p101 = scmp.eq.s32.totalorder %s16, 1
    %p102 = por %p100, %p101
    %p103 = scmp.ne.s32.totalorder %s92, %s93
    %p104 = scmp.eq.s32.totalorder %s16, 0
    %p105 = por %p103, %p104
    %p106 = scmp.ne.s32.totalorder %s92, %s93
    %p107 = scmp.eq.s32.totalorder %s17, 1
    %p108 = por %p106, %p107
    %p110 = scmp.ne.s32.totalorder %s93, %s109
    %p111 = scmp.eq.s32.totalorder %s17, 0
    %p112 = por %p110, %p111
    %s113 = ssub.s32 %s11, %s18
    %p114 = scmp.eq.s32.totalorder %s113, 0
    %s116 = sadd.s32 %s115, 1
    %s117 = scalar_select %p114, %s115, %s116
    %p120 = pneg %p114
    %p121 = scmp.eq.s32.totalorder %s11, 1
    %p122 = por %p120, %p121
    %p123 = scmp.ne.s32.totalorder %s115, %s118
    %p124 = scmp.eq.s32.totalorder %s11, 0
    %p125 = por %p123, %p124
    %p126 = scmp.ne.s32.totalorder %s115, %s118
    %p127 = scmp.eq.s32.totalorder %s16, 1
    %p128 = por %p126, %p127
    %p129 = scmp.ne.s32.totalorder %s118, %s119
    %p130 = scmp.eq.s32.totalorder %s16, 0
    %p131 = por %p129, %p130
    %p132 = scmp.ne.s32.totalorder %s118, %s119
    %p133 = scmp.eq.s32.totalorder %s17, 1
    %p134 = por %p132, %p133
    %p136 = scmp.ne.s32.totalorder %s119, %s135
    %p137 = scmp.eq.s32.totalorder %s17, 0
    %p138 = por %p136, %p137
    %p139 = scmp.le.s32.totalorder 1, %s11
    %p140 = scmp.lt.s32.totalorder %s11, 3
    %p141 = pnand %p139, %p140
    %p142 = pneg %p141
    // Predicated region
    $region9: #{ssh_forward.4} parent=5 // pred_check
      _
    $region10: #{ssh_forward.4} parent=5 // pred_check_branch
      %144 = sbr.rel (%p141) target = $region12
    $region11: #{ssh_forward.4} parent=5 // pred_region
      %s145 = ssub.s32 %s11, 1
      // Predicated region
      $region13: #{ssh_forward.4} parent=11 // pred_check
        %p146 = pneg %p58
      $region14: #{ssh_forward.4} parent=11 // pred_check_branch
        %148 = sbr.rel (%p146) target = $region16
      $region15: #{ssh_forward.4} parent=11 // pred_region
        _
      $region16: #{ssh_forward.4} parent=11 // pred_fallthru
        _
      // Predicated region
      $region17: #{ssh_forward.4} parent=11 // pred_check
        %p149 = pneg %p79
      $region18: #{ssh_forward.4} parent=11 // pred_check_branch
        %151 = sbr.rel (%p149) target = $region20
      $region19: #{ssh_forward.4} parent=11 // pred_region
        _
      $region20: #{ssh_forward.4} parent=11 // pred_fallthru
        _
    $region12: #{ssh_forward.4} parent=5 // pred_fallthru
      _
    %p152 = scmp.lt.s32.totalorder %s11, 2
    // Predicated region
    $region21: #{ssh_forward.4} parent=5 // pred_check
      %p153 = pneg %p152
    $region22: #{ssh_forward.4} parent=5 // pred_check_branch
      %155 = sbr.rel (%p153) target = $region24
    $region23: #{ssh_forward.4} parent=5 // pred_region
      // Predicated region
      $region25: #{ssh_forward.4} parent=23 // pred_check
        %p156 = pneg %p31
      $region26: #{ssh_forward.4} parent=23 // pred_check_branch
        %158 = sbr.rel (%p156) target = $region28
      $region27: #{ssh_forward.4} parent=23 // pred_region
        %p159 = scmp.lt.s32.totalorder %s11, 1
        %s160 = scalar_select %p159, %s11, 1
        %s161 = smul.addr %s160, 32
        %s162 = smul.addr %s161, 4
        %s163 = scalar_lea.vmem %s0, %s162
      $region28: #{ssh_forward.4} parent=23 // pred_fallthru
        _
    $region24: #{ssh_forward.4} parent=5 // pred_fallthru
      _
    %p164 = scmp.le.s32.totalorder 1, %s11
    %p165 = scmp.lt.s32.totalorder %s11, 3
    %p166 = pnand %p164, %p165
    %p167 = pneg %p166
    // Predicated region
    $region29: #{ssh_forward.4} parent=5 // pred_check
      _
    $region30: #{ssh_forward.4} parent=5 // pred_check_branch
      %169 = sbr.rel (%p166) target = $region32
    $region31: #{ssh_forward.4} parent=5 // pred_region
      %s170 = ssub.s32 %s11, 1
      %p171 = scmp.lt.s32.totalorder %s16, 1
      %s172 = scalar_select %p171, %s16, 1
      %s173 = smul.addr %s172, 32
      %s174 = smul.addr %s173, 4
      %s175 = scalar_lea.vmem %s0, %s174
      %p176 = pneg %p37
      %p177 = pneg %p34
      %p178 = pneg %p58
      %p179 = pneg %p55
      %p180 = pneg %p79
      %p181 = pneg %p76
      %p182 = pneg %p105
      %p183 = pneg %p102
      %p184 = scmp.lt.s32.totalorder %s16, 1
      %s185 = scalar_select %p184, %s16, 1
      %s186 = smul.addr %s185, 32
      %s187 = smul.addr %s186, 8
      %s188 = scalar_lea.vmem %s3, %s187
      %p189 = pneg %p131
      %p190 = pneg %p128
      %p191 = scmp.lt.s32.totalorder %s16, 1
      %s192 = scalar_select %p191, %s16, 1
      %s193 = smul.addr %s192, 32
      %s194 = smul.addr %s193, 4
      %s195 = scalar_lea.vmem %s4, %s194
      %p196 = scmp.lt.s32.totalorder %s16, 1
      %s197 = scalar_select %p196, %s16, 1
      %s198 = smul.addr %s197, 32
      %s199 = smul.addr %s198, 4
      %s200 = scalar_lea.vmem %s0, %s199
      %p201 = scmp.lt.s32.totalorder %s16, 1
      %s202 = scalar_select %p201, %s16, 1
      %s203 = smul.addr %s202, 32
      %s204 = smul.addr %s203, 8
      %s205 = scalar_lea.vmem %s3, %s204
      %p206 = scmp.lt.s32.totalorder %s16, 1
      %s207 = scalar_select %p206, %s16, 1
      %s208 = smul.addr %s207, 32
      %s209 = smul.addr %s208, 4
      %s210 = scalar_lea.vmem %s4, %s209
      %v212 = vld [vmem:[%s200] sm:$0xf]
      %v213 = vld [vmem:[%s200 + $0x4] sm:$0xf]
      %v214 = vld [vmem:[%s200 + $0x8] sm:$0xf]
      %v215 = vld [vmem:[%s200 + $0xc] sm:$0xf]
      %v216 = vld [vmem:[%s200 + $0x10] sm:$0xf]
      %v217 = vld [vmem:[%s200 + $0x14] sm:$0xf]
      %v218 = vld [vmem:[%s200 + $0x18] sm:$0xf]
      %v219 = vld [vmem:[%s200 + $0x1c] sm:$0xf]
      %v220 = vld [vmem:[%s200 + $0x20] sm:$0xf]
      %v221 = vld [vmem:[%s200 + $0x24] sm:$0xf]
      %v222 = vld [vmem:[%s200 + $0x28] sm:$0xf]
      %v223 = vld [vmem:[%s200 + $0x2c] sm:$0xf]
      %v224 = vld [vmem:[%s200 + $0x30] sm:$0xf]
      %v225 = vld [vmem:[%s200 + $0x34] sm:$0xf]
      %v226 = vld [vmem:[%s200 + $0x38] sm:$0xf]
      %v227 = vld [vmem:[%s200 + $0x3c] sm:$0xf]
      %v228 = vld [vmem:[%s200 + $0x40] sm:$0xf]
      %v229 = vld [vmem:[%s200 + $0x44] sm:$0xf]
      %v230 = vld [vmem:[%s200 + $0x48] sm:$0xf]
      %v231 = vld [vmem:[%s200 + $0x4c] sm:$0xf]
      %v232 = vld [vmem:[%s200 + $0x50] sm:$0xf]
      %v233 = vld [vmem:[%s200 + $0x54] sm:$0xf]
      %v234 = vld [vmem:[%s200 + $0x58] sm:$0xf]
      %v235 = vld [vmem:[%s200 + $0x5c] sm:$0xf]
      %v236 = vld [vmem:[%s200 + $0x60] sm:$0xf]
      %v237 = vld [vmem:[%s200 + $0x64] sm:$0xf]
      %v238 = vld [vmem:[%s200 + $0x68] sm:$0xf]
      %v239 = vld [vmem:[%s200 + $0x6c] sm:$0xf]
      %v240 = vld [vmem:[%s200 + $0x70] sm:$0xf]
      %v241 = vld [vmem:[%s200 + $0x74] sm:$0xf]
      %v242 = vld [vmem:[%s200 + $0x78] sm:$0xf]
      %v243 = vld [vmem:[%s200 + $0x7c] sm:$0xf]
      %v276 = vunpack.c.l.b16 %v212
      %v277 = vunpack.c.l.b16 %v213
      %v278 = vunpack.c.l.b16 %v214
      %v279 = vunpack.c.l.b16 %v215
      %v280 = vunpack.c.l.b16 %v216
      %v281 = vunpack.c.l.b16 %v217
      %v282 = vunpack.c.l.b16 %v218
      %v283 = vunpack.c.l.b16 %v219
      %v284 = vunpack.c.l.b16 %v220
      %v285 = vunpack.c.l.b16 %v221
      %v286 = vunpack.c.l.b16 %v222
      %v287 = vunpack.c.l.b16 %v223
      %v288 = vunpack.c.l.b16 %v224
      %v289 = vunpack.c.l.b16 %v225
      %v290 = vunpack.c.l.b16 %v226
      %v291 = vunpack.c.l.b16 %v227
      %v292 = vunpack.c.l.b16 %v228
      %v293 = vunpack.c.l.b16 %v229
      %v294 = vunpack.c.l.b16 %v230
      %v295 = vunpack.c.l.b16 %v231
      %v296 = vunpack.c.l.b16 %v232
      %v297 = vunpack.c.l.b16 %v233
      %v298 = vunpack.c.l.b16 %v234
      %v299 = vunpack.c.l.b16 %v235
      %v300 = vunpack.c.l.b16 %v236
      %v301 = vunpack.c.l.b16 %v237
      %v302 = vunpack.c.l.b16 %v238
      %v303 = vunpack.c.l.b16 %v239
      %v304 = vunpack.c.l.b16 %v240
      %v305 = vunpack.c.l.b16 %v241
      %v306 = vunpack.c.l.b16 %v242
      %v307 = vunpack.c.l.b16 %v243
      %v308 = vpack.c.b16 %v277, %v276
      %v309 = vpack.c.b16 %v279, %v278
      %v310 = vpack.c.b16 %v281, %v280
      %v311 = vpack.c.b16 %v283, %v282
      %v312 = vpack.c.b16 %v285, %v284
      %v313 = vpack.c.b16 %v287, %v286
      %v314 = vpack.c.b16 %v289, %v288
      %v315 = vpack.c.b16 %v291, %v290
      %v316 = vpack.c.b16 %v293, %v292
      %v317 = vpack.c.b16 %v295, %v294
      %v318 = vpack.c.b16 %v297, %v296
      %v319 = vpack.c.b16 %v299, %v298
      %v320 = vpack.c.b16 %v301, %v300
      %v321 = vpack.c.b16 %v303, %v302
      %v322 = vpack.c.b16 %v305, %v304
      %v323 = vpack.c.b16 %v307, %v306
      %v325 = vshrl.u32 0, 16
      %v327 = vrot.slane %v325, 7
      %v328 = vshll.u32 0, 16
      %v330 = vor.u32 %v327, %v328
      %v332 = vshrl.u32 %v308, 16
      %v334 = vrot.slane %v332, 7
      %v335 = vshll.u32 %v308, 16
      %v337 = vor.u32 %v334, %v335
      %v339 = vshrl.u32 %v309, 16
      %v341 = vrot.slane %v339, 7
      %v342 = vshll.u32 %v309, 16
      %v344 = vor.u32 %v341, %v342
      %v346 = vshrl.u32 %v310, 16
      %v348 = vrot.slane %v346, 7
      %v349 = vshll.u32 %v310, 16
      %v351 = vor.u32 %v348, %v349
      %v353 = vshrl.u32 %v311, 16
      %v355 = vrot.slane %v353, 7
      %v356 = vshll.u32 %v311, 16
      %v358 = vor.u32 %v355, %v356
      %v360 = vshrl.u32 %v312, 16
      %v362 = vrot.slane %v360, 7
      %v363 = vshll.u32 %v312, 16
      %v365 = vor.u32 %v362, %v363
      %v367 = vshrl.u32 %v313, 16
      %v369 = vrot.slane %v367, 7
      %v370 = vshll.u32 %v313, 16
      %v372 = vor.u32 %v369, %v370
      %v374 = vshrl.u32 %v314, 16
      %v376 = vrot.slane %v374, 7
      %v377 = vshll.u32 %v314, 16
      %v379 = vor.u32 %v376, %v377
      %v381 = vshrl.u32 %v315, 16
      %v383 = vrot.slane %v381, 7
      %v384 = vshll.u32 %v315, 16
      %v386 = vor.u32 %v383, %v384
      %v388 = vshrl.u32 %v316, 16
      %v390 = vrot.slane %v388, 7
      %v391 = vshll.u32 %v316, 16
      %v393 = vor.u32 %v390, %v391
      %v395 = vshrl.u32 %v317, 16
      %v397 = vrot.slane %v395, 7
      %v398 = vshll.u32 %v317, 16
      %v400 = vor.u32 %v397, %v398
      %v402 = vshrl.u32 %v318, 16
      %v404 = vrot.slane %v402, 7
      %v405 = vshll.u32 %v318, 16
      %v407 = vor.u32 %v404, %v405
      %v409 = vshrl.u32 %v319, 16
      %v411 = vrot.slane %v409, 7
      %v412 = vshll.u32 %v319, 16
      %v414 = vor.u32 %v411, %v412
      %v416 = vshrl.u32 %v320, 16
      %v418 = vrot.slane %v416, 7
      %v419 = vshll.u32 %v320, 16
      %v421 = vor.u32 %v418, %v419
      %v423 = vshrl.u32 %v321, 16
      %v425 = vrot.slane %v423, 7
      %v426 = vshll.u32 %v321, 16
      %v428 = vor.u32 %v425, %v426
      %v430 = vshrl.u32 %v322, 16
      %v432 = vrot.slane %v430, 7
      %v433 = vshll.u32 %v322, 16
      %v435 = vor.u32 %v432, %v433
      %v437 = vshrl.u32 %v323, 16
      %v439 = vrot.slane %v437, 7
      %v440 = vshll.u32 %v323, 16
      %v442 = vor.u32 %v439, %v440
      %vm477 = vcmask 1040384
      %vm478 = vsmask.f32 256
      %vm479 = vmand %vm477, %vm478
      %v480 = vsel %vm479, 0, %v330
      %v481 = vsel %vm479, 0, %v337
      %v482 = vsel %vm479, 0, %v344
      %v483 = vsel %vm479, 0, %v351
      %v484 = vsel %vm479, 0, %v358
      %v485 = vsel %vm479, 0, %v365
      %v486 = vsel %vm479, 0, %v372
      %v487 = vsel %vm479, 0, %v379
      %v488 = vsel %vm479, 0, %v386
      %v489 = vsel %vm479, 0, %v393
      %v490 = vsel %vm479, 0, %v400
      %v491 = vsel %vm479, 0, %v407
      %v492 = vsel %vm479, 0, %v414
      %v493 = vsel %vm479, 0, %v421
      %v494 = vsel %vm479, 0, %v428
      %v495 = vsel %vm479, 0, %v435
      %v496 = vsel %vm479, 0, %v442
      %v497 = vsel %vm479, %v327, 0
      %v498 = vsel %vm479, %v334, 0
      %v499 = vsel %vm479, %v341, 0
      %v500 = vsel %vm479, %v348, 0
      %v501 = vsel %vm479, %v355, 0
      %v502 = vsel %vm479, %v362, 0
      %v503 = vsel %vm479, %v369, 0
      %v504 = vsel %vm479, %v376, 0
      %v505 = vsel %vm479, %v383, 0
      %v506 = vsel %vm479, %v390, 0
      %v507 = vsel %vm479, %v397, 0
      %v508 = vsel %vm479, %v404, 0
      %v509 = vsel %vm479, %v411, 0
      %v510 = vsel %vm479, %v418, 0
      %v511 = vsel %vm479, %v425, 0
      %v512 = vsel %vm479, %v432, 0
      %v513 = vsel %vm479, %v439, 0
      %vm514 = vsmask.f32 7424
      %v516 = vshrl.u32 %v480, 16
      %v518 = vshll.u32 %v480, 16
      %v520 = vrot.slane %v518, 1
      %v521 = vor.u32 %v516, %v520
      %v523 = vshll.u32 %v497, 16
      %v525 = vrot.slane %v523, 1
      %v526 = vsel %vm514, %v521, %v525
      %v528 = vshrl.u32 %v481, 16
      %v530 = vshll.u32 %v481, 16
      %v532 = vrot.slane %v530, 1
      %v533 = vor.u32 %v528, %v532
      %v535 = vshll.u32 %v498, 16
      %v537 = vrot.slane %v535, 1
      %v538 = vsel %vm514, %v533, %v537
      %v540 = vshrl.u32 %v482, 16
      %v542 = vshll.u32 %v482, 16
      %v544 = vrot.slane %v542, 1
      %v545 = vor.u32 %v540, %v544
      %v547 = vshll.u32 %v499, 16
      %v549 = vrot.slane %v547, 1
      %v550 = vsel %vm514, %v545, %v549
      %v552 = vshrl.u32 %v483, 16
      %v554 = vshll.u32 %v483, 16
      %v556 = vrot.slane %v554, 1
      %v557 = vor.u32 %v552, %v556
      %v559 = vshll.u32 %v500, 16
      %v561 = vrot.slane %v559, 1
      %v562 = vsel %vm514, %v557, %v561
      %v564 = vshrl.u32 %v484, 16
      %v566 = vshll.u32 %v484, 16
      %v568 = vrot.slane %v566, 1
      %v569 = vor.u32 %v564, %v568
      %v571 = vshll.u32 %v501, 16
      %v573 = vrot.slane %v571, 1
      %v574 = vsel %vm514, %v569, %v573
      %v576 = vshrl.u32 %v485, 16
      %v578 = vshll.u32 %v485, 16
      %v580 = vrot.slane %v578, 1
      %v581 = vor.u32 %v576, %v580
      %v583 = vshll.u32 %v502, 16
      %v585 = vrot.slane %v583, 1
      %v586 = vsel %vm514, %v581, %v585
      %v588 = vshrl.u32 %v486, 16
      %v590 = vshll.u32 %v486, 16
      %v592 = vrot.slane %v590, 1
      %v593 = vor.u32 %v588, %v592
      %v595 = vshll.u32 %v503, 16
      %v597 = vrot.slane %v595, 1
      %v598 = vsel %vm514, %v593, %v597
      %v600 = vshrl.u32 %v487, 16
      %v602 = vshll.u32 %v487, 16
      %v604 = vrot.slane %v602, 1
      %v605 = vor.u32 %v600, %v604
      %v607 = vshll.u32 %v504, 16
      %v609 = vrot.slane %v607, 1
      %v610 = vsel %vm514, %v605, %v609
      %v612 = vshrl.u32 %v488, 16
      %v614 = vshll.u32 %v488, 16
      %v616 = vrot.slane %v614, 1
      %v617 = vor.u32 %v612, %v616
      %v619 = vshll.u32 %v505, 16
      %v621 = vrot.slane %v619, 1
      %v622 = vsel %vm514, %v617, %v621
      %v624 = vshrl.u32 %v489, 16
      %v626 = vshll.u32 %v489, 16
      %v628 = vrot.slane %v626, 1
      %v629 = vor.u32 %v624, %v628
      %v631 = vshll.u32 %v506, 16
      %v633 = vrot.slane %v631, 1
      %v634 = vsel %vm514, %v629, %v633
      %v636 = vshrl.u32 %v490, 16
      %v638 = vshll.u32 %v490, 16
      %v640 = vrot.slane %v638, 1
      %v641 = vor.u32 %v636, %v640
      %v643 = vshll.u32 %v507, 16
      %v645 = vrot.slane %v643, 1
      %v646 = vsel %vm514, %v641, %v645
      %v648 = vshrl.u32 %v491, 16
      %v650 = vshll.u32 %v491, 16
      %v652 = vrot.slane %v650, 1
      %v653 = vor.u32 %v648, %v652
      %v655 = vshll.u32 %v508, 16
      %v657 = vrot.slane %v655, 1
      %v658 = vsel %vm514, %v653, %v657
      %v660 = vshrl.u32 %v492, 16
      %v662 = vshll.u32 %v492, 16
      %v664 = vrot.slane %v662, 1
      %v665 = vor.u32 %v660, %v664
      %v667 = vshll.u32 %v509, 16
      %v669 = vrot.slane %v667, 1
      %v670 = vsel %vm514, %v665, %v669
      %v672 = vshrl.u32 %v493, 16
      %v674 = vshll.u32 %v493, 16
      %v676 = vrot.slane %v674, 1
      %v677 = vor.u32 %v672, %v676
      %v679 = vshll.u32 %v510, 16
      %v681 = vrot.slane %v679, 1
      %v682 = vsel %vm514, %v677, %v681
      %v684 = vshrl.u32 %v494, 16
      %v686 = vshll.u32 %v494, 16
      %v688 = vrot.slane %v686, 1
      %v689 = vor.u32 %v684, %v688
      %v691 = vshll.u32 %v511, 16
      %v693 = vrot.slane %v691, 1
      %v694 = vsel %vm514, %v689, %v693
      %v696 = vshrl.u32 %v495, 16
      %v698 = vshll.u32 %v495, 16
      %v700 = vrot.slane %v698, 1
      %v701 = vor.u32 %v696, %v700
      %v703 = vshll.u32 %v512, 16
      %v705 = vrot.slane %v703, 1
      %v706 = vsel %vm514, %v701, %v705
      %vm739 = vcmask 1046528
      %v740 = vrot.slane %v480, 1
      %v741 = vrot.slane %v497, 1
      %v742 = vsel %vm739, %v740, %v741
      %v743 = vrot.slane %v481, 1
      %v744 = vrot.slane %v498, 1
      %v745 = vsel %vm739, %v743, %v744
      %v746 = vrot.slane %v482, 1
      %v747 = vrot.slane %v499, 1
      %v748 = vsel %vm739, %v746, %v747
      %v749 = vrot.slane %v483, 1
      %v750 = vrot.slane %v500, 1
      %v751 = vsel %vm739, %v749, %v750
      %v752 = vrot.slane %v484, 1
      %v753 = vrot.slane %v501, 1
      %v754 = vsel %vm739, %v752, %v753
      %v755 = vrot.slane %v485, 1
      %v756 = vrot.slane %v502, 1
      %v757 = vsel %vm739, %v755, %v756
      %v758 = vrot.slane %v486, 1
      %v759 = vrot.slane %v503, 1
      %v760 = vsel %vm739, %v758, %v759
      %v761 = vrot.slane %v487, 1
      %v762 = vrot.slane %v504, 1
      %v763 = vsel %vm739, %v761, %v762
      %v764 = vrot.slane %v488, 1
      %v765 = vrot.slane %v505, 1
      %v766 = vsel %vm739, %v764, %v765
      %v767 = vrot.slane %v489, 1
      %v768 = vrot.slane %v506, 1
      %v769 = vsel %vm739, %v767, %v768
      %v770 = vrot.slane %v490, 1
      %v771 = vrot.slane %v507, 1
      %v772 = vsel %vm739, %v770, %v771
      %v773 = vrot.slane %v491, 1
      %v774 = vrot.slane %v508, 1
      %v775 = vsel %vm739, %v773, %v774
      %v776 = vrot.slane %v492, 1
      %v777 = vrot.slane %v509, 1
      %v778 = vsel %vm739, %v776, %v777
      %v779 = vrot.slane %v493, 1
      %v780 = vrot.slane %v510, 1
      %v781 = vsel %vm739, %v779, %v780
      %v782 = vrot.slane %v494, 1
      %v783 = vrot.slane %v511, 1
      %v784 = vsel %vm739, %v782, %v783
      %v785 = vrot.slane %v495, 1
      %v786 = vrot.slane %v512, 1
      %v787 = vsel %vm739, %v785, %v786
      %v789 = vshrl.u32 %v496, 16
      %v791 = vshll.u32 %v496, 16
      %v793 = vrot.slane %v791, 1
      %v794 = vor.u32 %v789, %v793
      %v796 = vshll.u32 %v513, 16
      %v798 = vrot.slane %v796, 1
      %v799 = vsel %vm514, %v794, %v798
      %v802 = vrot.slane %v496, 1
      %v803 = vrot.slane %v513, 1
      %v804 = vsel %vm739, %v802, %v803
      %805 = vrot.lane.b32.xlu0 %v526, 4
      %v806 = vpop.permute.xlu0 %805
      %807 = vrot.lane.b32.xlu0 %v538, 4
      %v808 = vpop.permute.xlu0 %807
      %809 = vrot.lane.b32.xlu0 %v550, 4
      %v810 = vpop.permute.xlu0 %809
      %811 = vrot.lane.b32.xlu0 %v562, 4
      %v812 = vpop.permute.xlu0 %811
      %813 = vrot.lane.b32.xlu0 %v574, 4
      %v814 = vpop.permute.xlu0 %813
      %815 = vrot.lane.b32.xlu0 %v586, 4
      %v816 = vpop.permute.xlu0 %815
      %817 = vrot.lane.b32.xlu0 %v598, 4
      %v818 = vpop.permute.xlu0 %817
      %819 = vrot.lane.b32.xlu0 %v610, 4
      %v820 = vpop.permute.xlu0 %819
      %821 = vrot.lane.b32.xlu0 %v622, 4
      %v822 = vpop.permute.xlu0 %821
      %823 = vrot.lane.b32.xlu0 %v634, 4
      %v824 = vpop.permute.xlu0 %823
      %825 = vrot.lane.b32.xlu0 %v646, 4
      %v826 = vpop.permute.xlu0 %825
      %827 = vrot.lane.b32.xlu0 %v658, 4
      %v828 = vpop.permute.xlu0 %827
      %829 = vrot.lane.b32.xlu0 %v670, 4
      %v830 = vpop.permute.xlu0 %829
      %831 = vrot.lane.b32.xlu0 %v682, 4
      %v832 = vpop.permute.xlu0 %831
      %833 = vrot.lane.b32.xlu0 %v694, 4
      %v834 = vpop.permute.xlu0 %833
      %835 = vrot.lane.b32.xlu0 %v706, 4
      %v836 = vpop.permute.xlu0 %835
      %837 = vrot.lane.b32.xlu0 %v742, 8
      %v838 = vpop.permute.xlu0 %837
      %839 = vrot.lane.b32.xlu0 %v745, 8
      %v840 = vpop.permute.xlu0 %839
      %841 = vrot.lane.b32.xlu0 %v748, 8
      %v842 = vpop.permute.xlu0 %841
      %843 = vrot.lane.b32.xlu0 %v751, 8
      %v844 = vpop.permute.xlu0 %843
      %845 = vrot.lane.b32.xlu0 %v754, 8
      %v846 = vpop.permute.xlu0 %845
      %847 = vrot.lane.b32.xlu0 %v757, 8
      %v848 = vpop.permute.xlu0 %847
      %849 = vrot.lane.b32.xlu0 %v760, 8
      %v850 = vpop.permute.xlu0 %849
      %851 = vrot.lane.b32.xlu0 %v763, 8
      %v852 = vpop.permute.xlu0 %851
      %853 = vrot.lane.b32.xlu0 %v766, 8
      %v854 = vpop.permute.xlu0 %853
      %855 = vrot.lane.b32.xlu0 %v769, 8
      %v856 = vpop.permute.xlu0 %855
      %857 = vrot.lane.b32.xlu0 %v772, 8
      %v858 = vpop.permute.xlu0 %857
      %859 = vrot.lane.b32.xlu0 %v775, 8
      %v860 = vpop.permute.xlu0 %859
      %861 = vrot.lane.b32.xlu0 %v778, 8
      %v862 = vpop.permute.xlu0 %861
      %863 = vrot.lane.b32.xlu0 %v781, 8
      %v864 = vpop.permute.xlu0 %863
      %865 = vrot.lane.b32.xlu0 %v784, 8
      %v866 = vpop.permute.xlu0 %865
      %867 = vrot.lane.b32.xlu0 %v787, 8
      %v868 = vpop.permute.xlu0 %867
      %869 = vrot.lane.b32.xlu0 %v481, 12
      %v870 = vpop.permute.xlu0 %869
      %871 = vrot.lane.b32.xlu0 %v482, 12
      %v872 = vpop.permute.xlu0 %871
      %873 = vrot.lane.b32.xlu0 %v483, 12
      %v874 = vpop.permute.xlu0 %873
      %875 = vrot.lane.b32.xlu0 %v484, 12
      %v876 = vpop.permute.xlu0 %875
      %877 = vrot.lane.b32.xlu0 %v485, 12
      %v878 = vpop.permute.xlu0 %877
      %879 = vrot.lane.b32.xlu0 %v486, 12
      %v880 = vpop.permute.xlu0 %879
      %881 = vrot.lane.b32.xlu0 %v487, 12
      %v882 = vpop.permute.xlu0 %881
      %883 = vrot.lane.b32.xlu0 %v488, 12
      %v884 = vpop.permute.xlu0 %883
      %885 = vrot.lane.b32.xlu0 %v489, 12
      %v886 = vpop.permute.xlu0 %885
      %887 = vrot.lane.b32.xlu0 %v490, 12
      %v888 = vpop.permute.xlu0 %887
      %889 = vrot.lane.b32.xlu0 %v491, 12
      %v890 = vpop.permute.xlu0 %889
      %891 = vrot.lane.b32.xlu0 %v492, 12
      %v892 = vpop.permute.xlu0 %891
      %893 = vrot.lane.b32.xlu0 %v493, 12
      %v894 = vpop.permute.xlu0 %893
      %895 = vrot.lane.b32.xlu0 %v494, 12
      %v896 = vpop.permute.xlu0 %895
      %897 = vrot.lane.b32.xlu0 %v495, 12
      %v898 = vpop.permute.xlu0 %897
      %899 = vrot.lane.b32.xlu0 %v496, 12
      %v900 = vpop.permute.xlu0 %899
      %901 = vrot.lane.b32.xlu0 %v538, 16
      %v902 = vpop.permute.xlu0 %901
      %903 = vrot.lane.b32.xlu0 %v550, 16
      %v904 = vpop.permute.xlu0 %903
      %905 = vrot.lane.b32.xlu0 %v562, 16
      %v906 = vpop.permute.xlu0 %905
      %907 = vrot.lane.b32.xlu0 %v574, 16
      %v908 = vpop.permute.xlu0 %907
      %909 = vrot.lane.b32.xlu0 %v586, 16
      %v910 = vpop.permute.xlu0 %909
      %911 = vrot.lane.b32.xlu0 %v598, 16
      %v912 = vpop.permute.xlu0 %911
      %913 = vrot.lane.b32.xlu0 %v610, 16
      %v914 = vpop.permute.xlu0 %913
      %915 = vrot.lane.b32.xlu0 %v622, 16
      %v916 = vpop.permute.xlu0 %915
      %917 = vrot.lane.b32.xlu0 %v634, 16
      %v918 = vpop.permute.xlu0 %917
      %919 = vrot.lane.b32.xlu0 %v646, 16
      %v920 = vpop.permute.xlu0 %919
      %921 = vrot.lane.b32.xlu0 %v658, 16
      %v922 = vpop.permute.xlu0 %921
      %923 = vrot.lane.b32.xlu0 %v670, 16
      %v924 = vpop.permute.xlu0 %923
      %925 = vrot.lane.b32.xlu0 %v682, 16
      %v926 = vpop.permute.xlu0 %925
      %927 = vrot.lane.b32.xlu0 %v694, 16
      %v928 = vpop.permute.xlu0 %927
      %929 = vrot.lane.b32.xlu0 %v706, 16
      %v930 = vpop.permute.xlu0 %929
      %931 = vrot.lane.b32.xlu0 %v799, 16
      %v932 = vpop.permute.xlu0 %931
      %933 = vrot.lane.b32.xlu0 %v745, 20
      %v934 = vpop.permute.xlu0 %933
      %935 = vrot.lane.b32.xlu0 %v748, 20
      %v936 = vpop.permute.xlu0 %935
      %937 = vrot.lane.b32.xlu0 %v751, 20
      %v938 = vpop.permute.xlu0 %937
      %939 = vrot.lane.b32.xlu0 %v754, 20
      %v940 = vpop.permute.xlu0 %939
      %941 = vrot.lane.b32.xlu0 %v757, 20
      %v942 = vpop.permute.xlu0 %941
      %943 = vrot.lane.b32.xlu0 %v760, 20
      %v944 = vpop.permute.xlu0 %943
      %945 = vrot.lane.b32.xlu0 %v763, 20
      %v946 = vpop.permute.xlu0 %945
      %947 = vrot.lane.b32.xlu0 %v766, 20
      %v948 = vpop.permute.xlu0 %947
      %949 = vrot.lane.b32.xlu0 %v769, 20
      %v950 = vpop.permute.xlu0 %949
      %951 = vrot.lane.b32.xlu0 %v772, 20
      %v952 = vpop.permute.xlu0 %951
      %953 = vrot.lane.b32.xlu0 %v775, 20
      %v954 = vpop.permute.xlu0 %953
      %955 = vrot.lane.b32.xlu0 %v778, 20
      %v956 = vpop.permute.xlu0 %955
      %957 = vrot.lane.b32.xlu0 %v781, 20
      %v958 = vpop.permute.xlu0 %957
      %959 = vrot.lane.b32.xlu0 %v784, 20
      %v960 = vpop.permute.xlu0 %959
      %961 = vrot.lane.b32.xlu0 %v787, 20
      %v962 = vpop.permute.xlu0 %961
      %963 = vrot.lane.b32.xlu0 %v804, 20
      %v964 = vpop.permute.xlu0 %963
      %965 = vrot.lane.b32.xlu0 %v482, 24
      %v966 = vpop.permute.xlu0 %965
      %967 = vrot.lane.b32.xlu0 %v483, 24
      %v968 = vpop.permute.xlu0 %967
      %969 = vrot.lane.b32.xlu0 %v484, 24
      %v970 = vpop.permute.xlu0 %969
      %971 = vrot.lane.b32.xlu0 %v485, 24
      %v972 = vpop.permute.xlu0 %971
      %973 = vrot.lane.b32.xlu0 %v486, 24
      %v974 = vpop.permute.xlu0 %973
      %975 = vrot.lane.b32.xlu0 %v487, 24
      %v976 = vpop.permute.xlu0 %975
      %977 = vrot.lane.b32.xlu0 %v488, 24
      %v978 = vpop.permute.xlu0 %977
      %979 = vrot.lane.b32.xlu0 %v489, 24
      %v980 = vpop.permute.xlu0 %979
      %981 = vrot.lane.b32.xlu0 %v490, 24
      %v982 = vpop.permute.xlu0 %981
      %983 = vrot.lane.b32.xlu0 %v491, 24
      %v984 = vpop.permute.xlu0 %983
      %985 = vrot.lane.b32.xlu0 %v492, 24
      %v986 = vpop.permute.xlu0 %985
      %987 = vrot.lane.b32.xlu0 %v493, 24
      %v988 = vpop.permute.xlu0 %987
      %989 = vrot.lane.b32.xlu0 %v494, 24
      %v990 = vpop.permute.xlu0 %989
      %991 = vrot.lane.b32.xlu0 %v495, 24
      %v992 = vpop.permute.xlu0 %991
      %993 = vrot.lane.b32.xlu0 %v496, 24
      %v994 = vpop.permute.xlu0 %993
      %995 = vrot.lane.b32.xlu0 %v480, 24
      %v996 = vpop.permute.xlu0 %995
      %997 = vrot.lane.b32.xlu0 %v550, 28
      %v998 = vpop.permute.xlu0 %997
      %999 = vrot.lane.b32.xlu0 %v562, 28
      %v1000 = vpop.permute.xlu0 %999
      %1001 = vrot.lane.b32.xlu0 %v574, 28
      %v1002 = vpop.permute.xlu0 %1001
      %1003 = vrot.lane.b32.xlu0 %v586, 28
      %v1004 = vpop.permute.xlu0 %1003
      %1005 = vrot.lane.b32.xlu0 %v598, 28
      %v1006 = vpop.permute.xlu0 %1005
      %1007 = vrot.lane.b32.xlu0 %v610, 28
      %v1008 = vpop.permute.xlu0 %1007
      %1009 = vrot.lane.b32.xlu0 %v622, 28
      %v1010 = vpop.permute.xlu0 %1009
      %1011 = vrot.lane.b32.xlu0 %v634, 28
      %v1012 = vpop.permute.xlu0 %1011
      %1013 = vrot.lane.b32.xlu0 %v646, 28
      %v1014 = vpop.permute.xlu0 %1013
      %1015 = vrot.lane.b32.xlu0 %v658, 28
      %v1016 = vpop.permute.xlu0 %1015
      %1017 = vrot.lane.b32.xlu0 %v670, 28
      %v1018 = vpop.permute.xlu0 %1017
      %1019 = vrot.lane.b32.xlu0 %v682, 28
      %v1020 = vpop.permute.xlu0 %1019
      %1021 = vrot.lane.b32.xlu0 %v694, 28
      %v1022 = vpop.permute.xlu0 %1021
      %1023 = vrot.lane.b32.xlu0 %v706, 28
      %v1024 = vpop.permute.xlu0 %1023
      %1025 = vrot.lane.b32.xlu0 %v799, 28
      %v1026 = vpop.permute.xlu0 %1025
      %1027 = vrot.lane.b32.xlu0 %v526, 28
      %v1028 = vpop.permute.xlu0 %1027
      %1029 = vrot.lane.b32.xlu0 %v748, 32
      %v1030 = vpop.permute.xlu0 %1029
      %1031 = vrot.lane.b32.xlu0 %v751, 32
      %v1032 = vpop.permute.xlu0 %1031
      %1033 = vrot.lane.b32.xlu0 %v754, 32
      %v1034 = vpop.permute.xlu0 %1033
      %1035 = vrot.lane.b32.xlu0 %v757, 32
      %v1036 = vpop.permute.xlu0 %1035
      %1037 = vrot.lane.b32.xlu0 %v760, 32
      %v1038 = vpop.permute.xlu0 %1037
      %1039 = vrot.lane.b32.xlu0 %v763, 32
      %v1040 = vpop.permute.xlu0 %1039
      %1041 = vrot.lane.b32.xlu0 %v766, 32
      %v1042 = vpop.permute.xlu0 %1041
      %1043 = vrot.lane.b32.xlu0 %v769, 32
      %v1044 = vpop.permute.xlu0 %1043
      %1045 = vrot.lane.b32.xlu0 %v772, 32
      %v1046 = vpop.permute.xlu0 %1045
      %1047 = vrot.lane.b32.xlu0 %v775, 32
      %v1048 = vpop.permute.xlu0 %1047
      %1049 = vrot.lane.b32.xlu0 %v778, 32
      %v1050 = vpop.permute.xlu0 %1049
      %1051 = vrot.lane.b32.xlu0 %v781, 32
      %v1052 = vpop.permute.xlu0 %1051
      %1053 = vrot.lane.b32.xlu0 %v784, 32
      %v1054 = vpop.permute.xlu0 %1053
      %1055 = vrot.lane.b32.xlu0 %v787, 32
      %v1056 = vpop.permute.xlu0 %1055
      %1057 = vrot.lane.b32.xlu0 %v804, 32
      %v1058 = vpop.permute.xlu0 %1057
      %1059 = vrot.lane.b32.xlu0 %v742, 32
      %v1060 = vpop.permute.xlu0 %1059
      %vm1061 = vcmask 31744
      %v1063 = vsel %vm1061, %v480, %v806
      %v1065 = vsel %vm1061, %v481, %v808
      %v1067 = vsel %vm1061, %v482, %v810
      %v1069 = vsel %vm1061, %v483, %v812
      %v1071 = vsel %vm1061, %v484, %v814
      %v1073 = vsel %vm1061, %v485, %v816
      %v1075 = vsel %vm1061, %v486, %v818
      %v1077 = vsel %vm1061, %v487, %v820
      %v1079 = vsel %vm1061, %v488, %v822
      %v1081 = vsel %vm1061, %v489, %v824
      %v1083 = vsel %vm1061, %v490, %v826
      %v1085 = vsel %vm1061, %v491, %v828
      %v1087 = vsel %vm1061, %v492, %v830
      %v1089 = vsel %vm1061, %v493, %v832
      %v1091 = vsel %vm1061, %v494, %v834
      %v1093 = vsel %vm1061, %v495, %v836
      %vm1094 = vcmask 64512
      %v1096 = vsel %vm1094, %v1063, %v838
      %v1098 = vsel %vm1094, %v1065, %v840
      %v1100 = vsel %vm1094, %v1067, %v842
      %v1102 = vsel %vm1094, %v1069, %v844
      %v1104 = vsel %vm1094, %v1071, %v846
      %v1106 = vsel %vm1094, %v1073, %v848
      %v1108 = vsel %vm1094, %v1075, %v850
      %v1110 = vsel %vm1094, %v1077, %v852
      %v1112 = vsel %vm1094, %v1079, %v854
      %v1114 = vsel %vm1094, %v1081, %v856
      %v1116 = vsel %vm1094, %v1083, %v858
      %v1118 = vsel %vm1094, %v1085, %v860
      %v1120 = vsel %vm1094, %v1087, %v862
      %v1122 = vsel %vm1094, %v1089, %v864
      %v1124 = vsel %vm1094, %v1091, %v866
      %v1126 = vsel %vm1094, %v1093, %v868
      %vm1127 = vcmask 97280
      %v1129 = vsel %vm1127, %v1096, %v870
      %v1131 = vsel %vm1127, %v1098, %v872
      %v1133 = vsel %vm1127, %v1100, %v874
      %v1135 = vsel %vm1127, %v1102, %v876
      %v1137 = vsel %vm1127, %v1104, %v878
      %v1139 = vsel %vm1127, %v1106, %v880
      %v1141 = vsel %vm1127, %v1108, %v882
      %v1143 = vsel %vm1127, %v1110, %v884
      %v1145 = vsel %vm1127, %v1112, %v886
      %v1147 = vsel %vm1127, %v1114, %v888
      %v1149 = vsel %vm1127, %v1116, %v890
      %v1151 = vsel %vm1127, %v1118, %v892
      %v1153 = vsel %vm1127, %v1120, %v894
      %v1155 = vsel %vm1127, %v1122, %v896
      %v1157 = vsel %vm1127, %v1124, %v898
      %v1159 = vsel %vm1127, %v1126, %v900
      %vm1160 = vcmask 130048
      %v1162 = vsel %vm1160, %v1129, %v902
      %v1164 = vsel %vm1160, %v1131, %v904
      %v1166 = vsel %vm1160, %v1133, %v906
      %v1168 = vsel %vm1160, %v1135, %v908
      %v1170 = vsel %vm1160, %v1137, %v910
      %v1172 = vsel %vm1160, %v1139, %v912
      %v1174 = vsel %vm1160, %v1141, %v914
      %v1176 = vsel %vm1160, %v1143, %v916
      %v1178 = vsel %vm1160, %v1145, %v918
      %v1180 = vsel %vm1160, %v1147, %v920
      %v1182 = vsel %vm1160, %v1149, %v922
      %v1184 = vsel %vm1160, %v1151, %v924
      %v1186 = vsel %vm1160, %v1153, %v926
      %v1188 = vsel %vm1160, %v1155, %v928
      %v1190 = vsel %vm1160, %v1157, %v930
      %v1192 = vsel %vm1160, %v1159, %v932
      %vm1193 = vcmask 162816
      %v1195 = vsel %vm1193, %v1162, %v934
      %v1197 = vsel %vm1193, %v1164, %v936
      %v1199 = vsel %vm1193, %v1166, %v938
      %v1201 = vsel %vm1193, %v1168, %v940
      %v1203 = vsel %vm1193, %v1170, %v942
      %v1205 = vsel %vm1193, %v1172, %v944
      %v1207 = vsel %vm1193, %v1174, %v946
      %v1209 = vsel %vm1193, %v1176, %v948
      %v1211 = vsel %vm1193, %v1178, %v950
      %v1213 = vsel %vm1193, %v1180, %v952
      %v1215 = vsel %vm1193, %v1182, %v954
      %v1217 = vsel %vm1193, %v1184, %v956
      %v1219 = vsel %vm1193, %v1186, %v958
      %v1221 = vsel %vm1193, %v1188, %v960
      %v1223 = vsel %vm1193, %v1190, %v962
      %v1225 = vsel %vm1193, %v1192, %v964
      %vm1226 = vcmask 195584
      %v1228 = vsel %vm1226, %v1195, %v966
      %v1230 = vsel %vm1226, %v1197, %v968
      %v1232 = vsel %vm1226, %v1199, %v970
      %v1234 = vsel %vm1226, %v1201, %v972
      %v1236 = vsel %vm1226, %v1203, %v974
      %v1238 = vsel %vm1226, %v1205, %v976
      %v1240 = vsel %vm1226, %v1207, %v978
      %v1242 = vsel %vm1226, %v1209, %v980
      %v1244 = vsel %vm1226, %v1211, %v982
      %v1246 = vsel %vm1226, %v1213, %v984
      %v1248 = vsel %vm1226, %v1215, %v986
      %v1250 = vsel %vm1226, %v1217, %v988
      %v1252 = vsel %vm1226, %v1219, %v990
      %v1254 = vsel %vm1226, %v1221, %v992
      %v1256 = vsel %vm1226, %v1223, %v994
      %v1258 = vsel %vm1226, %v1225, %v996
      %vm1259 = vcmask 228352
      %v1261 = vsel %vm1259, %v1228, %v998
      %v1263 = vsel %vm1259, %v1230, %v1000
      %v1265 = vsel %vm1259, %v1232, %v1002
      %v1267 = vsel %vm1259, %v1234, %v1004
      %v1269 = vsel %vm1259, %v1236, %v1006
      %v1271 = vsel %vm1259, %v1238, %v1008
      %v1273 = vsel %vm1259, %v1240, %v1010
      %v1275 = vsel %vm1259, %v1242, %v1012
      %v1277 = vsel %vm1259, %v1244, %v1014
      %v1279 = vsel %vm1259, %v1246, %v1016
      %v1281 = vsel %vm1259, %v1248, %v1018
      %v1283 = vsel %vm1259, %v1250, %v1020
      %v1285 = vsel %vm1259, %v1252, %v1022
      %v1287 = vsel %vm1259, %v1254, %v1024
      %v1289 = vsel %vm1259, %v1256, %v1026
      %v1291 = vsel %vm1259, %v1258, %v1028
      %vm1292 = vcmask 261120
      %v1294 = vsel %vm1292, %v1261, %v1030
      %v1296 = vsel %vm1292, %v1263, %v1032
      %v1298 = vsel %vm1292, %v1265, %v1034
      %v1300 = vsel %vm1292, %v1267, %v1036
      %v1302 = vsel %vm1292, %v1269, %v1038
      %v1304 = vsel %vm1292, %v1271, %v1040
      %v1306 = vsel %vm1292, %v1273, %v1042
      %v1308 = vsel %vm1292, %v1275, %v1044
      %v1310 = vsel %vm1292, %v1277, %v1046
      %v1312 = vsel %vm1292, %v1279, %v1048
      %v1314 = vsel %vm1292, %v1281, %v1050
      %v1316 = vsel %vm1292, %v1283, %v1052
      %v1318 = vsel %vm1292, %v1285, %v1054
      %v1320 = vsel %vm1292, %v1287, %v1056
      %v1322 = vsel %vm1292, %v1289, %v1058
      %v1324 = vsel %vm1292, %v1291, %v1060
      %v1325 = vld [vmem:[%s1] sm:$0xf]
      %v1326 = vld [vmem:[%s1 + $0x4] sm:$0xf]
      %v1327 = vld [vmem:[%s1 + $0x8] sm:$0xf]
      %v1328 = vld [vmem:[%s1 + $0xc] sm:$0xf]
      %v1329 = vld [vmem:[%s1 + $0x10] sm:$0x3]
      %v1330 = vld [vmem:[%s2] sm:$0x1]
      %v1332 = vlaneseq
      %v1333 = vshrl.u32 %v1332, 7
      %v1334 = vsub.s32 0, %v1333
      %v1335 = vrot.slane %v1330, %v1334
      %v1342 = vunpack.c.l.b16 %v1325
      %v1343 = vunpack.c.l.b16 %v1326
      %v1344 = vunpack.c.l.b16 %v1327
      %v1345 = vunpack.c.l.b16 %v1328
      %v1346 = vunpack.c.l.b16 %v1329
      %v1347 = vpack.c.b16 %v1343, %v1342
      %v1348 = vpack.c.b16 %v1345, %v1344
      %v1349 = vpack.c.b16 %v1346, %v1346
      %vm1352 = vcmask 293888
      %v1353 = vsel %vm1352, %v1294, 0
      %v1355 = vsel %vm1352, %v1296, 0
      %v1357 = vsel %vm1352, %v1298, 0
      %v1359 = vsel %vm1352, %v1300, 0
      %v1361 = vsel %vm1352, %v1302, 0
      %v1363 = vsel %vm1352, %v1304, 0
      %v1365 = vsel %vm1352, %v1306, 0
      %v1367 = vsel %vm1352, %v1308, 0
      %v1369 = vsel %vm1352, %v1310, 0
      %v1371 = vsel %vm1352, %v1312, 0
      %v1373 = vsel %vm1352, %v1314, 0
      %v1375 = vsel %vm1352, %v1316, 0
      %v1377 = vsel %vm1352, %v1318, 0
      %v1379 = vsel %vm1352, %v1320, 0
      %v1381 = vsel %vm1352, %v1322, 0
      %v1383 = vsel %vm1352, %v1324, 0
      %vm1385 = vcmask 1041408
      %v1387 = vsel %vm1385, %v1349, 0
      %1389 = vmatprep.subr.bf16.mxu0 0
      %1390 = vmatpush1.bf16.msra.mxu0 %v1347
      %1391 = vmatprep.subr.bf16.mxu0 0
      %1392 = vmatpush1.bf16.msra.mxu0 %v1348
      %1393 = vmatprep.subr.bf16.mxu0 0
      %1394 = vmatpush1.bf16.msra.mxu0 %v1387
      %1395 = vmatprep.subr.bf16.mxu0 0
      %1396 = vmatpush1.bf16.msra.mxu0 0
      %1397 = vmatprep.subr.bf16.mxu0 0
      %1398 = vmatpush1.bf16.msra.mxu0 0
      %1399 = vmatprep.subr.bf16.mxu0 0
      %1400 = vmatpush1.bf16.msra.mxu0 0
      %1401 = vmatprep.subr.bf16.mxu0 0
      %1402 = vmatpush1.bf16.msra.mxu0 0
      %1403 = vmatprep.subr.bf16.mxu0 0
      %1404 = vmatpush1.bf16.msra.mxu0 0
      %1405 = vmatprep.subr.bf16.mxu0 0
      %1406 = vmatpush1.bf16.msra.mxu0 0
      %1407 = vmatprep.subr.bf16.mxu0 0
      %1408 = vmatpush1.bf16.msra.mxu0 0
      %1409 = vmatprep.subr.bf16.mxu0 0
      %1410 = vmatpush1.bf16.msra.mxu0 0
      %1411 = vmatprep.subr.bf16.mxu0 0
      %1412 = vmatpush1.bf16.msra.mxu0 0
      %1413 = vmatprep.subr.bf16.mxu0 0
      %1414 = vmatpush1.bf16.msra.mxu0 0
      %1415 = vmatprep.subr.bf16.mxu0 0
      %1416 = vmatpush1.bf16.msra.mxu0 0
      %1417 = vmatprep.subr.bf16.mxu0 0
      %1418 = vmatpush1.bf16.msra.mxu0 0
      %1419 = vmatprep.subr.bf16.mxu0 0
      %1420 = vmatpush1.bf16.msra.mxu0 0
      %1421 = vmatprep.mubr.bf16.mxu0 0
      %1422 = vmatmul.mubr.bf16.gmra.mrb[0].mxu0 %v1353
      %v1423 = vpop.f32.mrb[0].mxu0
      %v1424 = vadd.f32 %v1335, %v1423
      %v1425 = vpop.f32.mrb[0].mxu0
      %v1426 = vpop.f32.mrb[0].mxu0
      %v1427 = vadd.f32 %v1335, %v1426
      %v1428 = vpop.f32.mrb[0].mxu0
      %1429 = vmatprep.mubr.bf16.mxu0 0
      %1430 = vmatmul.mubr.bf16.gmra.mrb[0].mxu0 %v1355
      %v1431 = vpop.f32.mrb[0].mxu0
      %v1432 = vadd.f32 %v1335, %v1431
      %v1433 = vpop.f32.mrb[0].mxu0
      %v1434 = vpop.f32.mrb[0].mxu0
      %v1435 = vadd.f32 %v1335, %v1434
      %v1436 = vpop.f32.mrb[0].mxu0
      %1437 = vmatprep.mubr.bf16.mxu0 0
      %1438 = vmatmul.mubr.bf16.gmra.mrb[0].mxu0 %v1357
      %v1439 = vpop.f32.mrb[0].mxu0
      %v1440 = vadd.f32 %v1335, %v1439
      %v1441 = vpop.f32.mrb[0].mxu0
      %v1442 = vpop.f32.mrb[0].mxu0
      %v1443 = vadd.f32 %v1335, %v1442
      %v1444 = vpop.f32.mrb[0].mxu0
      %1445 = vmatprep.mubr.bf16.mxu0 0
      %1446 = vmatmul.mubr.bf16.gmra.mrb[0].mxu0 %v1359
      %v1447 = vpop.f32.mrb[0].mxu0
      %v1448 = vadd.f32 %v1335, %v1447
      %v1449 = vpop.f32.mrb[0].mxu0
      %v1450 = vpop.f32.mrb[0].mxu0
      %v1451 = vadd.f32 %v1335, %v1450
      %v1452 = vpop.f32.mrb[0].mxu0
      %1453 = vmatprep.mubr.bf16.mxu0 0
      %1454 = vmatmul.mubr.bf16.gmra.mrb[0].mxu0 %v1361
      %v1455 = vpop.f32.mrb[0].mxu0
      %v1456 = vadd.f32 %v1335, %v1455
      %v1457 = vpop.f32.mrb[0].mxu0
      %v1458 = vpop.f32.mrb[0].mxu0
      %v1459 = vadd.f32 %v1335, %v1458
      %v1460 = vpop.f32.mrb[0].mxu0
      %1461 = vmatprep.mubr.bf16.mxu0 0
      %1462 = vmatmul.mubr.bf16.gmra.mrb[0].mxu0 %v1363
      %v1463 = vpop.f32.mrb[0].mxu0
      %v1464 = vadd.f32 %v1335, %v1463
      %v1465 = vpop.f32.mrb[0].mxu0
      %v1466 = vpop.f32.mrb[0].mxu0
      %v1467 = vadd.f32 %v1335, %v1466
      %v1468 = vpop.f32.mrb[0].mxu0
      %1469 = vmatprep.mubr.bf16.mxu0 0
      %1470 = vmatmul.mubr.bf16.gmra.mrb[0].mxu0 %v1365
      %v1471 = vpop.f32.mrb[0].mxu0
      %v1472 = vadd.f32 %v1335, %v1471
      %v1473 = vpop.f32.mrb[0].mxu0
      %v1474 = vpop.f32.mrb[0].mxu0
      %v1475 = vadd.f32 %v1335, %v1474
      %v1476 = vpop.f32.mrb[0].mxu0
      %1477 = vmatprep.mubr.bf16.mxu0 0
      %1478 = vmatmul.mubr.bf16.gmra.mrb[0].mxu0 %v1367
      %v1479 = vpop.f32.mrb[0].mxu0
      %v1480 = vadd.f32 %v1335, %v1479
      %v1481 = vpop.f32.mrb[0].mxu0
      %v1482 = vpop.f32.mrb[0].mxu0
      %v1483 = vadd.f32 %v1335, %v1482
      %v1484 = vpop.f32.mrb[0].mxu0
      %1485 = vmatprep.mubr.bf16.mxu0 0
      %1486 = vmatmul.mubr.bf16.gmra.mrb[0].mxu0 %v1369
      %v1487 = vpop.f32.mrb[0].mxu0
      %v1488 = vadd.f32 %v1335, %v1487
      %v1489 = vpop.f32.mrb[0].mxu0
      %v1490 = vpop.f32.mrb[0].mxu0
      %v1491 = vadd.f32 %v1335, %v1490
      %v1492 = vpop.f32.mrb[0].mxu0
      %1493 = vmatprep.mubr.bf16.mxu0 0
      %1494 = vmatmul.mubr.bf16.gmra.mrb[0].mxu0 %v1371
      %v1495 = vpop.f32.mrb[0].mxu0
      %v1496 = vadd.f32 %v1335, %v1495
      %v1497 = vpop.f32.mrb[0].mxu0
      %v1498 = vpop.f32.mrb[0].mxu0
      %v1499 = vadd.f32 %v1335, %v1498
      %v1500 = vpop.f32.mrb[0].mxu0
      %1501 = vmatprep.mubr.bf16.mxu0 0
      %1502 = vmatmul.mubr.bf16.gmra.mrb[0].mxu0 %v1373
      %v1503 = vpop.f32.mrb[0].mxu0
      %v1504 = vadd.f32 %v1335, %v1503
      %v1505 = vpop.f32.mrb[0].mxu0
      %v1506 = vpop.f32.mrb[0].mxu0
      %v1507 = vadd.f32 %v1335, %v1506
      %v1508 = vpop.f32.mrb[0].mxu0
      %1509 = vmatprep.mubr.bf16.mxu0 0
      %1510 = vmatmul.mubr.bf16.gmra.mrb[0].mxu0 %v1375
      %v1511 = vpop.f32.mrb[0].mxu0
      %v1512 = vadd.f32 %v1335, %v1511
      %v1513 = vpop.f32.mrb[0].mxu0
      %v1514 = vpop.f32.mrb[0].mxu0
      %v1515 = vadd.f32 %v1335, %v1514
      %v1516 = vpop.f32.mrb[0].mxu0
      %1517 = vmatprep.mubr.bf16.mxu0 0
      %1518 = vmatmul.mubr.bf16.gmra.mrb[0].mxu0 %v1377
      %v1519 = vpop.f32.mrb[0].mxu0
      %v1520 = vadd.f32 %v1335, %v1519
      %v1521 = vpop.f32.mrb[0].mxu0
      %v1522 = vpop.f32.mrb[0].mxu0
      %v1523 = vadd.f32 %v1335, %v1522
      %v1524 = vpop.f32.mrb[0].mxu0
      %1525 = vmatprep.mubr.bf16.mxu0 0
      %1526 = vmatmul.mubr.bf16.gmra.mrb[0].mxu0 %v1379
      %v1527 = vpop.f32.mrb[0].mxu0
      %v1528 = vadd.f32 %v1335, %v1527
      %v1529 = vpop.f32.mrb[0].mxu0
      %v1530 = vpop.f32.mrb[0].mxu0
      %v1531 = vadd.f32 %v1335, %v1530
      %v1532 = vpop.f32.mrb[0].mxu0
      %1533 = vmatprep.mubr.bf16.mxu0 0
      %1534 = vmatmul.mubr.bf16.gmra.mrb[0].mxu0 %v1381
      %v1535 = vpop.f32.mrb[0].mxu0
      %v1536 = vadd.f32 %v1335, %v1535
      %v1537 = vpop.f32.mrb[0].mxu0
      %v1538 = vpop.f32.mrb[0].mxu0
      %v1539 = vadd.f32 %v1335, %v1538
      %v1540 = vpop.f32.mrb[0].mxu0
      %1541 = vmatprep.mubr.bf16.mxu0 0
      %1542 = vmatmul.mubr.bf16.gmra.mrb[0].mxu0 %v1383
      %v1543 = vpop.f32.mrb[0].mxu0
      %v1544 = vadd.f32 %v1335, %v1543
      %v1545 = vpop.f32.mrb[0].mxu0
      %v1546 = vpop.f32.mrb[0].mxu0
      %v1547 = vadd.f32 %v1335, %v1546
      %v1548 = vpop.f32.mrb[0].mxu0
      %1549 = vdwg.mxu0
      %v1550 = vmax.f32 %v1424, 0.0
      %v1551 = vmax.f32 %v1427, 0.0
      %v1552 = vmax.f32 %v1432, 0.0
      %v1553 = vmax.f32 %v1435, 0.0
      %v1554 = vmax.f32 %v1440, 0.0
      %v1555 = vmax.f32 %v1443, 0.0
      %v1556 = vmax.f32 %v1448, 0.0
      %v1557 = vmax.f32 %v1451, 0.0
      %v1558 = vmax.f32 %v1456, 0.0
      %v1559 = vmax.f32 %v1459, 0.0
      %v1560 = vmax.f32 %v1464, 0.0
      %v1561 = vmax.f32 %v1467, 0.0
      %v1562 = vmax.f32 %v1472, 0.0
      %v1563 = vmax.f32 %v1475, 0.0
      %v1564 = vmax.f32 %v1480, 0.0
      %v1565 = vmax.f32 %v1483, 0.0
      %v1566 = vmax.f32 %v1488, 0.0
      %v1567 = vmax.f32 %v1491, 0.0
      %v1568 = vmax.f32 %v1496, 0.0
      %v1569 = vmax.f32 %v1499, 0.0
      %v1570 = vmax.f32 %v1504, 0.0
      %v1571 = vmax.f32 %v1507, 0.0
      %v1572 = vmax.f32 %v1512, 0.0
      %v1573 = vmax.f32 %v1515, 0.0
      %v1574 = vmax.f32 %v1520, 0.0
      %v1575 = vmax.f32 %v1523, 0.0
      %v1576 = vmax.f32 %v1528, 0.0
      %v1577 = vmax.f32 %v1531, 0.0
      %v1578 = vmax.f32 %v1536, 0.0
      %v1579 = vmax.f32 %v1539, 0.0
      %v1580 = vmax.f32 %v1544, 0.0
      %v1581 = vmax.f32 %v1547, 0.0
      %1582 = vst.msk [vmem:[%s205] sm:$0xff] %vm1061, %v1550
      %1583 = vst.msk [vmem:[%s205 + $0x8] sm:$0xff] %vm1061, %v1551
      %1584 = vst.msk [vmem:[%s205 + $0x10] sm:$0xff] %vm1061, %v1552
      %1585 = vst.msk [vmem:[%s205 + $0x18] sm:$0xff] %vm1061, %v1553
      %1586 = vst.msk [vmem:[%s205 + $0x20] sm:$0xff] %vm1061, %v1554
      %1587 = vst.msk [vmem:[%s205 + $0x28] sm:$0xff] %vm1061, %v1555
      %1588 = vst.msk [vmem:[%s205 + $0x30] sm:$0xff] %vm1061, %v1556
      %1589 = vst.msk [vmem:[%s205 + $0x38] sm:$0xff] %vm1061, %v1557
      %1590 = vst.msk [vmem:[%s205 + $0x40] sm:$0xff] %vm1061, %v1558
      %1591 = vst.msk [vmem:[%s205 + $0x48] sm:$0xff] %vm1061, %v1559
      %1592 = vst.msk [vmem:[%s205 + $0x50] sm:$0xff] %vm1061, %v1560
      %1593 = vst.msk [vmem:[%s205 + $0x58] sm:$0xff] %vm1061, %v1561
      %1594 = vst.msk [vmem:[%s205 + $0x60] sm:$0xff] %vm1061, %v1562
      %1595 = vst.msk [vmem:[%s205 + $0x68] sm:$0xff] %vm1061, %v1563
      %1596 = vst.msk [vmem:[%s205 + $0x70] sm:$0xff] %vm1061, %v1564
      %1597 = vst.msk [vmem:[%s205 + $0x78] sm:$0xff] %vm1061, %v1565
      %1598 = vst.msk [vmem:[%s205 + $0x80] sm:$0xff] %vm1061, %v1566
      %1599 = vst.msk [vmem:[%s205 + $0x88] sm:$0xff] %vm1061, %v1567
      %1600 = vst.msk [vmem:[%s205 + $0x90] sm:$0xff] %vm1061, %v1568
      %1601 = vst.msk [vmem:[%s205 + $0x98] sm:$0xff] %vm1061, %v1569
      %1602 = vst.msk [vmem:[%s205 + $0xa0] sm:$0xff] %vm1061, %v1570
      %1603 = vst.msk [vmem:[%s205 + $0xa8] sm:$0xff] %vm1061, %v1571
      %1604 = vst.msk [vmem:[%s205 + $0xb0] sm:$0xff] %vm1061, %v1572
      %1605 = vst.msk [vmem:[%s205 + $0xb8] sm:$0xff] %vm1061, %v1573
      %1606 = vst.msk [vmem:[%s205 + $0xc0] sm:$0xff] %vm1061, %v1574
      %1607 = vst.msk [vmem:[%s205 + $0xc8] sm:$0xff] %vm1061, %v1575
      %1608 = vst.msk [vmem:[%s205 + $0xd0] sm:$0xff] %vm1061, %v1576
      %1609 = vst.msk [vmem:[%s205 + $0xd8] sm:$0xff] %vm1061, %v1577
      %1610 = vst.msk [vmem:[%s205 + $0xe0] sm:$0xff] %vm1061, %v1578
      %1611 = vst.msk [vmem:[%s205 + $0xe8] sm:$0xff] %vm1061, %v1579
      %1612 = vst.msk [vmem:[%s205 + $0xf0] sm:$0xff] %vm1061, %v1580
      %1613 = vst.msk [vmem:[%s205 + $0xf8] sm:$0xff] %vm1061, %v1581
      %vm1614 = vcmp.ge.f32.partialorder %v1424, 0.0
      %vm1615 = vcmp.ge.f32.partialorder %v1427, 0.0
      %vm1616 = vcmp.ge.f32.partialorder %v1432, 0.0
      %vm1617 = vcmp.ge.f32.partialorder %v1435, 0.0
      %vm1618 = vcmp.ge.f32.partialorder %v1440, 0.0
      %vm1619 = vcmp.ge.f32.partialorder %v1443, 0.0
      %vm1620 = vcmp.ge.f32.partialorder %v1448, 0.0
      %vm1621 = vcmp.ge.f32.partialorder %v1451, 0.0
      %vm1622 = vcmp.ge.f32.partialorder %v1456, 0.0
      %vm1623 = vcmp.ge.f32.partialorder %v1459, 0.0
      %vm1624 = vcmp.ge.f32.partialorder %v1464, 0.0
      %vm1625 = vcmp.ge.f32.partialorder %v1467, 0.0
      %vm1626 = vcmp.ge.f32.partialorder %v1472, 0.0
      %vm1627 = vcmp.ge.f32.partialorder %v1475, 0.0
      %vm1628 = vcmp.ge.f32.partialorder %v1480, 0.0
      %vm1629 = vcmp.ge.f32.partialorder %v1483, 0.0
      %vm1630 = vcmp.ge.f32.partialorder %v1488, 0.0
      %vm1631 = vcmp.ge.f32.partialorder %v1491, 0.0
      %vm1632 = vcmp.ge.f32.partialorder %v1496, 0.0
      %vm1633 = vcmp.ge.f32.partialorder %v1499, 0.0
      %vm1634 = vcmp.ge.f32.partialorder %v1504, 0.0
      %vm1635 = vcmp.ge.f32.partialorder %v1507, 0.0
      %vm1636 = vcmp.ge.f32.partialorder %v1512, 0.0
      %vm1637 = vcmp.ge.f32.partialorder %v1515, 0.0
      %vm1638 = vcmp.ge.f32.partialorder %v1520, 0.0
      %vm1639 = vcmp.ge.f32.partialorder %v1523, 0.0
      %vm1640 = vcmp.ge.f32.partialorder %v1528, 0.0
      %vm1641 = vcmp.ge.f32.partialorder %v1531, 0.0
      %vm1642 = vcmp.ge.f32.partialorder %v1536, 0.0
      %vm1643 = vcmp.ge.f32.partialorder %v1539, 0.0
      %vm1644 = vcmp.ge.f32.partialorder %v1544, 0.0
      %vm1645 = vcmp.ge.f32.partialorder %v1547, 0.0
      %v1646 = vmul.f32 %v1424, 0.1
      %v1647 = vmul.f32 %v1427, 0.1
      %v1648 = vmul.f32 %v1432, 0.1
      %v1649 = vmul.f32 %v1435, 0.1
      %v1650 = vmul.f32 %v1440, 0.1
      %v1651 = vmul.f32 %v1443, 0.1
      %v1652 = vmul.f32 %v1448, 0.1
      %v1653 = vmul.f32 %v1451, 0.1
      %v1654 = vmul.f32 %v1456, 0.1
      %v1655 = vmul.f32 %v1459, 0.1
      %v1656 = vmul.f32 %v1464, 0.1
      %v1657 = vmul.f32 %v1467, 0.1
      %v1658 = vmul.f32 %v1472, 0.1
      %v1659 = vmul.f32 %v1475, 0.1
      %v1660 = vmul.f32 %v1480, 0.1
      %v1661 = vmul.f32 %v1483, 0.1
      %v1662 = vmul.f32 %v1488, 0.1
      %v1663 = vmul.f32 %v1491, 0.1
      %v1664 = vmul.f32 %v1496, 0.1
      %v1665 = vmul.f32 %v1499, 0.1
      %v1666 = vmul.f32 %v1504, 0.1
      %v1667 = vmul.f32 %v1507, 0.1
      %v1668 = vmul.f32 %v1512, 0.1
      %v1669 = vmul.f32 %v1515, 0.1
      %v1670 = vmul.f32 %v1520, 0.1
      %v1671 = vmul.f32 %v1523, 0.1
      %v1672 = vmul.f32 %v1528, 0.1
      %v1673 = vmul.f32 %v1531, 0.1
      %v1674 = vmul.f32 %v1536, 0.1
      %v1675 = vmul.f32 %v1539, 0.1
      %v1676 = vmul.f32 %v1544, 0.1
      %v1677 = vmul.f32 %v1547, 0.1
      %v1678 = vsel %vm1614, %v1424, %v1646
      %v1679 = vsel %vm1615, %v1427, %v1647
      %v1680 = vsel %vm1616, %v1432, %v1648
      %v1681 = vsel %vm1617, %v1435, %v1649
      %v1682 = vsel %vm1618, %v1440, %v1650
      %v1683 = vsel %vm1619, %v1443, %v1651
      %v1684 = vsel %vm1620, %v1448, %v1652
      %v1685 = vsel %vm1621, %v1451, %v1653
      %v1686 = vsel %vm1622, %v1456, %v1654
      %v1687 = vsel %vm1623, %v1459, %v1655
      %v1688 = vsel %vm1624, %v1464, %v1656
      %v1689 = vsel %vm1625, %v1467, %v1657
      %v1690 = vsel %vm1626, %v1472, %v1658
      %v1691 = vsel %vm1627, %v1475, %v1659
      %v1692 = vsel %vm1628, %v1480, %v1660
      %v1693 = vsel %vm1629, %v1483, %v1661
      %v1694 = vsel %vm1630, %v1488, %v1662
      %v1695 = vsel %vm1631, %v1491, %v1663
      %v1696 = vsel %vm1632, %v1496, %v1664
      %v1697 = vsel %vm1633, %v1499, %v1665
      %v1698 = vsel %vm1634, %v1504, %v1666
      %v1699 = vsel %vm1635, %v1507, %v1667
      %v1700 = vsel %vm1636, %v1512, %v1668
      %v1701 = vsel %vm1637, %v1515, %v1669
      %v1702 = vsel %vm1638, %v1520, %v1670
      %v1703 = vsel %vm1639, %v1523, %v1671
      %v1704 = vsel %vm1640, %v1528, %v1672
      %v1705 = vsel %vm1641, %v1531, %v1673
      %v1706 = vsel %vm1642, %v1536, %v1674
      %v1707 = vsel %vm1643, %v1539, %v1675
      %v1708 = vsel %vm1644, %v1544, %v1676
      %v1709 = vsel %vm1645, %v1547, %v1677
      %v1710 = vpack.c.bf16 %v1679, %v1678
      %v1711 = vpack.c.bf16 %v1681, %v1680
      %v1712 = vpack.c.bf16 %v1683, %v1682
      %v1713 = vpack.c.bf16 %v1685, %v1684
      %v1714 = vpack.c.bf16 %v1687, %v1686
      %v1715 = vpack.c.bf16 %v1689, %v1688
      %v1716 = vpack.c.bf16 %v1691, %v1690
      %v1717 = vpack.c.bf16 %v1693, %v1692
      %v1718 = vpack.c.bf16 %v1695, %v1694
      %v1719 = vpack.c.bf16 %v1697, %v1696
      %v1720 = vpack.c.bf16 %v1699, %v1698
      %v1721 = vpack.c.bf16 %v1701, %v1700
      %v1722 = vpack.c.bf16 %v1703, %v1702
      %v1723 = vpack.c.bf16 %v1705, %v1704
      %v1724 = vpack.c.bf16 %v1707, %v1706
      %v1725 = vpack.c.bf16 %v1709, %v1708
      %v1742 = vunpack.c.l.b16 %v1710
      %v1743 = vunpack.c.h.b16 %v1710
      %v1744 = vunpack.c.l.b16 %v1711
      %v1745 = vunpack.c.h.b16 %v1711
      %v1746 = vunpack.c.l.b16 %v1712
      %v1747 = vunpack.c.h.b16 %v1712
      %v1748 = vunpack.c.l.b16 %v1713
      %v1749 = vunpack.c.h.b16 %v1713
      %v1750 = vunpack.c.l.b16 %v1714
      %v1751 = vunpack.c.h.b16 %v1714
      %v1752 = vunpack.c.l.b16 %v1715
      %v1753 = vunpack.c.h.b16 %v1715
      %v1754 = vunpack.c.l.b16 %v1716
      %v1755 = vunpack.c.h.b16 %v1716
      %v1756 = vunpack.c.l.b16 %v1717
      %v1757 = vunpack.c.h.b16 %v1717
      %v1758 = vunpack.c.l.b16 %v1718
      %v1759 = vunpack.c.h.b16 %v1718
      %v1760 = vunpack.c.l.b16 %v1719
      %v1761 = vunpack.c.h.b16 %v1719
      %v1762 = vunpack.c.l.b16 %v1720
      %v1763 = vunpack.c.h.b16 %v1720
      %v1764 = vunpack.c.l.b16 %v1721
      %v1765 = vunpack.c.h.b16 %v1721
      %v1766 = vunpack.c.l.b16 %v1722
      %v1767 = vunpack.c.h.b16 %v1722
      %v1768 = vunpack.c.l.b16 %v1723
      %v1769 = vunpack.c.h.b16 %v1723
      %v1770 = vunpack.c.l.b16 %v1724
      %v1771 = vunpack.c.h.b16 %v1724
      %v1772 = vunpack.c.l.b16 %v1725
      %v1773 = vunpack.c.h.b16 %v1725
      %v1774 = vpack.c.b16 %v1742, %v1742
      %v1775 = vpack.c.b16 %v1743, %v1743
      %v1776 = vpack.c.b16 %v1744, %v1744
      %v1777 = vpack.c.b16 %v1745, %v1745
      %v1778 = vpack.c.b16 %v1746, %v1746
      %v1779 = vpack.c.b16 %v1747, %v1747
      %v1780 = vpack.c.b16 %v1748, %v1748
      %v1781 = vpack.c.b16 %v1749, %v1749
      %v1782 = vpack.c.b16 %v1750, %v1750
      %v1783 = vpack.c.b16 %v1751, %v1751
      %v1784 = vpack.c.b16 %v1752, %v1752
      %v1785 = vpack.c.b16 %v1753, %v1753
      %v1786 = vpack.c.b16 %v1754, %v1754
      %v1787 = vpack.c.b16 %v1755, %v1755
      %v1788 = vpack.c.b16 %v1756, %v1756
      %v1789 = vpack.c.b16 %v1757, %v1757
      %v1790 = vpack.c.b16 %v1758, %v1758
      %v1791 = vpack.c.b16 %v1759, %v1759
      %v1792 = vpack.c.b16 %v1760, %v1760
      %v1793 = vpack.c.b16 %v1761, %v1761
      %v1794 = vpack.c.b16 %v1762, %v1762
      %v1795 = vpack.c.b16 %v1763, %v1763
      %v1796 = vpack.c.b16 %v1764, %v1764
      %v1797 = vpack.c.b16 %v1765, %v1765
      %v1798 = vpack.c.b16 %v1766, %v1766
      %v1799 = vpack.c.b16 %v1767, %v1767
      %v1800 = vpack.c.b16 %v1768, %v1768
      %v1801 = vpack.c.b16 %v1769, %v1769
      %v1802 = vpack.c.b16 %v1770, %v1770
      %v1803 = vpack.c.b16 %v1771, %v1771
      %v1804 = vpack.c.b16 %v1772, %v1772
      %v1805 = vpack.c.b16 %v1773, %v1773
      %1806 = vrot.lane.b32.xlu0 %v1774, 124
      %v1807 = vpop.permute.xlu0 %1806
      %1808 = vrot.lane.b32.xlu0 %v1775, 124
      %v1809 = vpop.permute.xlu0 %1808
      %1810 = vrot.lane.b32.xlu0 %v1776, 124
      %v1811 = vpop.permute.xlu0 %1810
      %1812 = vrot.lane.b32.xlu0 %v1777, 124
      %v1813 = vpop.permute.xlu0 %1812
      %1814 = vrot.lane.b32.xlu0 %v1778, 124
      %v1815 = vpop.permute.xlu0 %1814
      %1816 = vrot.lane.b32.xlu0 %v1779, 124
      %v1817 = vpop.permute.xlu0 %1816
      %1818 = vrot.lane.b32.xlu0 %v1780, 124
      %v1819 = vpop.permute.xlu0 %1818
      %1820 = vrot.lane.b32.xlu0 %v1781, 124
      %v1821 = vpop.permute.xlu0 %1820
      %1822 = vrot.lane.b32.xlu0 %v1782, 124
      %v1823 = vpop.permute.xlu0 %1822
      %1824 = vrot.lane.b32.xlu0 %v1783, 124
      %v1825 = vpop.permute.xlu0 %1824
      %1826 = vrot.lane.b32.xlu0 %v1784, 124
      %v1827 = vpop.permute.xlu0 %1826
      %1828 = vrot.lane.b32.xlu0 %v1785, 124
      %v1829 = vpop.permute.xlu0 %1828
      %1830 = vrot.lane.b32.xlu0 %v1786, 124
      %v1831 = vpop.permute.xlu0 %1830
      %1832 = vrot.lane.b32.xlu0 %v1787, 124
      %v1833 = vpop.permute.xlu0 %1832
      %1834 = vrot.lane.b32.xlu0 %v1788, 124
      %v1835 = vpop.permute.xlu0 %1834
      %1836 = vrot.lane.b32.xlu0 %v1789, 124
      %v1837 = vpop.permute.xlu0 %1836
      %1838 = vrot.lane.b32.xlu0 %v1790, 124
      %v1839 = vpop.permute.xlu0 %1838
      %1840 = vrot.lane.b32.xlu0 %v1791, 124
      %v1841 = vpop.permute.xlu0 %1840
      %1842 = vrot.lane.b32.xlu0 %v1792, 124
      %v1843 = vpop.permute.xlu0 %1842
      %1844 = vrot.lane.b32.xlu0 %v1793, 124
      %v1845 = vpop.permute.xlu0 %1844
      %1846 = vrot.lane.b32.xlu0 %v1794, 124
      %v1847 = vpop.permute.xlu0 %1846
      %1848 = vrot.lane.b32.xlu0 %v1795, 124
      %v1849 = vpop.permute.xlu0 %1848
      %1850 = vrot.lane.b32.xlu0 %v1796, 124
      %v1851 = vpop.permute.xlu0 %1850
      %1852 = vrot.lane.b32.xlu0 %v1797, 124
      %v1853 = vpop.permute.xlu0 %1852
      %1854 = vrot.lane.b32.xlu0 %v1798, 124
      %v1855 = vpop.permute.xlu0 %1854
      %1856 = vrot.lane.b32.xlu0 %v1799, 124
      %v1857 = vpop.permute.xlu0 %1856
      %1858 = vrot.lane.b32.xlu0 %v1800, 124
      %v1859 = vpop.permute.xlu0 %1858
      %1860 = vrot.lane.b32.xlu0 %v1801, 124
      %v1861 = vpop.permute.xlu0 %1860
      %1862 = vrot.lane.b32.xlu0 %v1802, 124
      %v1863 = vpop.permute.xlu0 %1862
      %1864 = vrot.lane.b32.xlu0 %v1803, 124
      %v1865 = vpop.permute.xlu0 %1864
      %1866 = vrot.lane.b32.xlu0 %v1804, 124
      %v1867 = vpop.permute.xlu0 %1866
      %1868 = vrot.lane.b32.xlu0 %v1805, 124
      %v1869 = vpop.permute.xlu0 %1868
      %vm1902 = vcmask 27648
      %1903 = vst.msk [vmem:[%s210] sm:$0xf] %vm1902, %v1807
      %1904 = vst.msk [vmem:[%s210 + $0x4] sm:$0xf] %vm1902, %v1809
      %1905 = vst.msk [vmem:[%s210 + $0x8] sm:$0xf] %vm1902, %v1811
      %1906 = vst.msk [vmem:[%s210 + $0xc] sm:$0xf] %vm1902, %v1813
      %1907 = vst.msk [vmem:[%s210 + $0x10] sm:$0xf] %vm1902, %v1815
      %1908 = vst.msk [vmem:[%s210 + $0x14] sm:$0xf] %vm1902, %v1817
      %1909 = vst.msk [vmem:[%s210 + $0x18] sm:$0xf] %vm1902, %v1819
      %1910 = vst.msk [vmem:[%s210 + $0x1c] sm:$0xf] %vm1902, %v1821
      %1911 = vst.msk [vmem:[%s210 + $0x20] sm:$0xf] %vm1902, %v1823
      %1912 = vst.msk [vmem:[%s210 + $0x24] sm:$0xf] %vm1902, %v1825
      %1913 = vst.msk [vmem:[%s210 + $0x28] sm:$0xf] %vm1902, %v1827
      %1914 = vst.msk [vmem:[%s210 + $0x2c] sm:$0xf] %vm1902, %v1829
      %1915 = vst.msk [vmem:[%s210 + $0x30] sm:$0xf] %vm1902, %v1831
      %1916 = vst.msk [vmem:[%s210 + $0x34] sm:$0xf] %vm1902, %v1833
      %1917 = vst.msk [vmem:[%s210 + $0x38] sm:$0xf] %vm1902, %v1835
      %1918 = vst.msk [vmem:[%s210 + $0x3c] sm:$0xf] %vm1902, %v1837
      %1919 = vst.msk [vmem:[%s210 + $0x40] sm:$0xf] %vm1902, %v1839
      %1920 = vst.msk [vmem:[%s210 + $0x44] sm:$0xf] %vm1902, %v1841
      %1921 = vst.msk [vmem:[%s210 + $0x48] sm:$0xf] %vm1902, %v1843
      %1922 = vst.msk [vmem:[%s210 + $0x4c] sm:$0xf] %vm1902, %v1845
      %1923 = vst.msk [vmem:[%s210 + $0x50] sm:$0xf] %vm1902, %v1847
      %1924 = vst.msk [vmem:[%s210 + $0x54] sm:$0xf] %vm1902, %v1849
      %1925 = vst.msk [vmem:[%s210 + $0x58] sm:$0xf] %vm1902, %v1851
      %1926 = vst.msk [vmem:[%s210 + $0x5c] sm:$0xf] %vm1902, %v1853
      %1927 = vst.msk [vmem:[%s210 + $0x60] sm:$0xf] %vm1902, %v1855
      %1928 = vst.msk [vmem:[%s210 + $0x64] sm:$0xf] %vm1902, %v1857
      %1929 = vst.msk [vmem:[%s210 + $0x68] sm:$0xf] %vm1902, %v1859
      %1930 = vst.msk [vmem:[%s210 + $0x6c] sm:$0xf] %vm1902, %v1861
      %1931 = vst.msk [vmem:[%s210 + $0x70] sm:$0xf] %vm1902, %v1863
      %1932 = vst.msk [vmem:[%s210 + $0x74] sm:$0xf] %vm1902, %v1865
      %1933 = vst.msk [vmem:[%s210 + $0x78] sm:$0xf] %vm1902, %v1867
      %1934 = vst.msk [vmem:[%s210 + $0x7c] sm:$0xf] %vm1902, %v1869
      %p1935 = scmp.lt.s32.totalorder %s16, 1
      %s1936 = scalar_select %p1935, %s16, 1
      %s1937 = smul.addr %s1936, 32
      %s1938 = smul.addr %s1937, 8
      %s1939 = scalar_lea.vmem %s3, %s1938
      %p1940 = scmp.lt.s32.totalorder %s16, 1
      %s1941 = scalar_select %p1940, %s16, 1
      %s1942 = smul.addr %s1941, 32
      %s1943 = smul.addr %s1942, 4
      %s1944 = scalar_lea.vmem %s4, %s1943
      // Predicated region
      $region33: #{ssh_forward.4} parent=31 // pred_check
        %p1945 = pneg %p102
      $region34: #{ssh_forward.4} parent=31 // pred_check_branch
        %1947 = sbr.rel (%p1945) target = $region36
      $region35: #{ssh_forward.4} parent=31 // pred_region
        _
      $region36: #{ssh_forward.4} parent=31 // pred_fallthru
        _
      // Predicated region
      $region37: #{ssh_forward.4} parent=31 // pred_check
        %p1948 = pneg %p128
      $region38: #{ssh_forward.4} parent=31 // pred_check_branch
        %1950 = sbr.rel (%p1948) target = $region40
      $region39: #{ssh_forward.4} parent=31 // pred_region
        _
      $region40: #{ssh_forward.4} parent=31 // pred_fallthru
        _
    $region32: #{ssh_forward.4} parent=5 // pred_fallthru
      _
    %p1951 = scmp.le.s32.totalorder 2, %s11
    // Predicated region
    $region41: #{ssh_forward.4} parent=5 // pred_check
      %p1952 = pneg %p1951
    $region42: #{ssh_forward.4} parent=5 // pred_check_branch
      %1954 = sbr.rel (%p1952) target = $region44
    $region43: #{ssh_forward.4} parent=5 // pred_region
      %s1955 = ssub.s32 %s11, 2
      // Predicated region
      $region45: #{ssh_forward.4} parent=43 // pred_check
        %p1956 = pneg %p108
      $region46: #{ssh_forward.4} parent=43 // pred_check_branch
        %1958 = sbr.rel (%p1956) target = $region48
      $region47: #{ssh_forward.4} parent=43 // pred_region
        %p1959 = scmp.lt.s32.totalorder %s17, 1
        %s1960 = scalar_select %p1959, %s17, 1
        %s1961 = smul.addr %s1960, 32
        %s1962 = smul.addr %s1961, 8
        %s1963 = scalar_lea.vmem %s3, %s1962
      $region48: #{ssh_forward.4} parent=43 // pred_fallthru
        _
      // Predicated region
      $region49: #{ssh_forward.4} parent=43 // pred_check
        %p1964 = pneg %p134
      $region50: #{ssh_forward.4} parent=43 // pred_check_branch
        %1966 = sbr.rel (%p1964) target = $region52
      $region51: #{ssh_forward.4} parent=43 // pred_region
        %p1967 = scmp.lt.s32.totalorder %s17, 1
        %s1968 = scalar_select %p1967, %s17, 1
        %s1969 = smul.addr %s1968, 32
        %s1970 = smul.addr %s1969, 4
        %s1971 = scalar_lea.vmem %s4, %s1970
      $region52: #{ssh_forward.4} parent=43 // pred_fallthru
        _
    $region44: #{ssh_forward.4} parent=5 // pred_fallthru
      _
  $region6: #{ssh_forward.4} parent=0 // loop_footer
    %s15 = sadd.s32 1, %s11
  $region7: #{ssh_forward.4} parent=0 // loop_footer_branch
    %10 = sbr.rel target = $region3
  $region8: #{ssh_forward.4} parent=0 // loop_exit
    _

// kernel: ssh_forward.3
$region0: #{ssh_forward.3}
  #allocation0 [shape = 'u32[]', space=smem, size = 0x4, offset = 0x4, fixed_abs, tag = 'smem constant byte address 0x4 - core index']
  #allocation1 [shape = 'u32[144,128]{1,0:T(1,128)}', space=vmem, size = 0x12000, scoped, tag = 'internal scratch']
  %s0 = inlined_call_operand.vmem [shape: bf16[2,16,16,8], index: 0, kind: input, shape index: {}]
  %s1 = inlined_call_operand.vmem [shape: bf16[72,12], index: 1, kind: input, shape index: {}]
  %s2 = inlined_call_operand.vmem [shape: f32[1,12], index: 2, kind: input, shape index: {}]
  %s3 = inlined_call_operand.vmem [shape: f32[2,16,16,8], index: 3, kind: output, shape index: {0}]
  %s4 = inlined_call_operand.vmem [shape: bf16[2,16,16,4], index: 4, kind: output, shape index: {1}]
  %5 = xla_tuple %s3, %s4
  %s6 = sld [smem:[#allocation0]]
  $region53: #{ssh_forward.3} parent=0
    _
  %s8 = ssub.s32 1, %s6
  %s9 = scalar_select 0, %s8, %s6
  loop: start=0, step=1, limit=4
  $region2: #{ssh_forward.3} parent=0 // loop_pre_header
    _
  $region3: #{ssh_forward.3} parent=0 // loop_header
    %s11 = sphi 0, %s15
    %p12 = scmp.ge.s32.totalorder %s11, 4
    %s21 = sphi 0, %s23
    %s24 = sphi 0, %s21
    %s25 = sphi 0, %s24
    %s41 = sphi 0, %s25
    %s45 = sphi 0, %s45
    %s47 = sphi 0, %s45
    %s48 = sphi 0, %s47
    %s62 = sphi 0, %s48
    %s66 = sphi 0, %s66
    %s68 = sphi 0, %s66
    %s69 = sphi 0, %s68
    %s83 = sphi 0, %s69
    %s89 = sphi 0, %s91
    %s92 = sphi 0, %s89
    %s93 = sphi 0, %s92
    %s109 = sphi 0, %s93
    %s115 = sphi 0, %s117
    %s118 = sphi 0, %s115
    %s119 = sphi 0, %s118
    %s135 = sphi 0, %s119
  $region4: #{ssh_forward.3} parent=0 // loop_header_branch
    %14 = sbr.rel (%p12) target = $region8
  $region5: #{ssh_forward.3} parent=0 // loop_body
    %s16 = ssub.s32 %s11, 1
    %s17 = ssub.s32 %s11, 2
    %s18 = sadd.s32 %s11, 1
    %s19 = ssub.s32 %s11, %s18
    %p20 = scmp.eq.s32.totalorder %s19, 0
    %s22 = sadd.s32 %s21, 1
    %s23 = scalar_select %p20, %s21, %s22
    %p26 = pneg %p20
    %p27 = scmp.eq.s32.totalorder %s11, 1
    %p28 = por %p26, %p27
    %p29 = scmp.ne.s32.totalorder %s21, %s24
    %p30 = scmp.eq.s32.totalorder %s11, 0
    %p31 = por %p29, %p30
    %p32 = scmp.ne.s32.totalorder %s21, %s24
    %p33 = scmp.eq.s32.totalorder %s16, 1
    %p34 = por %p32, %p33
    %p35 = scmp.ne.s32.totalorder %s24, %s25
    %p36 = scmp.eq.s32.totalorder %s16, 0
    %p37 = por %p35, %p36
    %p38 = scmp.ne.s32.totalorder %s24, %s25
    %p39 = scmp.eq.s32.totalorder %s17, 1
    %p40 = por %p38, %p39
    %p42 = scmp.ne.s32.totalorder %s25, %s41
    %p43 = scmp.eq.s32.totalorder %s17, 0
    %p44 = por %p42, %p43
    %s46 = sadd.s32 %s45, 1
    %p49 = scmp.eq.s32.totalorder %s11, 1
    %p50 = scmp.ne.s32.totalorder %s45, %s47
    %p51 = scmp.eq.s32.totalorder %s11, 0
    %p52 = por %p50, %p51
    %p53 = scmp.ne.s32.totalorder %s45, %s47
    %p54 = scmp.eq.s32.totalorder %s16, 1
    %p55 = por %p53, %p54
    %p56 = scmp.ne.s32.totalorder %s47, %s48
    %p57 = scmp.eq.s32.totalorder %s16, 0
    %p58 = por %p56, %p57
    %p59 = scmp.ne.s32.totalorder %s47, %s48
    %p60 = scmp.eq.s32.totalorder %s17, 1
    %p61 = por %p59, %p60
    %p63 = scmp.ne.s32.totalorder %s48, %s62
    %p64 = scmp.eq.s32.totalorder %s17, 0
    %p65 = por %p63, %p64
    %s67 = sadd.s32 %s66, 1
    %p70 = scmp.eq.s32.totalorder %s11, 1
    %p71 = scmp.ne.s32.totalorder %s66, %s68
    %p72 = scmp.eq.s32.totalorder %s11, 0
    %p73 = por %p71, %p72
    %p74 = scmp.ne.s32.totalorder %s66, %s68
    %p75 = scmp.eq.s32.totalorder %s16, 1
    %p76 = por %p74, %p75
    %p77 = scmp.ne.s32.totalorder %s68, %s69
    %p78 = scmp.eq.s32.totalorder %s16, 0
    %p79 = por %p77, %p78
    %p80 = scmp.ne.s32.totalorder %s68, %s69
    %p81 = scmp.eq.s32.totalorder %s17, 1
    %p82 = por %p80, %p81
    %p84 = scmp.ne.s32.totalorder %s69, %s83
    %p85 = scmp.eq.s32.totalorder %s17, 0
    %p86 = por %p84, %p85
    %s87 = ssub.s32 %s11, %s18
    %p88 = scmp.eq.s32.totalorder %s87, 0
    %s90 = sadd.s32 %s89, 1
    %s91 = scalar_select %p88, %s89, %s90
    %p94 = pneg %p88
    %p95 = scmp.eq.s32.totalorder %s11, 1
    %p96 = por %p94, %p95
    %p97 = scmp.ne.s32.totalorder %s89, %s92
    %p98 = scmp.eq.s32.totalorder %s11, 0
    %p99 = por %p97, %p98
    %p100 = scmp.ne.s32.totalorder %s89, %s92
    %p101 = scmp.eq.s32.totalorder %s16, 1
    %p102 = por %p100, %p101
    %p103 = scmp.ne.s32.totalorder %s92, %s93
    %p104 = scmp.eq.s32.totalorder %s16, 0
    %p105 = por %p103, %p104
    %p106 = scmp.ne.s32.totalorder %s92, %s93
    %p107 = scmp.eq.s32.totalorder %s17, 1
    %p108 = por %p106, %p107
    %p110 = scmp.ne.s32.totalorder %s93, %s109
    %p111 = scmp.eq.s32.totalorder %s17, 0
    %p112 = por %p110, %p111
    %s113 = ssub.s32 %s11, %s18
    %p114 = scmp.eq.s32.totalorder %s113, 0
    %s116 = sadd.s32 %s115, 1
    %s117 = scalar_select %p114, %s115, %s116
    %p120 = pneg %p114
    %p121 = scmp.eq.s32.totalorder %s11, 1
    %p122 = por %p120, %p121
    %p123 = scmp.ne.s32.totalorder %s115, %s118
    %p124 = scmp.eq.s32.totalorder %s11, 0
    %p125 = por %p123, %p124
    %p126 = scmp.ne.s32.totalorder %s115, %s118
    %p127 = scmp.eq.s32.totalorder %s16, 1
    %p128 = por %p126, %p127
    %p129 = scmp.ne.s32.totalorder %s118, %s119
    %p130 = scmp.eq.s32.totalorder %s16, 0
    %p131 = por %p129, %p130
    %p132 = scmp.ne.s32.totalorder %s118, %s119
    %p133 = scmp.eq.s32.totalorder %s17, 1
    %p134 = por %p132, %p133
    %p136 = scmp.ne.s32.totalorder %s119, %s135
    %p137 = scmp.eq.s32.totalorder %s17, 0
    %p138 = por %p136, %p137
    %p139 = scmp.le.s32.totalorder 1, %s11
    %p140 = scmp.lt.s32.totalorder %s11, 3
    %p141 = pnand %p139, %p140
    %p142 = pneg %p141
    // Predicated region
    $region9: #{ssh_forward.3} parent=5 // pred_check
      _
    $region10: #{ssh_forward.3} parent=5 // pred_check_branch
      %144 = sbr.rel (%p141) target = $region12
    $region11: #{ssh_forward.3} parent=5 // pred_region
      %s145 = ssub.s32 %s11, 1
      // Predicated region
      $region13: #{ssh_forward.3} parent=11 // pred_check
        %p146 = pneg %p58
      $region14: #{ssh_forward.3} parent=11 // pred_check_branch
        %148 = sbr.rel (%p146) target = $region16
      $region15: #{ssh_forward.3} parent=11 // pred_region
        _
      $region16: #{ssh_forward.3} parent=11 // pred_fallthru
        _
      // Predicated region
      $region17: #{ssh_forward.3} parent=11 // pred_check
        %p149 = pneg %p79
      $region18: #{ssh_forward.3} parent=11 // pred_check_branch
        %151 = sbr.rel (%p149) target = $region20
      $region19: #{ssh_forward.3} parent=11 // pred_region
        _
      $region20: #{ssh_forward.3} parent=11 // pred_fallthru
        _
    $region12: #{ssh_forward.3} parent=5 // pred_fallthru
      _
    %p152 = scmp.lt.s32.totalorder %s11, 2
    // Predicated region
    $region21: #{ssh_forward.3} parent=5 // pred_check
      %p153 = pneg %p152
    $region22: #{ssh_forward.3} parent=5 // pred_check_branch
      %155 = sbr.rel (%p153) target = $region24
    $region23: #{ssh_forward.3} parent=5 // pred_region
      // Predicated region
      $region25: #{ssh_forward.3} parent=23 // pred_check
        %p156 = pneg %p31
      $region26: #{ssh_forward.3} parent=23 // pred_check_branch
        %158 = sbr.rel (%p156) target = $region28
      $region27: #{ssh_forward.3} parent=23 // pred_region
        %p159 = scmp.lt.s32.totalorder %s11, 1
        %s160 = scalar_select %p159, %s11, 1
        %s161 = smul.addr %s160, 32
        %s162 = smul.addr %s161, 4
        %s163 = scalar_lea.vmem %s0, %s162
      $region28: #{ssh_forward.3} parent=23 // pred_fallthru
        _
    $region24: #{ssh_forward.3} parent=5 // pred_fallthru
      _
    %p164 = scmp.le.s32.totalorder 1, %s11
    %p165 = scmp.lt.s32.totalorder %s11, 3
    %p166 = pnand %p164, %p165
    %p167 = pneg %p166
    // Predicated region
    $region29: #{ssh_forward.3} parent=5 // pred_check
      _
    $region30: #{ssh_forward.3} parent=5 // pred_check_branch
      %169 = sbr.rel (%p166) target = $region32
    $region31: #{ssh_forward.3} parent=5 // pred_region
      %s170 = ssub.s32 %s11, 1
      %p171 = scmp.lt.s32.totalorder %s16, 1
      %s172 = scalar_select %p171, %s16, 1
      %s173 = smul.addr %s172, 32
      %s174 = smul.addr %s173, 4
      %s175 = scalar_lea.vmem %s0, %s174
      %p176 = pneg %p37
      %p177 = pneg %p34
      %p178 = pneg %p58
      %p179 = pneg %p55
      %p180 = pneg %p79
      %p181 = pneg %p76
      %p182 = pneg %p105
      %p183 = pneg %p102
      %p184 = scmp.lt.s32.totalorder %s16, 1
      %s185 = scalar_select %p184, %s16, 1
      %s186 = smul.addr %s185, 32
      %s187 = smul.addr %s186, 8
      %s188 = scalar_lea.vmem %s3, %s187
      %p189 = pneg %p131
      %p190 = pneg %p128
      %p191 = scmp.lt.s32.totalorder %s16, 1
      %s192 = scalar_select %p191, %s16, 1
      %s193 = smul.addr %s192, 32
      %s194 = smul.addr %s193, 4
      %s195 = scalar_lea.vmem %s4, %s194
      %p196 = scmp.lt.s32.totalorder %s16, 1
      %s197 = scalar_select %p196, %s16, 1
      %s198 = smul.addr %s197, 32
      %s199 = smul.addr %s198, 4
      %s200 = scalar_lea.vmem %s0, %s199
      %p201 = scmp.lt.s32.totalorder %s16, 1
      %s202 = scalar_select %p201, %s16, 1
      %s203 = smul.addr %s202, 32
      %s204 = smul.addr %s203, 8
      %s205 = scalar_lea.vmem %s3, %s204
      %p206 = scmp.lt.s32.totalorder %s16, 1
      %s207 = scalar_select %p206, %s16, 1
      %s208 = smul.addr %s207, 32
      %s209 = smul.addr %s208, 4
      %s210 = scalar_lea.vmem %s4, %s209
      %v212 = vld [vmem:[%s200] sm:$0xf]
      %v213 = vld [vmem:[%s200 + $0x4] sm:$0xf]
      %v214 = vld [vmem:[%s200 + $0x8] sm:$0xf]
      %v215 = vld [vmem:[%s200 + $0xc] sm:$0xf]
      %v216 = vld [vmem:[%s200 + $0x10] sm:$0xf]
      %v217 = vld [vmem:[%s200 + $0x14] sm:$0xf]
      %v218 = vld [vmem:[%s200 + $0x18] sm:$0xf]
      %v219 = vld [vmem:[%s200 + $0x1c] sm:$0xf]
      %v220 = vld [vmem:[%s200 + $0x20] sm:$0xf]
      %v221 = vld [vmem:[%s200 + $0x24] sm:$0xf]
      %v222 = vld [vmem:[%s200 + $0x28] sm:$0xf]
      %v223 = vld [vmem:[%s200 + $0x2c] sm:$0xf]
      %v224 = vld [vmem:[%s200 + $0x30] sm:$0xf]
      %v225 = vld [vmem:[%s200 + $0x34] sm:$0xf]
      %v226 = vld [vmem:[%s200 + $0x38] sm:$0xf]
      %v227 = vld [vmem:[%s200 + $0x3c] sm:$0xf]
      %v228 = vld [vmem:[%s200 + $0x40] sm:$0xf]
      %v229 = vld [vmem:[%s200 + $0x44] sm:$0xf]
      %v230 = vld [vmem:[%s200 + $0x48] sm:$0xf]
      %v231 = vld [vmem:[%s200 + $0x4c] sm:$0xf]
      %v232 = vld [vmem:[%s200 + $0x50] sm:$0xf]
      %v233 = vld [vmem:[%s200 + $0x54] sm:$0xf]
      %v234 = vld [vmem:[%s200 + $0x58] sm:$0xf]
      %v235 = vld [vmem:[%s200 + $0x5c] sm:$0xf]
      %v236 = vld [vmem:[%s200 + $0x60] sm:$0xf]
      %v237 = vld [vmem:[%s200 + $0x64] sm:$0xf]
      %v238 = vld [vmem:[%s200 + $0x68] sm:$0xf]
      %v239 = vld [vmem:[%s200 + $0x6c] sm:$0xf]
      %v240 = vld [vmem:[%s200 + $0x70] sm:$0xf]
      %v241 = vld [vmem:[%s200 + $0x74] sm:$0xf]
      %v242 = vld [vmem:[%s200 + $0x78] sm:$0xf]
      %v243 = vld [vmem:[%s200 + $0x7c] sm:$0xf]
      %v276 = vunpack.c.l.b16 %v212
      %v277 = vunpack.c.l.b16 %v213
      %v278 = vunpack.c.l.b16 %v214
      %v279 = vunpack.c.l.b16 %v215
      %v280 = vunpack.c.l.b16 %v216
      %v281 = vunpack.c.l.b16 %v217
      %v282 = vunpack.c.l.b16 %v218
      %v283 = vunpack.c.l.b16 %v219
      %v284 = vunpack.c.l.b16 %v220
      %v285 = vunpack.c.l.b16 %v221
      %v286 = vunpack.c.l.b16 %v222
      %v287 = vunpack.c.l.b16 %v223
      %v288 = vunpack.c.l.b16 %v224
      %v289 = vunpack.c.l.b16 %v225
      %v290 = vunpack.c.l.b16 %v226
      %v291 = vunpack.c.l.b16 %v227
      %v292 = vunpack.c.l.b16 %v228
      %v293 = vunpack.c.l.b16 %v229
      %v294 = vunpack.c.l.b16 %v230
      %v295 = vunpack.c.l.b16 %v231
      %v296 = vunpack.c.l.b16 %v232
      %v297 = vunpack.c.l.b16 %v233
      %v298 = vunpack.c.l.b16 %v234
      %v299 = vunpack.c.l.b16 %v235
      %v300 = vunpack.c.l.b16 %v236
      %v301 = vunpack.c.l.b16 %v237
      %v302 = vunpack.c.l.b16 %v238
      %v303 = vunpack.c.l.b16 %v239
      %v304 = vunpack.c.l.b16 %v240
      %v305 = vunpack.c.l.b16 %v241
      %v306 = vunpack.c.l.b16 %v242
      %v307 = vunpack.c.l.b16 %v243
      %v308 = vpack.c.b16 %v277, %v276
      %v309 = vpack.c.b16 %v279, %v278
      %v310 = vpack.c.b16 %v281, %v280
      %v311 = vpack.c.b16 %v283, %v282
      %v312 = vpack.c.b16 %v285, %v284
      %v313 = vpack.c.b16 %v287, %v286
      %v314 = vpack.c.b16 %v289, %v288
      %v315 = vpack.c.b16 %v291, %v290
      %v316 = vpack.c.b16 %v293, %v292
      %v317 = vpack.c.b16 %v295, %v294
      %v318 = vpack.c.b16 %v297, %v296
      %v319 = vpack.c.b16 %v299, %v298
      %v320 = vpack.c.b16 %v301, %v300
      %v321 = vpack.c.b16 %v303, %v302
      %v322 = vpack.c.b16 %v305, %v304
      %v323 = vpack.c.b16 %v307, %v306
      %v325 = vshrl.u32 0, 16
      %v327 = vrot.slane %v325, 7
      %v328 = vshll.u32 0, 16
      %v330 = vor.u32 %v327, %v328
      %v332 = vshrl.u32 %v308, 16
      %v334 = vrot.slane %v332, 7
      %v335 = vshll.u32 %v308, 16
      %v337 = vor.u32 %v334, %v335
      %v339 = vshrl.u32 %v309, 16
      %v341 = vrot.slane %v339, 7
      %v342 = vshll.u32 %v309, 16
      %v344 = vor.u32 %v341, %v342
      %v346 = vshrl.u32 %v310, 16
      %v348 = vrot.slane %v346, 7
      %v349 = vshll.u32 %v310, 16
      %v351 = vor.u32 %v348, %v349
      %v353 = vshrl.u32 %v311, 16
      %v355 = vrot.slane %v353, 7
      %v356 = vshll.u32 %v311, 16
      %v358 = vor.u32 %v355, %v356
      %v360 = vshrl.u32 %v312, 16
      %v362 = vrot.slane %v360, 7
      %v363 = vshll.u32 %v312, 16
      %v365 = vor.u32 %v362, %v363
      %v367 = vshrl.u32 %v313, 16
      %v369 = vrot.slane %v367, 7
      %v370 = vshll.u32 %v313, 16
      %v372 = vor.u32 %v369, %v370
      %v374 = vshrl.u32 %v314, 16
      %v376 = vrot.slane %v374, 7
      %v377 = vshll.u32 %v314, 16
      %v379 = vor.u32 %v376, %v377
      %v381 = vshrl.u32 %v315, 16
      %v383 = vrot.slane %v381, 7
      %v384 = vshll.u32 %v315, 16
      %v386 = vor.u32 %v383, %v384
      %v388 = vshrl.u32 %v316, 16
      %v390 = vrot.slane %v388, 7
      %v391 = vshll.u32 %v316, 16
      %v393 = vor.u32 %v390, %v391
      %v395 = vshrl.u32 %v317, 16
      %v397 = vrot.slane %v395, 7
      %v398 = vshll.u32 %v317, 16
      %v400 = vor.u32 %v397, %v398
      %v402 = vshrl.u32 %v318, 16
      %v404 = vrot.slane %v402, 7
      %v405 = vshll.u32 %v318, 16
      %v407 = vor.u32 %v404, %v405
      %v409 = vshrl.u32 %v319, 16
      %v411 = vrot.slane %v409, 7
      %v412 = vshll.u32 %v319, 16
      %v414 = vor.u32 %v411, %v412
      %v416 = vshrl.u32 %v320, 16
      %v418 = vrot.slane %v416, 7
      %v419 = vshll.u32 %v320, 16
      %v421 = vor.u32 %v418, %v419
      %v423 = vshrl.u32 %v321, 16
      %v425 = vrot.slane %v423, 7
      %v426 = vshll.u32 %v321, 16
      %v428 = vor.u32 %v425, %v426
      %v430 = vshrl.u32 %v322, 16
      %v432 = vrot.slane %v430, 7
      %v433 = vshll.u32 %v322, 16
      %v435 = vor.u32 %v432, %v433
      %v437 = vshrl.u32 %v323, 16
      %v439 = vrot.slane %v437, 7
      %v440 = vshll.u32 %v323, 16
      %v442 = vor.u32 %v439, %v440
      %vm477 = vcmask 1040384
      %vm478 = vsmask.f32 256
      %vm479 = vmand %vm477, %vm478
      %v480 = vsel %vm479, 0, %v330
      %v481 = vsel %vm479, 0, %v337
      %v482 = vsel %vm479, 0, %v344
      %v483 = vsel %vm479, 0, %v351
      %v484 = vsel %vm479, 0, %v358
      %v485 = vsel %vm479, 0, %v365
      %v486 = vsel %vm479, 0, %v372
      %v487 = vsel %vm479, 0, %v379
      %v488 = vsel %vm479, 0, %v386
      %v489 = vsel %vm479, 0, %v393
      %v490 = vsel %vm479, 0, %v400
      %v491 = vsel %vm479, 0, %v407
      %v492 = vsel %vm479, 0, %v414
      %v493 = vsel %vm479, 0, %v421
      %v494 = vsel %vm479, 0, %v428
      %v495 = vsel %vm479, 0, %v435
      %v496 = vsel %vm479, 0, %v442
      %v497 = vsel %vm479, %v327, 0
      %v498 = vsel %vm479, %v334, 0
      %v499 = vsel %vm479, %v341, 0
      %v500 = vsel %vm479, %v348, 0
      %v501 = vsel %vm479, %v355, 0
      %v502 = vsel %vm479, %v362, 0
      %v503 = vsel %vm479, %v369, 0
      %v504 = vsel %vm479, %v376, 0
      %v505 = vsel %vm479, %v383, 0
      %v506 = vsel %vm479, %v390, 0
      %v507 = vsel %vm479, %v397, 0
      %v508 = vsel %vm479, %v404, 0
      %v509 = vsel %vm479, %v411, 0
      %v510 = vsel %vm479, %v418, 0
      %v511 = vsel %vm479, %v425, 0
      %v512 = vsel %vm479, %v432, 0
      %v513 = vsel %vm479, %v439, 0
      %vm514 = vsmask.f32 7424
      %v516 = vshrl.u32 %v480, 16
      %v518 = vshll.u32 %v480, 16
      %v520 = vrot.slane %v518, 1
      %v521 = vor.u32 %v516, %v520
      %v523 = vshll.u32 %v497, 16
      %v525 = vrot.slane %v523, 1
      %v526 = vsel %vm514, %v521, %v525
      %v528 = vshrl.u32 %v481, 16
      %v530 = vshll.u32 %v481, 16
      %v532 = vrot.slane %v530, 1
      %v533 = vor.u32 %v528, %v532
      %v535 = vshll.u32 %v498, 16
      %v537 = vrot.slane %v535, 1
      %v538 = vsel %vm514, %v533, %v537
      %v540 = vshrl.u32 %v482, 16
      %v542 = vshll.u32 %v482, 16
      %v544 = vrot.slane %v542, 1
      %v545 = vor.u32 %v540, %v544
      %v547 = vshll.u32 %v499, 16
      %v549 = vrot.slane %v547, 1
      %v550 = vsel %vm514, %v545, %v549
      %v552 = vshrl.u32 %v483, 16
      %v554 = vshll.u32 %v483, 16
      %v556 = vrot.slane %v554, 1
      %v557 = vor.u32 %v552, %v556
      %v559 = vshll.u32 %v500, 16
      %v561 = vrot.slane %v559, 1
      %v562 = vsel %vm514, %v557, %v561
      %v564 = vshrl.u32 %v484, 16
      %v566 = vshll.u32 %v484, 16
      %v568 = vrot.slane %v566, 1
      %v569 = vor.u32 %v564, %v568
      %v571 = vshll.u32 %v501, 16
      %v573 = vrot.slane %v571, 1
      %v574 = vsel %vm514, %v569, %v573
      %v576 = vshrl.u32 %v485, 16
      %v578 = vshll.u32 %v485, 16
      %v580 = vrot.slane %v578, 1
      %v581 = vor.u32 %v576, %v580
      %v583 = vshll.u32 %v502, 16
      %v585 = vrot.slane %v583, 1
      %v586 = vsel %vm514, %v581, %v585
      %v588 = vshrl.u32 %v486, 16
      %v590 = vshll.u32 %v486, 16
      %v592 = vrot.slane %v590, 1
      %v593 = vor.u32 %v588, %v592
      %v595 = vshll.u32 %v503, 16
      %v597 = vrot.slane %v595, 1
      %v598 = vsel %vm514, %v593, %v597
      %v600 = vshrl.u32 %v487, 16
      %v602 = vshll.u32 %v487, 16
      %v604 = vrot.slane %v602, 1
      %v605 = vor.u32 %v600, %v604
      %v607 = vshll.u32 %v504, 16
      %v609 = vrot.slane %v607, 1
      %v610 = vsel %vm514, %v605, %v609
      %v612 = vshrl.u32 %v488, 16
      %v614 = vshll.u32 %v488, 16
      %v616 = vrot.slane %v614, 1
      %v617 = vor.u32 %v612, %v616
      %v619 = vshll.u32 %v505, 16
      %v621 = vrot.slane %v619, 1
      %v622 = vsel %vm514, %v617, %v621
      %v624 = vshrl.u32 %v489, 16
      %v626 = vshll.u32 %v489, 16
      %v628 = vrot.slane %v626, 1
      %v629 = vor.u32 %v624, %v628
      %v631 = vshll.u32 %v506, 16
      %v633 = vrot.slane %v631, 1
      %v634 = vsel %vm514, %v629, %v633
      %v636 = vshrl.u32 %v490, 16
      %v638 = vshll.u32 %v490, 16
      %v640 = vrot.slane %v638, 1
      %v641 = vor.u32 %v636, %v640
      %v643 = vshll.u32 %v507, 16
      %v645 = vrot.slane %v643, 1
      %v646 = vsel %vm514, %v641, %v645
      %v648 = vshrl.u32 %v491, 16
      %v650 = vshll.u32 %v491, 16
      %v652 = vrot.slane %v650, 1
      %v653 = vor.u32 %v648, %v652
      %v655 = vshll.u32 %v508, 16
      %v657 = vrot.slane %v655, 1
      %v658 = vsel %vm514, %v653, %v657
      %v660 = vshrl.u32 %v492, 16
      %v662 = vshll.u32 %v492, 16
      %v664 = vrot.slane %v662, 1
      %v665 = vor.u32 %v660, %v664
      %v667 = vshll.u32 %v509, 16
      %v669 = vrot.slane %v667, 1
      %v670 = vsel %vm514, %v665, %v669
      %v672 = vshrl.u32 %v493, 16
      %v674 = vshll.u32 %v493, 16
      %v676 = vrot.slane %v674, 1
      %v677 = vor.u32 %v672, %v676
      %v679 = vshll.u32 %v510, 16
      %v681 = vrot.slane %v679, 1
      %v682 = vsel %vm514, %v677, %v681
      %v684 = vshrl.u32 %v494, 16
      %v686 = vshll.u32 %v494, 16
      %v688 = vrot.slane %v686, 1
      %v689 = vor.u32 %v684, %v688
      %v691 = vshll.u32 %v511, 16
      %v693 = vrot.slane %v691, 1
      %v694 = vsel %vm514, %v689, %v693
      %v696 = vshrl.u32 %v495, 16
      %v698 = vshll.u32 %v495, 16
      %v700 = vrot.slane %v698, 1
      %v701 = vor.u32 %v696, %v700
      %v703 = vshll.u32 %v512, 16
      %v705 = vrot.slane %v703, 1
      %v706 = vsel %vm514, %v701, %v705
      %vm739 = vcmask 1046528
      %v740 = vrot.slane %v480, 1
      %v741 = vrot.slane %v497, 1
      %v742 = vsel %vm739, %v740, %v741
      %v743 = vrot.slane %v481, 1
      %v744 = vrot.slane %v498, 1
      %v745 = vsel %vm739, %v743, %v744
      %v746 = vrot.slane %v482, 1
      %v747 = vrot.slane %v499, 1
      %v748 = vsel %vm739, %v746, %v747
      %v749 = vrot.slane %v483, 1
      %v750 = vrot.slane %v500, 1
      %v751 = vsel %vm739, %v749, %v750
      %v752 = vrot.slane %v484, 1
      %v753 = vrot.slane %v501, 1
      %v754 = vsel %vm739, %v752, %v753
      %v755 = vrot.slane %v485, 1
      %v756 = vrot.slane %v502, 1
      %v757 = vsel %vm739, %v755, %v756
      %v758 = vrot.slane %v486, 1
      %v759 = vrot.slane %v503, 1
      %v760 = vsel %vm739, %v758, %v759
      %v761 = vrot.slane %v487, 1
      %v762 = vrot.slane %v504, 1
      %v763 = vsel %vm739, %v761, %v762
      %v764 = vrot.slane %v488, 1
      %v765 = vrot.slane %v505, 1
      %v766 = vsel %vm739, %v764, %v765
      %v767 = vrot.slane %v489, 1
      %v768 = vrot.slane %v506, 1
      %v769 = vsel %vm739, %v767, %v768
      %v770 = vrot.slane %v490, 1
      %v771 = vrot.slane %v507, 1
      %v772 = vsel %vm739, %v770, %v771
      %v773 = vrot.slane %v491, 1
      %v774 = vrot.slane %v508, 1
      %v775 = vsel %vm739, %v773, %v774
      %v776 = vrot.slane %v492, 1
      %v777 = vrot.slane %v509, 1
      %v778 = vsel %vm739, %v776, %v777
      %v779 = vrot.slane %v493, 1
      %v780 = vrot.slane %v510, 1
      %v781 = vsel %vm739, %v779, %v780
      %v782 = vrot.slane %v494, 1
      %v783 = vrot.slane %v511, 1
      %v784 = vsel %vm739, %v782, %v783
      %v785 = vrot.slane %v495, 1
      %v786 = vrot.slane %v512, 1
      %v787 = vsel %vm739, %v785, %v786
      %v789 = vshrl.u32 %v496, 16
      %v791 = vshll.u32 %v496, 16
      %v793 = vrot.slane %v791, 1
      %v794 = vor.u32 %v789, %v793
      %v796 = vshll.u32 %v513, 16
      %v798 = vrot.slane %v796, 1
      %v799 = vsel %vm514, %v794, %v798
      %v802 = vrot.slane %v496, 1
      %v803 = vrot.slane %v513, 1
      %v804 = vsel %vm739, %v802, %v803
      %805 = vrot.lane.b32.xlu0 %v526, 8
      %v806 = vpop.permute.xlu0 %805
      %807 = vrot.lane.b32.xlu0 %v538, 8
      %v808 = vpop.permute.xlu0 %807
      %809 = vrot.lane.b32.xlu0 %v550, 8
      %v810 = vpop.permute.xlu0 %809
      %811 = vrot.lane.b32.xlu0 %v562, 8
      %v812 = vpop.permute.xlu0 %811
      %813 = vrot.lane.b32.xlu0 %v574, 8
      %v814 = vpop.permute.xlu0 %813
      %815 = vrot.lane.b32.xlu0 %v586, 8
      %v816 = vpop.permute.xlu0 %815
      %817 = vrot.lane.b32.xlu0 %v598, 8
      %v818 = vpop.permute.xlu0 %817
      %819 = vrot.lane.b32.xlu0 %v610, 8
      %v820 = vpop.permute.xlu0 %819
      %821 = vrot.lane.b32.xlu0 %v622, 8
      %v822 = vpop.permute.xlu0 %821
      %823 = vrot.lane.b32.xlu0 %v634, 8
      %v824 = vpop.permute.xlu0 %823
      %825 = vrot.lane.b32.xlu0 %v646, 8
      %v826 = vpop.permute.xlu0 %825
      %827 = vrot.lane.b32.xlu0 %v658, 8
      %v828 = vpop.permute.xlu0 %827
      %829 = vrot.lane.b32.xlu0 %v670, 8
      %v830 = vpop.permute.xlu0 %829
      %831 = vrot.lane.b32.xlu0 %v682, 8
      %v832 = vpop.permute.xlu0 %831
      %833 = vrot.lane.b32.xlu0 %v694, 8
      %v834 = vpop.permute.xlu0 %833
      %835 = vrot.lane.b32.xlu0 %v706, 8
      %v836 = vpop.permute.xlu0 %835
      %837 = vrot.lane.b32.xlu0 %v742, 16
      %v838 = vpop.permute.xlu0 %837
      %839 = vrot.lane.b32.xlu0 %v745, 16
      %v840 = vpop.permute.xlu0 %839
      %841 = vrot.lane.b32.xlu0 %v748, 16
      %v842 = vpop.permute.xlu0 %841
      %843 = vrot.lane.b32.xlu0 %v751, 16
      %v844 = vpop.permute.xlu0 %843
      %845 = vrot.lane.b32.xlu0 %v754, 16
      %v846 = vpop.permute.xlu0 %845
      %847 = vrot.lane.b32.xlu0 %v757, 16
      %v848 = vpop.permute.xlu0 %847
      %849 = vrot.lane.b32.xlu0 %v760, 16
      %v850 = vpop.permute.xlu0 %849
      %851 = vrot.lane.b32.xlu0 %v763, 16
      %v852 = vpop.permute.xlu0 %851
      %853 = vrot.lane.b32.xlu0 %v766, 16
      %v854 = vpop.permute.xlu0 %853
      %855 = vrot.lane.b32.xlu0 %v769, 16
      %v856 = vpop.permute.xlu0 %855
      %857 = vrot.lane.b32.xlu0 %v772, 16
      %v858 = vpop.permute.xlu0 %857
      %859 = vrot.lane.b32.xlu0 %v775, 16
      %v860 = vpop.permute.xlu0 %859
      %861 = vrot.lane.b32.xlu0 %v778, 16
      %v862 = vpop.permute.xlu0 %861
      %863 = vrot.lane.b32.xlu0 %v781, 16
      %v864 = vpop.permute.xlu0 %863
      %865 = vrot.lane.b32.xlu0 %v784, 16
      %v866 = vpop.permute.xlu0 %865
      %867 = vrot.lane.b32.xlu0 %v787, 16
      %v868 = vpop.permute.xlu0 %867
      %869 = vrot.lane.b32.xlu0 %v481, 24
      %v870 = vpop.permute.xlu0 %869
      %871 = vrot.lane.b32.xlu0 %v482, 24
      %v872 = vpop.permute.xlu0 %871
      %873 = vrot.lane.b32.xlu0 %v483, 24
      %v874 = vpop.permute.xlu0 %873
      %875 = vrot.lane.b32.xlu0 %v484, 24
      %v876 = vpop.permute.xlu0 %875
      %877 = vrot.lane.b32.xlu0 %v485, 24
      %v878 = vpop.permute.xlu0 %877
      %879 = vrot.lane.b32.xlu0 %v486, 24
      %v880 = vpop.permute.xlu0 %879
      %881 = vrot.lane.b32.xlu0 %v487, 24
      %v882 = vpop.permute.xlu0 %881
      %883 = vrot.lane.b32.xlu0 %v488, 24
      %v884 = vpop.permute.xlu0 %883
      %885 = vrot.lane.b32.xlu0 %v489, 24
      %v886 = vpop.permute.xlu0 %885
      %887 = vrot.lane.b32.xlu0 %v490, 24
      %v888 = vpop.permute.xlu0 %887
      %889 = vrot.lane.b32.xlu0 %v491, 24
      %v890 = vpop.permute.xlu0 %889
      %891 = vrot.lane.b32.xlu0 %v492, 24
      %v892 = vpop.permute.xlu0 %891
      %893 = vrot.lane.b32.xlu0 %v493, 24
      %v894 = vpop.permute.xlu0 %893
      %895 = vrot.lane.b32.xlu0 %v494, 24
      %v896 = vpop.permute.xlu0 %895
      %897 = vrot.lane.b32.xlu0 %v495, 24
      %v898 = vpop.permute.xlu0 %897
      %899 = vrot.lane.b32.xlu0 %v496, 24
      %v900 = vpop.permute.xlu0 %899
      %901 = vrot.lane.b32.xlu0 %v538, 32
      %v902 = vpop.permute.xlu0 %901
      %903 = vrot.lane.b32.xlu0 %v550, 32
      %v904 = vpop.permute.xlu0 %903
      %905 = vrot.lane.b32.xlu0 %v562, 32
      %v906 = vpop.permute.xlu0 %905
      %907 = vrot.lane.b32.xlu0 %v574, 32
      %v908 = vpop.permute.xlu0 %907
      %909 = vrot.lane.b32.xlu0 %v586, 32
      %v910 = vpop.permute.xlu0 %909
      %911 = vrot.lane.b32.xlu0 %v598, 32
      %v912 = vpop.permute.xlu0 %911
      %913 = vrot.lane.b32.xlu0 %v610, 32
      %v914 = vpop.permute.xlu0 %913
      %915 = vrot.lane.b32.xlu0 %v622, 32
      %v916 = vpop.permute.xlu0 %915
      %917 = vrot.lane.b32.xlu0 %v634, 32
      %v918 = vpop.permute.xlu0 %917
      %919 = vrot.lane.b32.xlu0 %v646, 32
      %v920 = vpop.permute.xlu0 %919
      %921 = vrot.lane.b32.xlu0 %v658, 32
      %v922 = vpop.permute.xlu0 %921
      %923 = vrot.lane.b32.xlu0 %v670, 32
      %v924 = vpop.permute.xlu0 %923
      %925 = vrot.lane.b32.xlu0 %v682, 32
      %v926 = vpop.permute.xlu0 %925
      %927 = vrot.lane.b32.xlu0 %v694, 32
      %v928 = vpop.permute.xlu0 %927
      %929 = vrot.lane.b32.xlu0 %v706, 32
      %v930 = vpop.permute.xlu0 %929
      %931 = vrot.lane.b32.xlu0 %v799, 32
      %v932 = vpop.permute.xlu0 %931
      %933 = vrot.lane.b32.xlu0 %v745, 40
      %v934 = vpop.permute.xlu0 %933
      %935 = vrot.lane.b32.xlu0 %v748, 40
      %v936 = vpop.permute.xlu0 %935
      %937 = vrot.lane.b32.xlu0 %v751, 40
      %v938 = vpop.permute.xlu0 %937
      %939 = vrot.lane.b32.xlu0 %v754, 40
      %v940 = vpop.permute.xlu0 %939
      %941 = vrot.lane.b32.xlu0 %v757, 40
      %v942 = vpop.permute.xlu0 %941
      %943 = vrot.lane.b32.xlu0 %v760, 40
      %v944 = vpop.permute.xlu0 %943
      %945 = vrot.lane.b32.xlu0 %v763, 40
      %v946 = vpop.permute.xlu0 %945
      %947 = vrot.lane.b32.xlu0 %v766, 40
      %v948 = vpop.permute.xlu0 %947
      %949 = vrot.lane.b32.xlu0 %v769, 40
      %v950 = vpop.permute.xlu0 %949
      %951 = vrot.lane.b32.xlu0 %v772, 40
      %v952 = vpop.permute.xlu0 %951
      %953 = vrot.lane.b32.xlu0 %v775, 40
      %v954 = vpop.permute.xlu0 %953
      %955 = vrot.lane.b32.xlu0 %v778, 40
      %v956 = vpop.permute.xlu0 %955
      %957 = vrot.lane.b32.xlu0 %v781, 40
      %v958 = vpop.permute.xlu0 %957
      %959 = vrot.lane.b32.xlu0 %v784, 40
      %v960 = vpop.permute.xlu0 %959
      %961 = vrot.lane.b32.xlu0 %v787, 40
      %v962 = vpop.permute.xlu0 %961
      %963 = vrot.lane.b32.xlu0 %v804, 40
      %v964 = vpop.permute.xlu0 %963
      %965 = vrot.lane.b32.xlu0 %v482, 48
      %v966 = vpop.permute.xlu0 %965
      %967 = vrot.lane.b32.xlu0 %v483, 48
      %v968 = vpop.permute.xlu0 %967
      %969 = vrot.lane.b32.xlu0 %v484, 48
      %v970 = vpop.permute.xlu0 %969
      %971 = vrot.lane.b32.xlu0 %v485, 48
      %v972 = vpop.permute.xlu0 %971
      %973 = vrot.lane.b32.xlu0 %v486, 48
      %v974 = vpop.permute.xlu0 %973
      %975 = vrot.lane.b32.xlu0 %v487, 48
      %v976 = vpop.permute.xlu0 %975
      %977 = vrot.lane.b32.xlu0 %v488, 48
      %v978 = vpop.permute.xlu0 %977
      %979 = vrot.lane.b32.xlu0 %v489, 48
      %v980 = vpop.permute.xlu0 %979
      %981 = vrot.lane.b32.xlu0 %v490, 48
      %v982 = vpop.permute.xlu0 %981
      %983 = vrot.lane.b32.xlu0 %v491, 48
      %v984 = vpop.permute.xlu0 %983
      %985 = vrot.lane.b32.xlu0 %v492, 48
      %v986 = vpop.permute.xlu0 %985
      %987 = vrot.lane.b32.xlu0 %v493, 48
      %v988 = vpop.permute.xlu0 %987
      %989 = vrot.lane.b32.xlu0 %v494, 48
      %v990 = vpop.permute.xlu0 %989
      %991 = vrot.lane.b32.xlu0 %v495, 48
      %v992 = vpop.permute.xlu0 %991
      %993 = vrot.lane.b32.xlu0 %v496, 48
      %v994 = vpop.permute.xlu0 %993
      %995 = vrot.lane.b32.xlu0 %v480, 48
      %v996 = vpop.permute.xlu0 %995
      %997 = vrot.lane.b32.xlu0 %v550, 56
      %v998 = vpop.permute.xlu0 %997
      %999 = vrot.lane.b32.xlu0 %v562, 56
      %v1000 = vpop.permute.xlu0 %999
      %1001 = vrot.lane.b32.xlu0 %v574, 56
      %v1002 = vpop.permute.xlu0 %1001
      %1003 = vrot.lane.b32.xlu0 %v586, 56
      %v1004 = vpop.permute.xlu0 %1003
      %1005 = vrot.lane.b32.xlu0 %v598, 56
      %v1006 = vpop.permute.xlu0 %1005
      %1007 = vrot.lane.b32.xlu0 %v610, 56
      %v1008 = vpop.permute.xlu0 %1007
      %1009 = vrot.lane.b32.xlu0 %v622, 56
      %v1010 = vpop.permute.xlu0 %1009
      %1011 = vrot.lane.b32.xlu0 %v634, 56
      %v1012 = vpop.permute.xlu0 %1011
      %1013 = vrot.lane.b32.xlu0 %v646, 56
      %v1014 = vpop.permute.xlu0 %1013
      %1015 = vrot.lane.b32.xlu0 %v658, 56
      %v1016 = vpop.permute.xlu0 %1015
      %1017 = vrot.lane.b32.xlu0 %v670, 56
      %v1018 = vpop.permute.xlu0 %1017
      %1019 = vrot.lane.b32.xlu0 %v682, 56
      %v1020 = vpop.permute.xlu0 %1019
      %1021 = vrot.lane.b32.xlu0 %v694, 56
      %v1022 = vpop.permute.xlu0 %1021
      %1023 = vrot.lane.b32.xlu0 %v706, 56
      %v1024 = vpop.permute.xlu0 %1023
      %1025 = vrot.lane.b32.xlu0 %v799, 56
      %v1026 = vpop.permute.xlu0 %1025
      %1027 = vrot.lane.b32.xlu0 %v526, 56
      %v1028 = vpop.permute.xlu0 %1027
      %1029 = vrot.lane.b32.xlu0 %v748, 64
      %v1030 = vpop.permute.xlu0 %1029
      %1031 = vrot.lane.b32.xlu0 %v751, 64
      %v1032 = vpop.permute.xlu0 %1031
      %1033 = vrot.lane.b32.xlu0 %v754, 64
      %v1034 = vpop.permute.xlu0 %1033
      %1035 = vrot.lane.b32.xlu0 %v757, 64
      %v1036 = vpop.permute.xlu0 %1035
      %1037 = vrot.lane.b32.xlu0 %v760, 64
      %v1038 = vpop.permute.xlu0 %1037
      %1039 = vrot.lane.b32.xlu0 %v763, 64
      %v1040 = vpop.permute.xlu0 %1039
      %1041 = vrot.lane.b32.xlu0 %v766, 64
      %v1042 = vpop.permute.xlu0 %1041
      %1043 = vrot.lane.b32.xlu0 %v769, 64
      %v1044 = vpop.permute.xlu0 %1043
      %1045 = vrot.lane.b32.xlu0 %v772, 64
      %v1046 = vpop.permute.xlu0 %1045
      %1047 = vrot.lane.b32.xlu0 %v775, 64
      %v1048 = vpop.permute.xlu0 %1047
      %1049 = vrot.lane.b32.xlu0 %v778, 64
      %v1050 = vpop.permute.xlu0 %1049
      %1051 = vrot.lane.b32.xlu0 %v781, 64
      %v1052 = vpop.permute.xlu0 %1051
      %1053 = vrot.lane.b32.xlu0 %v784, 64
      %v1054 = vpop.permute.xlu0 %1053
      %1055 = vrot.lane.b32.xlu0 %v787, 64
      %v1056 = vpop.permute.xlu0 %1055
      %1057 = vrot.lane.b32.xlu0 %v804, 64
      %v1058 = vpop.permute.xlu0 %1057
      %1059 = vrot.lane.b32.xlu0 %v742, 64
      %v1060 = vpop.permute.xlu0 %1059
      %vm1061 = vcmask 64512
      %v1063 = vsel %vm1061, %v480, %v806
      %v1065 = vsel %vm1061, %v481, %v808
      %v1067 = vsel %vm1061, %v482, %v810
      %v1069 = vsel %vm1061, %v483, %v812
      %v1071 = vsel %vm1061, %v484, %v814
      %v1073 = vsel %vm1061, %v485, %v816
      %v1075 = vsel %vm1061, %v486, %v818
      %v1077 = vsel %vm1061, %v487, %v820
      %v1079 = vsel %vm1061, %v488, %v822
      %v1081 = vsel %vm1061, %v489, %v824
      %v1083 = vsel %vm1061, %v490, %v826
      %v1085 = vsel %vm1061, %v491, %v828
      %v1087 = vsel %vm1061, %v492, %v830
      %v1089 = vsel %vm1061, %v493, %v832
      %v1091 = vsel %vm1061, %v494, %v834
      %v1093 = vsel %vm1061, %v495, %v836
      %vm1094 = vcmask 130048
      %v1096 = vsel %vm1094, %v1063, %v838
      %v1098 = vsel %vm1094, %v1065, %v840
      %v1100 = vsel %vm1094, %v1067, %v842
      %v1102 = vsel %vm1094, %v1069, %v844
      %v1104 = vsel %vm1094, %v1071, %v846
      %v1106 = vsel %vm1094, %v1073, %v848
      %v1108 = vsel %vm1094, %v1075, %v850
      %v1110 = vsel %vm1094, %v1077, %v852
      %v1112 = vsel %vm1094, %v1079, %v854
      %v1114 = vsel %vm1094, %v1081, %v856
      %v1116 = vsel %vm1094, %v1083, %v858
      %v1118 = vsel %vm1094, %v1085, %v860
      %v1120 = vsel %vm1094, %v1087, %v862
      %v1122 = vsel %vm1094, %v1089, %v864
      %v1124 = vsel %vm1094, %v1091, %v866
      %v1126 = vsel %vm1094, %v1093, %v868
      %vm1127 = vcmask 195584
      %v1129 = vsel %vm1127, %v1096, %v870
      %v1131 = vsel %vm1127, %v1098, %v872
      %v1133 = vsel %vm1127, %v1100, %v874
      %v1135 = vsel %vm1127, %v1102, %v876
      %v1137 = vsel %vm1127, %v1104, %v878
      %v1139 = vsel %vm1127, %v1106, %v880
      %v1141 = vsel %vm1127, %v1108, %v882
      %v1143 = vsel %vm1127, %v1110, %v884
      %v1145 = vsel %vm1127, %v1112, %v886
      %v1147 = vsel %vm1127, %v1114, %v888
      %v1149 = vsel %vm1127, %v1116, %v890
      %v1151 = vsel %vm1127, %v1118, %v892
      %v1153 = vsel %vm1127, %v1120, %v894
      %v1155 = vsel %vm1127, %v1122, %v896
      %v1157 = vsel %vm1127, %v1124, %v898
      %v1159 = vsel %vm1127, %v1126, %v900
      %vm1160 = vcmask 261120
      %v1162 = vsel %vm1160, %v1129, %v902
      %v1164 = vsel %vm1160, %v1131, %v904
      %v1166 = vsel %vm1160, %v1133, %v906
      %v1168 = vsel %vm1160, %v1135, %v908
      %v1170 = vsel %vm1160, %v1137, %v910
      %v1172 = vsel %vm1160, %v1139, %v912
      %v1174 = vsel %vm1160, %v1141, %v914
      %v1176 = vsel %vm1160, %v1143, %v916
      %v1178 = vsel %vm1160, %v1145, %v918
      %v1180 = vsel %vm1160, %v1147, %v920
      %v1182 = vsel %vm1160, %v1149, %v922
      %v1184 = vsel %vm1160, %v1151, %v924
      %v1186 = vsel %vm1160, %v1153, %v926
      %v1188 = vsel %vm1160, %v1155, %v928
      %v1190 = vsel %vm1160, %v1157, %v930
      %v1192 = vsel %vm1160, %v1159, %v932
      %vm1193 = vcmask 326656
      %v1195 = vsel %vm1193, %v1162, %v934
      %v1197 = vsel %vm1193, %v1164, %v936
      %v1199 = vsel %vm1193, %v1166, %v938
      %v1201 = vsel %vm1193, %v1168, %v940
      %v1203 = vsel %vm1193, %v1170, %v942
      %v1205 = vsel %vm1193, %v1172, %v944
      %v1207 = vsel %vm1193, %v1174, %v946
      %v1209 = vsel %vm1193, %v1176, %v948
      %v1211 = vsel %vm1193, %v1178, %v950
      %v1213 = vsel %vm1193, %v1180, %v952
      %v1215 = vsel %vm1193, %v1182, %v954
      %v1217 = vsel %vm1193, %v1184, %v956
      %v1219 = vsel %vm1193, %v1186, %v958
      %v1221 = vsel %vm1193, %v1188, %v960
      %v1223 = vsel %vm1193, %v1190, %v962
      %v1225 = vsel %vm1193, %v1192, %v964
      %vm1226 = vcmask 392192
      %v1228 = vsel %vm1226, %v1195, %v966
      %v1230 = vsel %vm1226, %v1197, %v968
      %v1232 = vsel %vm1226, %v1199, %v970
      %v1234 = vsel %vm1226, %v1201, %v972
      %v1236 = vsel %vm1226, %v1203, %v974
      %v1238 = vsel %vm1226, %v1205, %v976
      %v1240 = vsel %vm1226, %v1207, %v978
      %v1242 = vsel %vm1226, %v1209, %v980
      %v1244 = vsel %vm1226, %v1211, %v982
      %v1246 = vsel %vm1226, %v1213, %v984
      %v1248 = vsel %vm1226, %v1215, %v986
      %v1250 = vsel %vm1226, %v1217, %v988
      %v1252 = vsel %vm1226, %v1219, %v990
      %v1254 = vsel %vm1226, %v1221, %v992
      %v1256 = vsel %vm1226, %v1223, %v994
      %v1258 = vsel %vm1226, %v1225, %v996
      %vm1259 = vcmask 457728
      %v1261 = vsel %vm1259, %v1228, %v998
      %v1263 = vsel %vm1259, %v1230, %v1000
      %v1265 = vsel %vm1259, %v1232, %v1002
      %v1267 = vsel %vm1259, %v1234, %v1004
      %v1269 = vsel %vm1259, %v1236, %v1006
      %v1271 = vsel %vm1259, %v1238, %v1008
      %v1273 = vsel %vm1259, %v1240, %v1010
      %v1275 = vsel %vm1259, %v1242, %v1012
      %v1277 = vsel %vm1259, %v1244, %v1014
      %v1279 = vsel %vm1259, %v1246, %v1016
      %v1281 = vsel %vm1259, %v1248, %v1018
      %v1283 = vsel %vm1259, %v1250, %v1020
      %v1285 = vsel %vm1259, %v1252, %v1022
      %v1287 = vsel %vm1259, %v1254, %v1024
      %v1289 = vsel %vm1259, %v1256, %v1026
      %v1291 = vsel %vm1259, %v1258, %v1028
      %vm1292 = vcmask 523264
      %v1294 = vsel %vm1292, %v1261, %v1030
      %v1296 = vsel %vm1292, %v1263, %v1032
      %v1298 = vsel %vm1292, %v1265, %v1034
      %v1300 = vsel %vm1292, %v1267, %v1036
      %v1302 = vsel %vm1292, %v1269, %v1038
      %v1304 = vsel %vm1292, %v1271, %v1040
      %v1306 = vsel %vm1292, %v1273, %v1042
      %v1308 = vsel %vm1292, %v1275, %v1044
      %v1310 = vsel %vm1292, %v1277, %v1046
      %v1312 = vsel %vm1292, %v1279, %v1048
      %v1314 = vsel %vm1292, %v1281, %v1050
      %v1316 = vsel %vm1292, %v1283, %v1052
      %v1318 = vsel %vm1292, %v1285, %v1054
      %v1320 = vsel %vm1292, %v1287, %v1056
      %v1322 = vsel %vm1292, %v1289, %v1058
      %v1324 = vsel %vm1292, %v1291, %v1060
      %v1325 = vld [vmem:[%s1] sm:$0xf]
      %v1326 = vld [vmem:[%s1 + $0x4] sm:$0xf]
      %v1327 = vld [vmem:[%s1 + $0x8] sm:$0xf]
      %v1328 = vld [vmem:[%s1 + $0xc] sm:$0xf]
      %v1329 = vld [vmem:[%s1 + $0x10] sm:$0xf]
      %v1330 = vld [vmem:[%s1 + $0x14] sm:$0xf]
      %v1331 = vld [vmem:[%s1 + $0x18] sm:$0xf]
      %v1332 = vld [vmem:[%s1 + $0x1c] sm:$0xf]
      %v1333 = vld [vmem:[%s1 + $0x20] sm:$0xf]
      %v1334 = vld [vmem:[%s2] sm:$0x1]
      %v1336 = vlaneseq
      %v1337 = vshrl.u32 %v1336, 7
      %v1338 = vsub.s32 0, %v1337
      %v1339 = vrot.slane %v1334, %v1338
      %v1350 = vunpack.c.l.b16 %v1325
      %v1351 = vunpack.c.l.b16 %v1326
      %v1352 = vunpack.c.l.b16 %v1327
      %v1353 = vunpack.c.l.b16 %v1328
      %v1354 = vunpack.c.l.b16 %v1329
      %v1355 = vunpack.c.l.b16 %v1330
      %v1356 = vunpack.c.l.b16 %v1331
      %v1357 = vunpack.c.l.b16 %v1332
      %v1358 = vunpack.c.l.b16 %v1333
      %v1359 = vpack.c.b16 %v1351, %v1350
      %v1360 = vpack.c.b16 %v1353, %v1352
      %v1361 = vpack.c.b16 %v1355, %v1354
      %v1362 = vpack.c.b16 %v1357, %v1356
      %v1363 = vpack.c.b16 %v1358, %v1358
      %vm1368 = vcmask 588800
      %v1369 = vsel %vm1368, %v1294, 0
      %v1371 = vsel %vm1368, %v1296, 0
      %v1373 = vsel %vm1368, %v1298, 0
      %v1375 = vsel %vm1368, %v1300, 0
      %v1377 = vsel %vm1368, %v1302, 0
      %v1379 = vsel %vm1368, %v1304, 0
      %v1381 = vsel %vm1368, %v1306, 0
      %v1383 = vsel %vm1368, %v1308, 0
      %v1385 = vsel %vm1368, %v1310, 0
      %v1387 = vsel %vm1368, %v1312, 0
      %v1389 = vsel %vm1368, %v1314, 0
      %v1391 = vsel %vm1368, %v1316, 0
      %v1393 = vsel %vm1368, %v1318, 0
      %v1395 = vsel %vm1368, %v1320, 0
      %v1397 = vsel %vm1368, %v1322, 0
      %v1399 = vsel %vm1368, %v1324, 0
      %vm1401 = vcmask 1043456
      %v1403 = vsel %vm1401, %v1363, 0
      %1405 = vmatprep.subr.bf16.mxu0 0
      %1406 = vmatpush1.bf16.msra.mxu0 %v1359
      %1407 = vmatprep.subr.bf16.mxu0 0
      %1408 = vmatpush1.bf16.msra.mxu0 %v1360
      %1409 = vmatprep.subr.bf16.mxu0 0
      %1410 = vmatpush1.bf16.msra.mxu0 %v1361
      %1411 = vmatprep.subr.bf16.mxu0 0
      %1412 = vmatpush1.bf16.msra.mxu0 %v1362
      %1413 = vmatprep.subr.bf16.mxu0 0
      %1414 = vmatpush1.bf16.msra.mxu0 %v1403
      %1415 = vmatprep.subr.bf16.mxu0 0
      %1416 = vmatpush1.bf16.msra.mxu0 0
      %1417 = vmatprep.subr.bf16.mxu0 0
      %1418 = vmatpush1.bf16.msra.mxu0 0
      %1419 = vmatprep.subr.bf16.mxu0 0
      %1420 = vmatpush1.bf16.msra.mxu0 0
      %1421 = vmatprep.subr.bf16.mxu0 0
      %1422 = vmatpush1.bf16.msra.mxu0 0
      %1423 = vmatprep.subr.bf16.mxu0 0
      %1424 = vmatpush1.bf16.msra.mxu0 0
      %1425 = vmatprep.subr.bf16.mxu0 0
      %1426 = vmatpush1.bf16.msra.mxu0 0
      %1427 = vmatprep.subr.bf16.mxu0 0
      %1428 = vmatpush1.bf16.msra.mxu0 0
      %1429 = vmatprep.subr.bf16.mxu0 0
      %1430 = vmatpush1.bf16.msra.mxu0 0
      %1431 = vmatprep.subr.bf16.mxu0 0
      %1432 = vmatpush1.bf16.msra.mxu0 0
      %1433 = vmatprep.subr.bf16.mxu0 0
      %1434 = vmatpush1.bf16.msra.mxu0 0
      %1435 = vmatprep.subr.bf16.mxu0 0
      %1436 = vmatpush1.bf16.msra.mxu0 0
      %1437 = vmatprep.mubr.bf16.mxu0 0
      %1438 = vmatmul.mubr.bf16.gmra.mrb[0].mxu0 %v1369
      %v1439 = vpop.f32.mrb[0].mxu0
      %v1440 = vadd.f32 %v1339, %v1439
      %v1441 = vpop.f32.mrb[0].mxu0
      %v1442 = vpop.f32.mrb[0].mxu0
      %v1443 = vadd.f32 %v1339, %v1442
      %v1444 = vpop.f32.mrb[0].mxu0
      %1445 = vmatprep.mubr.bf16.mxu0 0
      %1446 = vmatmul.mubr.bf16.gmra.mrb[0].mxu0 %v1371
      %v1447 = vpop.f32.mrb[0].mxu0
      %v1448 = vadd.f32 %v1339, %v1447
      %v1449 = vpop.f32.mrb[0].mxu0
      %v1450 = vpop.f32.mrb[0].mxu0
      %v1451 = vadd.f32 %v1339, %v1450
      %v1452 = vpop.f32.mrb[0].mxu0
      %1453 = vmatprep.mubr.bf16.mxu0 0
      %1454 = vmatmul.mubr.bf16.gmra.mrb[0].mxu0 %v1373
      %v1455 = vpop.f32.mrb[0].mxu0
      %v1456 = vadd.f32 %v1339, %v1455
      %v1457 = vpop.f32.mrb[0].mxu0
      %v1458 = vpop.f32.mrb[0].mxu0
      %v1459 = vadd.f32 %v1339, %v1458
      %v1460 = vpop.f32.mrb[0].mxu0
      %1461 = vmatprep.mubr.bf16.mxu0 0
      %1462 = vmatmul.mubr.bf16.gmra.mrb[0].mxu0 %v1375
      %v1463 = vpop.f32.mrb[0].mxu0
      %v1464 = vadd.f32 %v1339, %v1463
      %v1465 = vpop.f32.mrb[0].mxu0
      %v1466 = vpop.f32.mrb[0].mxu0
      %v1467 = vadd.f32 %v1339, %v1466
      %v1468 = vpop.f32.mrb[0].mxu0
      %1469 = vmatprep.mubr.bf16.mxu0 0
      %1470 = vmatmul.mubr.bf16.gmra.mrb[0].mxu0 %v1377
      %v1471 = vpop.f32.mrb[0].mxu0
      %v1472 = vadd.f32 %v1339, %v1471
      %v1473 = vpop.f32.mrb[0].mxu0
      %v1474 = vpop.f32.mrb[0].mxu0
      %v1475 = vadd.f32 %v1339, %v1474
      %v1476 = vpop.f32.mrb[0].mxu0
      %1477 = vmatprep.mubr.bf16.mxu0 0
      %1478 = vmatmul.mubr.bf16.gmra.mrb[0].mxu0 %v1379
      %v1479 = vpop.f32.mrb[0].mxu0
      %v1480 = vadd.f32 %v1339, %v1479
      %v1481 = vpop.f32.mrb[0].mxu0
      %v1482 = vpop.f32.mrb[0].mxu0
      %v1483 = vadd.f32 %v1339, %v1482
      %v1484 = vpop.f32.mrb[0].mxu0
      %1485 = vmatprep.mubr.bf16.mxu0 0
      %1486 = vmatmul.mubr.bf16.gmra.mrb[0].mxu0 %v1381
      %v1487 = vpop.f32.mrb[0].mxu0
      %v1488 = vadd.f32 %v1339, %v1487
      %v1489 = vpop.f32.mrb[0].mxu0
      %v1490 = vpop.f32.mrb[0].mxu0
      %v1491 = vadd.f32 %v1339, %v1490
      %v1492 = vpop.f32.mrb[0].mxu0
      %1493 = vmatprep.mubr.bf16.mxu0 0
      %1494 = vmatmul.mubr.bf16.gmra.mrb[0].mxu0 %v1383
      %v1495 = vpop.f32.mrb[0].mxu0
      %v1496 = vadd.f32 %v1339, %v1495
      %v1497 = vpop.f32.mrb[0].mxu0
      %v1498 = vpop.f32.mrb[0].mxu0
      %v1499 = vadd.f32 %v1339, %v1498
      %v1500 = vpop.f32.mrb[0].mxu0
      %1501 = vmatprep.mubr.bf16.mxu0 0
      %1502 = vmatmul.mubr.bf16.gmra.mrb[0].mxu0 %v1385
      %v1503 = vpop.f32.mrb[0].mxu0
      %v1504 = vadd.f32 %v1339, %v1503
      %v1505 = vpop.f32.mrb[0].mxu0
      %v1506 = vpop.f32.mrb[0].mxu0
      %v1507 = vadd.f32 %v1339, %v1506
      %v1508 = vpop.f32.mrb[0].mxu0
      %1509 = vmatprep.mubr.bf16.mxu0 0
      %1510 = vmatmul.mubr.bf16.gmra.mrb[0].mxu0 %v1387
      %v1511 = vpop.f32.mrb[0].mxu0
      %v1512 = vadd.f32 %v1339, %v1511
      %v1513 = vpop.f32.mrb[0].mxu0
      %v1514 = vpop.f32.mrb[0].mxu0
      %v1515 = vadd.f32 %v1339, %v1514
      %v1516 = vpop.f32.mrb[0].mxu0
      %1517 = vmatprep.mubr.bf16.mxu0 0
      %1518 = vmatmul.mubr.bf16.gmra.mrb[0].mxu0 %v1389
      %v1519 = vpop.f32.mrb[0].mxu0
      %v1520 = vadd.f32 %v1339, %v1519
      %v1521 = vpop.f32.mrb[0].mxu0
      %v1522 = vpop.f32.mrb[0].mxu0
      %v1523 = vadd.f32 %v1339, %v1522
      %v1524 = vpop.f32.mrb[0].mxu0
      %1525 = vmatprep.mubr.bf16.mxu0 0
      %1526 = vmatmul.mubr.bf16.gmra.mrb[0].mxu0 %v1391
      %v1527 = vpop.f32.mrb[0].mxu0
      %v1528 = vadd.f32 %v1339, %v1527
      %v1529 = vpop.f32.mrb[0].mxu0
      %v1530 = vpop.f32.mrb[0].mxu0
      %v1531 = vadd.f32 %v1339, %v1530
      %v1532 = vpop.f32.mrb[0].mxu0
      %1533 = vmatprep.mubr.bf16.mxu0 0
      %1534 = vmatmul.mubr.bf16.gmra.mrb[0].mxu0 %v1393
      %v1535 = vpop.f32.mrb[0].mxu0
      %v1536 = vadd.f32 %v1339, %v1535
      %v1537 = vpop.f32.mrb[0].mxu0
      %v1538 = vpop.f32.mrb[0].mxu0
      %v1539 = vadd.f32 %v1339, %v1538
      %v1540 = vpop.f32.mrb[0].mxu0
      %1541 = vmatprep.mubr.bf16.mxu0 0
      %1542 = vmatmul.mubr.bf16.gmra.mrb[0].mxu0 %v1395
      %v1543 = vpop.f32.mrb[0].mxu0
      %v1544 = vadd.f32 %v1339, %v1543
      %v1545 = vpop.f32.mrb[0].mxu0
      %v1546 = vpop.f32.mrb[0].mxu0
      %v1547 = vadd.f32 %v1339, %v1546
      %v1548 = vpop.f32.mrb[0].mxu0
      %1549 = vmatprep.mubr.bf16.mxu0 0
      %1550 = vmatmul.mubr.bf16.gmra.mrb[0].mxu0 %v1397
      %v1551 = vpop.f32.mrb[0].mxu0
      %v1552 = vadd.f32 %v1339, %v1551
      %v1553 = vpop.f32.mrb[0].mxu0
      %v1554 = vpop.f32.mrb[0].mxu0
      %v1555 = vadd.f32 %v1339, %v1554
      %v1556 = vpop.f32.mrb[0].mxu0
      %1557 = vmatprep.mubr.bf16.mxu0 0
      %1558 = vmatmul.mubr.bf16.gmra.mrb[0].mxu0 %v1399
      %v1559 = vpop.f32.mrb[0].mxu0
      %v1560 = vadd.f32 %v1339, %v1559
      %v1561 = vpop.f32.mrb[0].mxu0
      %v1562 = vpop.f32.mrb[0].mxu0
      %v1563 = vadd.f32 %v1339, %v1562
      %v1564 = vpop.f32.mrb[0].mxu0
      %1565 = vdwg.mxu0
      %v1566 = vmax.f32 %v1440, 0.0
      %v1567 = vmax.f32 %v1443, 0.0
      %v1568 = vmax.f32 %v1448, 0.0
      %v1569 = vmax.f32 %v1451, 0.0
      %v1570 = vmax.f32 %v1456, 0.0
      %v1571 = vmax.f32 %v1459, 0.0
      %v1572 = vmax.f32 %v1464, 0.0
      %v1573 = vmax.f32 %v1467, 0.0
      %v1574 = vmax.f32 %v1472, 0.0
      %v1575 = vmax.f32 %v1475, 0.0
      %v1576 = vmax.f32 %v1480, 0.0
      %v1577 = vmax.f32 %v1483, 0.0
      %v1578 = vmax.f32 %v1488, 0.0
      %v1579 = vmax.f32 %v1491, 0.0
      %v1580 = vmax.f32 %v1496, 0.0
      %v1581 = vmax.f32 %v1499, 0.0
      %v1582 = vmax.f32 %v1504, 0.0
      %v1583 = vmax.f32 %v1507, 0.0
      %v1584 = vmax.f32 %v1512, 0.0
      %v1585 = vmax.f32 %v1515, 0.0
      %v1586 = vmax.f32 %v1520, 0.0
      %v1587 = vmax.f32 %v1523, 0.0
      %v1588 = vmax.f32 %v1528, 0.0
      %v1589 = vmax.f32 %v1531, 0.0
      %v1590 = vmax.f32 %v1536, 0.0
      %v1591 = vmax.f32 %v1539, 0.0
      %v1592 = vmax.f32 %v1544, 0.0
      %v1593 = vmax.f32 %v1547, 0.0
      %v1594 = vmax.f32 %v1552, 0.0
      %v1595 = vmax.f32 %v1555, 0.0
      %v1596 = vmax.f32 %v1560, 0.0
      %v1597 = vmax.f32 %v1563, 0.0
      %1598 = vst.msk [vmem:[%s205] sm:$0xff] %vm1061, %v1566
      %1599 = vst.msk [vmem:[%s205 + $0x8] sm:$0xff] %vm1061, %v1567
      %1600 = vst.msk [vmem:[%s205 + $0x10] sm:$0xff] %vm1061, %v1568
      %1601 = vst.msk [vmem:[%s205 + $0x18] sm:$0xff] %vm1061, %v1569
      %1602 = vst.msk [vmem:[%s205 + $0x20] sm:$0xff] %vm1061, %v1570
      %1603 = vst.msk [vmem:[%s205 + $0x28] sm:$0xff] %vm1061, %v1571
      %1604 = vst.msk [vmem:[%s205 + $0x30] sm:$0xff] %vm1061, %v1572
      %1605 = vst.msk [vmem:[%s205 + $0x38] sm:$0xff] %vm1061, %v1573
      %1606 = vst.msk [vmem:[%s205 + $0x40] sm:$0xff] %vm1061, %v1574
      %1607 = vst.msk [vmem:[%s205 + $0x48] sm:$0xff] %vm1061, %v1575
      %1608 = vst.msk [vmem:[%s205 + $0x50] sm:$0xff] %vm1061, %v1576
      %1609 = vst.msk [vmem:[%s205 + $0x58] sm:$0xff] %vm1061, %v1577
      %1610 = vst.msk [vmem:[%s205 + $0x60] sm:$0xff] %vm1061, %v1578
      %1611 = vst.msk [vmem:[%s205 + $0x68] sm:$0xff] %vm1061, %v1579
      %1612 = vst.msk [vmem:[%s205 + $0x70] sm:$0xff] %vm1061, %v1580
      %1613 = vst.msk [vmem:[%s205 + $0x78] sm:$0xff] %vm1061, %v1581
      %1614 = vst.msk [vmem:[%s205 + $0x80] sm:$0xff] %vm1061, %v1582
      %1615 = vst.msk [vmem:[%s205 + $0x88] sm:$0xff] %vm1061, %v1583
      %1616 = vst.msk [vmem:[%s205 + $0x90] sm:$0xff] %vm1061, %v1584
      %1617 = vst.msk [vmem:[%s205 + $0x98] sm:$0xff] %vm1061, %v1585
      %1618 = vst.msk [vmem:[%s205 + $0xa0] sm:$0xff] %vm1061, %v1586
      %1619 = vst.msk [vmem:[%s205 + $0xa8] sm:$0xff] %vm1061, %v1587
      %1620 = vst.msk [vmem:[%s205 + $0xb0] sm:$0xff] %vm1061, %v1588
      %1621 = vst.msk [vmem:[%s205 + $0xb8] sm:$0xff] %vm1061, %v1589
      %1622 = vst.msk [vmem:[%s205 + $0xc0] sm:$0xff] %vm1061, %v1590
      %1623 = vst.msk [vmem:[%s205 + $0xc8] sm:$0xff] %vm1061, %v1591
      %1624 = vst.msk [vmem:[%s205 + $0xd0] sm:$0xff] %vm1061, %v1592
      %1625 = vst.msk [vmem:[%s205 + $0xd8] sm:$0xff] %vm1061, %v1593
      %1626 = vst.msk [vmem:[%s205 + $0xe0] sm:$0xff] %vm1061, %v1594
      %1627 = vst.msk [vmem:[%s205 + $0xe8] sm:$0xff] %vm1061, %v1595
      %1628 = vst.msk [vmem:[%s205 + $0xf0] sm:$0xff] %vm1061, %v1596
      %1629 = vst.msk [vmem:[%s205 + $0xf8] sm:$0xff] %vm1061, %v1597
      %vm1630 = vcmp.ge.f32.partialorder %v1440, 0.0
      %vm1631 = vcmp.ge.f32.partialorder %v1443, 0.0
      %vm1632 = vcmp.ge.f32.partialorder %v1448, 0.0
      %vm1633 = vcmp.ge.f32.partialorder %v1451, 0.0
      %vm1634 = vcmp.ge.f32.partialorder %v1456, 0.0
      %vm1635 = vcmp.ge.f32.partialorder %v1459, 0.0
      %vm1636 = vcmp.ge.f32.partialorder %v1464, 0.0
      %vm1637 = vcmp.ge.f32.partialorder %v1467, 0.0
      %vm1638 = vcmp.ge.f32.partialorder %v1472, 0.0
      %vm1639 = vcmp.ge.f32.partialorder %v1475, 0.0
      %vm1640 = vcmp.ge.f32.partialorder %v1480, 0.0
      %vm1641 = vcmp.ge.f32.partialorder %v1483, 0.0
      %vm1642 = vcmp.ge.f32.partialorder %v1488, 0.0
      %vm1643 = vcmp.ge.f32.partialorder %v1491, 0.0
      %vm1644 = vcmp.ge.f32.partialorder %v1496, 0.0
      %vm1645 = vcmp.ge.f32.partialorder %v1499, 0.0
      %vm1646 = vcmp.ge.f32.partialorder %v1504, 0.0
      %vm1647 = vcmp.ge.f32.partialorder %v1507, 0.0
      %vm1648 = vcmp.ge.f32.partialorder %v1512, 0.0
      %vm1649 = vcmp.ge.f32.partialorder %v1515, 0.0
      %vm1650 = vcmp.ge.f32.partialorder %v1520, 0.0
      %vm1651 = vcmp.ge.f32.partialorder %v1523, 0.0
      %vm1652 = vcmp.ge.f32.partialorder %v1528, 0.0
      %vm1653 = vcmp.ge.f32.partialorder %v1531, 0.0
      %vm1654 = vcmp.ge.f32.partialorder %v1536, 0.0
      %vm1655 = vcmp.ge.f32.partialorder %v1539, 0.0
      %vm1656 = vcmp.ge.f32.partialorder %v1544, 0.0
      %vm1657 = vcmp.ge.f32.partialorder %v1547, 0.0
      %vm1658 = vcmp.ge.f32.partialorder %v1552, 0.0
      %vm1659 = vcmp.ge.f32.partialorder %v1555, 0.0
      %vm1660 = vcmp.ge.f32.partialorder %v1560, 0.0
      %vm1661 = vcmp.ge.f32.partialorder %v1563, 0.0
      %v1662 = vmul.f32 %v1440, 0.1
      %v1663 = vmul.f32 %v1443, 0.1
      %v1664 = vmul.f32 %v1448, 0.1
      %v1665 = vmul.f32 %v1451, 0.1
      %v1666 = vmul.f32 %v1456, 0.1
      %v1667 = vmul.f32 %v1459, 0.1
      %v1668 = vmul.f32 %v1464, 0.1
      %v1669 = vmul.f32 %v1467, 0.1
      %v1670 = vmul.f32 %v1472, 0.1
      %v1671 = vmul.f32 %v1475, 0.1
      %v1672 = vmul.f32 %v1480, 0.1
      %v1673 = vmul.f32 %v1483, 0.1
      %v1674 = vmul.f32 %v1488, 0.1
      %v1675 = vmul.f32 %v1491, 0.1
      %v1676 = vmul.f32 %v1496, 0.1
      %v1677 = vmul.f32 %v1499, 0.1
      %v1678 = vmul.f32 %v1504, 0.1
      %v1679 = vmul.f32 %v1507, 0.1
      %v1680 = vmul.f32 %v1512, 0.1
      %v1681 = vmul.f32 %v1515, 0.1
      %v1682 = vmul.f32 %v1520, 0.1
      %v1683 = vmul.f32 %v1523, 0.1
      %v1684 = vmul.f32 %v1528, 0.1
      %v1685 = vmul.f32 %v1531, 0.1
      %v1686 = vmul.f32 %v1536, 0.1
      %v1687 = vmul.f32 %v1539, 0.1
      %v1688 = vmul.f32 %v1544, 0.1
      %v1689 = vmul.f32 %v1547, 0.1
      %v1690 = vmul.f32 %v1552, 0.1
      %v1691 = vmul.f32 %v1555, 0.1
      %v1692 = vmul.f32 %v1560, 0.1
      %v1693 = vmul.f32 %v1563, 0.1
      %v1694 = vsel %vm1630, %v1440, %v1662
      %v1695 = vsel %vm1631, %v1443, %v1663
      %v1696 = vsel %vm1632, %v1448, %v1664
      %v1697 = vsel %vm1633, %v1451, %v1665
      %v1698 = vsel %vm1634, %v1456, %v1666
      %v1699 = vsel %vm1635, %v1459, %v1667
      %v1700 = vsel %vm1636, %v1464, %v1668
      %v1701 = vsel %vm1637, %v1467, %v1669
      %v1702 = vsel %vm1638, %v1472, %v1670
      %v1703 = vsel %vm1639, %v1475, %v1671
      %v1704 = vsel %vm1640, %v1480, %v1672
      %v1705 = vsel %vm1641, %v1483, %v1673
      %v1706 = vsel %vm1642, %v1488, %v1674
      %v1707 = vsel %vm1643, %v1491, %v1675
      %v1708 = vsel %vm1644, %v1496, %v1676
      %v1709 = vsel %vm1645, %v1499, %v1677
      %v1710 = vsel %vm1646, %v1504, %v1678
      %v1711 = vsel %vm1647, %v1507, %v1679
      %v1712 = vsel %vm1648, %v1512, %v1680
      %v1713 = vsel %vm1649, %v1515, %v1681
      %v1714 = vsel %vm1650, %v1520, %v1682
      %v1715 = vsel %vm1651, %v1523, %v1683
      %v1716 = vsel %vm1652, %v1528, %v1684
      %v1717 = vsel %vm1653, %v1531, %v1685
      %v1718 = vsel %vm1654, %v1536, %v1686
      %v1719 = vsel %vm1655, %v1539, %v1687
      %v1720 = vsel %vm1656, %v1544, %v1688
      %v1721 = vsel %vm1657, %v1547, %v1689
      %v1722 = vsel %vm1658, %v1552, %v1690
      %v1723 = vsel %vm1659, %v1555, %v1691
      %v1724 = vsel %vm1660, %v1560, %v1692
      %v1725 = vsel %vm1661, %v1563, %v1693
      %v1726 = vpack.c.bf16 %v1695, %v1694
      %v1727 = vpack.c.bf16 %v1697, %v1696
      %v1728 = vpack.c.bf16 %v1699, %v1698
      %v1729 = vpack.c.bf16 %v1701, %v1700
      %v1730 = vpack.c.bf16 %v1703, %v1702
      %v1731 = vpack.c.bf16 %v1705, %v1704
      %v1732 = vpack.c.bf16 %v1707, %v1706
      %v1733 = vpack.c.bf16 %v1709, %v1708
      %v1734 = vpack.c.bf16 %v1711, %v1710
      %v1735 = vpack.c.bf16 %v1713, %v1712
      %v1736 = vpack.c.bf16 %v1715, %v1714
      %v1737 = vpack.c.bf16 %v1717, %v1716
      %v1738 = vpack.c.bf16 %v1719, %v1718
      %v1739 = vpack.c.bf16 %v1721, %v1720
      %v1740 = vpack.c.bf16 %v1723, %v1722
      %v1741 = vpack.c.bf16 %v1725, %v1724
      %v1758 = vunpack.c.l.b16 %v1726
      %v1759 = vunpack.c.h.b16 %v1726
      %v1760 = vunpack.c.l.b16 %v1727
      %v1761 = vunpack.c.h.b16 %v1727
      %v1762 = vunpack.c.l.b16 %v1728
      %v1763 = vunpack.c.h.b16 %v1728
      %v1764 = vunpack.c.l.b16 %v1729
      %v1765 = vunpack.c.h.b16 %v1729
      %v1766 = vunpack.c.l.b16 %v1730
      %v1767 = vunpack.c.h.b16 %v1730
      %v1768 = vunpack.c.l.b16 %v1731
      %v1769 = vunpack.c.h.b16 %v1731
      %v1770 = vunpack.c.l.b16 %v1732
      %v1771 = vunpack.c.h.b16 %v1732
      %v1772 = vunpack.c.l.b16 %v1733
      %v1773 = vunpack.c.h.b16 %v1733
      %v1774 = vunpack.c.l.b16 %v1734
      %v1775 = vunpack.c.h.b16 %v1734
      %v1776 = vunpack.c.l.b16 %v1735
      %v1777 = vunpack.c.h.b16 %v1735
      %v1778 = vunpack.c.l.b16 %v1736
      %v1779 = vunpack.c.h.b16 %v1736
      %v1780 = vunpack.c.l.b16 %v1737
      %v1781 = vunpack.c.h.b16 %v1737
      %v1782 = vunpack.c.l.b16 %v1738
      %v1783 = vunpack.c.h.b16 %v1738
      %v1784 = vunpack.c.l.b16 %v1739
      %v1785 = vunpack.c.h.b16 %v1739
      %v1786 = vunpack.c.l.b16 %v1740
      %v1787 = vunpack.c.h.b16 %v1740
      %v1788 = vunpack.c.l.b16 %v1741
      %v1789 = vunpack.c.h.b16 %v1741
      %v1790 = vpack.c.b16 %v1758, %v1758
      %v1791 = vpack.c.b16 %v1759, %v1759
      %v1792 = vpack.c.b16 %v1760, %v1760
      %v1793 = vpack.c.b16 %v1761, %v1761
      %v1794 = vpack.c.b16 %v1762, %v1762
      %v1795 = vpack.c.b16 %v1763, %v1763
      %v1796 = vpack.c.b16 %v1764, %v1764
      %v1797 = vpack.c.b16 %v1765, %v1765
      %v1798 = vpack.c.b16 %v1766, %v1766
      %v1799 = vpack.c.b16 %v1767, %v1767
      %v1800 = vpack.c.b16 %v1768, %v1768
      %v1801 = vpack.c.b16 %v1769, %v1769
      %v1802 = vpack.c.b16 %v1770, %v1770
      %v1803 = vpack.c.b16 %v1771, %v1771
      %v1804 = vpack.c.b16 %v1772, %v1772
      %v1805 = vpack.c.b16 %v1773, %v1773
      %v1806 = vpack.c.b16 %v1774, %v1774
      %v1807 = vpack.c.b16 %v1775, %v1775
      %v1808 = vpack.c.b16 %v1776, %v1776
      %v1809 = vpack.c.b16 %v1777, %v1777
      %v1810 = vpack.c.b16 %v1778, %v1778
      %v1811 = vpack.c.b16 %v1779, %v1779
      %v1812 = vpack.c.b16 %v1780, %v1780
      %v1813 = vpack.c.b16 %v1781, %v1781
      %v1814 = vpack.c.b16 %v1782, %v1782
      %v1815 = vpack.c.b16 %v1783, %v1783
      %v1816 = vpack.c.b16 %v1784, %v1784
      %v1817 = vpack.c.b16 %v1785, %v1785
      %v1818 = vpack.c.b16 %v1786, %v1786
      %v1819 = vpack.c.b16 %v1787, %v1787
      %v1820 = vpack.c.b16 %v1788, %v1788
      %v1821 = vpack.c.b16 %v1789, %v1789
      %1822 = vrot.lane.b32.xlu0 %v1790, 120
      %v1823 = vpop.permute.xlu0 %1822
      %1824 = vrot.lane.b32.xlu0 %v1791, 120
      %v1825 = vpop.permute.xlu0 %1824
      %1826 = vrot.lane.b32.xlu0 %v1792, 120
      %v1827 = vpop.permute.xlu0 %1826
      %1828 = vrot.lane.b32.xlu0 %v1793, 120
      %v1829 = vpop.permute.xlu0 %1828
      %1830 = vrot.lane.b32.xlu0 %v1794, 120
      %v1831 = vpop.permute.xlu0 %1830
      %1832 = vrot.lane.b32.xlu0 %v1795, 120
      %v1833 = vpop.permute.xlu0 %1832
      %1834 = vrot.lane.b32.xlu0 %v1796, 120
      %v1835 = vpop.permute.xlu0 %1834
      %1836 = vrot.lane.b32.xlu0 %v1797, 120
      %v1837 = vpop.permute.xlu0 %1836
      %1838 = vrot.lane.b32.xlu0 %v1798, 120
      %v1839 = vpop.permute.xlu0 %1838
      %1840 = vrot.lane.b32.xlu0 %v1799, 120
      %v1841 = vpop.permute.xlu0 %1840
      %1842 = vrot.lane.b32.xlu0 %v1800, 120
      %v1843 = vpop.permute.xlu0 %1842
      %1844 = vrot.lane.b32.xlu0 %v1801, 120
      %v1845 = vpop.permute.xlu0 %1844
      %1846 = vrot.lane.b32.xlu0 %v1802, 120
      %v1847 = vpop.permute.xlu0 %1846
      %1848 = vrot.lane.b32.xlu0 %v1803, 120
      %v1849 = vpop.permute.xlu0 %1848
      %1850 = vrot.lane.b32.xlu0 %v1804, 120
      %v1851 = vpop.permute.xlu0 %1850
      %1852 = vrot.lane.b32.xlu0 %v1805, 120
      %v1853 = vpop.permute.xlu0 %1852
      %1854 = vrot.lane.b32.xlu0 %v1806, 120
      %v1855 = vpop.permute.xlu0 %1854
      %1856 = vrot.lane.b32.xlu0 %v1807, 120
      %v1857 = vpop.permute.xlu0 %1856
      %1858 = vrot.lane.b32.xlu0 %v1808, 120
      %v1859 = vpop.permute.xlu0 %1858
      %1860 = vrot.lane.b32.xlu0 %v1809, 120
      %v1861 = vpop.permute.xlu0 %1860
      %1862 = vrot.lane.b32.xlu0 %v1810, 120
      %v1863 = vpop.permute.xlu0 %1862
      %1864 = vrot.lane.b32.xlu0 %v1811, 120
      %v1865 = vpop.permute.xlu0 %1864
      %1866 = vrot.lane.b32.xlu0 %v1812, 120
      %v1867 = vpop.permute.xlu0 %1866
      %1868 = vrot.lane.b32.xlu0 %v1813, 120
      %v1869 = vpop.permute.xlu0 %1868
      %1870 = vrot.lane.b32.xlu0 %v1814, 120
      %v1871 = vpop.permute.xlu0 %1870
      %1872 = vrot.lane.b32.xlu0 %v1815, 120
      %v1873 = vpop.permute.xlu0 %1872
      %1874 = vrot.lane.b32.xlu0 %v1816, 120
      %v1875 = vpop.permute.xlu0 %1874
      %1876 = vrot.lane.b32.xlu0 %v1817, 120
      %v1877 = vpop.permute.xlu0 %1876
      %1878 = vrot.lane.b32.xlu0 %v1818, 120
      %v1879 = vpop.permute.xlu0 %1878
      %1880 = vrot.lane.b32.xlu0 %v1819, 120
      %v1881 = vpop.permute.xlu0 %1880
      %1882 = vrot.lane.b32.xlu0 %v1820, 120
      %v1883 = vpop.permute.xlu0 %1882
      %1884 = vrot.lane.b32.xlu0 %v1821, 120
      %v1885 = vpop.permute.xlu0 %1884
      %vm1918 = vcmask 27648
      %1919 = vst.msk [vmem:[%s210] sm:$0xf] %vm1918, %v1823
      %1920 = vst.msk [vmem:[%s210 + $0x4] sm:$0xf] %vm1918, %v1825
      %1921 = vst.msk [vmem:[%s210 + $0x8] sm:$0xf] %vm1918, %v1827
      %1922 = vst.msk [vmem:[%s210 + $0xc] sm:$0xf] %vm1918, %v1829
      %1923 = vst.msk [vmem:[%s210 + $0x10] sm:$0xf] %vm1918, %v1831
      %1924 = vst.msk [vmem:[%s210 + $0x14] sm:$0xf] %vm1918, %v1833
      %1925 = vst.msk [vmem:[%s210 + $0x18] sm:$0xf] %vm1918, %v1835
      %1926 = vst.msk [vmem:[%s210 + $0x1c] sm:$0xf] %vm1918, %v1837
      %1927 = vst.msk [vmem:[%s210 + $0x20] sm:$0xf] %vm1918, %v1839
      %1928 = vst.msk [vmem:[%s210 + $0x24] sm:$0xf] %vm1918, %v1841
      %1929 = vst.msk [vmem:[%s210 + $0x28] sm:$0xf] %vm1918, %v1843
      %1930 = vst.msk [vmem:[%s210 + $0x2c] sm:$0xf] %vm1918, %v1845
      %1931 = vst.msk [vmem:[%s210 + $0x30] sm:$0xf] %vm1918, %v1847
      %1932 = vst.msk [vmem:[%s210 + $0x34] sm:$0xf] %vm1918, %v1849
      %1933 = vst.msk [vmem:[%s210 + $0x38] sm:$0xf] %vm1918, %v1851
      %1934 = vst.msk [vmem:[%s210 + $0x3c] sm:$0xf] %vm1918, %v1853
      %1935 = vst.msk [vmem:[%s210 + $0x40] sm:$0xf] %vm1918, %v1855
      %1936 = vst.msk [vmem:[%s210 + $0x44] sm:$0xf] %vm1918, %v1857
      %1937 = vst.msk [vmem:[%s210 + $0x48] sm:$0xf] %vm1918, %v1859
      %1938 = vst.msk [vmem:[%s210 + $0x4c] sm:$0xf] %vm1918, %v1861
      %1939 = vst.msk [vmem:[%s210 + $0x50] sm:$0xf] %vm1918, %v1863
      %1940 = vst.msk [vmem:[%s210 + $0x54] sm:$0xf] %vm1918, %v1865
      %1941 = vst.msk [vmem:[%s210 + $0x58] sm:$0xf] %vm1918, %v1867
      %1942 = vst.msk [vmem:[%s210 + $0x5c] sm:$0xf] %vm1918, %v1869
      %1943 = vst.msk [vmem:[%s210 + $0x60] sm:$0xf] %vm1918, %v1871
      %1944 = vst.msk [vmem:[%s210 + $0x64] sm:$0xf] %vm1918, %v1873
      %1945 = vst.msk [vmem:[%s210 + $0x68] sm:$0xf] %vm1918, %v1875
      %1946 = vst.msk [vmem:[%s210 + $0x6c] sm:$0xf] %vm1918, %v1877
      %1947 = vst.msk [vmem:[%s210 + $0x70] sm:$0xf] %vm1918, %v1879
      %1948 = vst.msk [vmem:[%s210 + $0x74] sm:$0xf] %vm1918, %v1881
      %1949 = vst.msk [vmem:[%s210 + $0x78] sm:$0xf] %vm1918, %v1883
      %1950 = vst.msk [vmem:[%s210 + $0x7c] sm:$0xf] %vm1918, %v1885
      %p1951 = scmp.lt.s32.totalorder %s16, 1
      %s1952 = scalar_select %p1951, %s16, 1
      %s1953 = smul.addr %s1952, 32
      %s1954 = smul.addr %s1953, 8
      %s1955 = scalar_lea.vmem %s3, %s1954
      %p1956 = scmp.lt.s32.totalorder %s16, 1
      %s1957 = scalar_select %p1956, %s16, 1
      %s1958 = smul.addr %s1957, 32
      %s1959 = smul.addr %s1958, 4
      %s1960 = scalar_lea.vmem %s4, %s1959
      // Predicated region
      $region33: #{ssh_forward.3} parent=31 // pred_check
        %p1961 = pneg %p102
      $region34: #{ssh_forward.3} parent=31 // pred_check_branch
        %1963 = sbr.rel (%p1961) target = $region36
      $region35: #{ssh_forward.3} parent=31 // pred_region
        _
      $region36: #{ssh_forward.3} parent=31 // pred_fallthru
        _
      // Predicated region
      $region37: #{ssh_forward.3} parent=31 // pred_check
        %p1964 = pneg %p128
      $region38: #{ssh_forward.3} parent=31 // pred_check_branch
        %1966 = sbr.rel (%p1964) target = $region40
      $region39: #{ssh_forward.3} parent=31 // pred_region
        _
      $region40: #{ssh_forward.3} parent=31 // pred_fallthru
        _
    $region32: #{ssh_forward.3} parent=5 // pred_fallthru
      _
    %p1967 = scmp.le.s32.totalorder 2, %s11
    // Predicated region
    $region41: #{ssh_forward.3} parent=5 // pred_check
      %p1968 = pneg %p1967
    $region42: #{ssh_forward.3} parent=5 // pred_check_branch
      %1970 = sbr.rel (%p1968) target = $region44
    $region43: #{ssh_forward.3} parent=5 // pred_region
      %s1971 = ssub.s32 %s11, 2
      // Predicated region
      $region45: #{ssh_forward.3} parent=43 // pred_check
        %p1972 = pneg %p108
      $region46: #{ssh_forward.3} parent=43 // pred_check_branch
        %1974 = sbr.rel (%p1972) target = $region48
      $region47: #{ssh_forward.3} parent=43 // pred_region
        %p1975 = scmp.lt.s32.totalorder %s17, 1
        %s1976 = scalar_select %p1975, %s17, 1
        %s1977 = smul.addr %s1976, 32
        %s1978 = smul.addr %s1977, 8
        %s1979 = scalar_lea.vmem %s3, %s1978
      $region48: #{ssh_forward.3} parent=43 // pred_fallthru
        _
      // Predicated region
      $region49: #{ssh_forward.3} parent=43 // pred_check
        %p1980 = pneg %p134
      $region50: #{ssh_forward.3} parent=43 // pred_check_branch
        %1982 = sbr.rel (%p1980) target = $region52
      $region51: #{ssh_forward.3} parent=43 // pred_region
        %p1983 = scmp.lt.s32.totalorder %s17, 1
        %s1984 = scalar_select %p1983, %s17, 1
        %s1985 = smul.addr %s1984, 32
        %s1986 = smul.addr %s1985, 4
        %s1987 = scalar_lea.vmem %s4, %s1986
      $region52: #{ssh_forward.3} parent=43 // pred_fallthru
        _
    $region44: #{ssh_forward.3} parent=5 // pred_fallthru
      _
  $region6: #{ssh_forward.3} parent=0 // loop_footer
    %s15 = sadd.s32 1, %s11
  $region7: #{ssh_forward.3} parent=0 // loop_footer_branch
    %10 = sbr.rel target = $region3
  $region8: #{ssh_forward.3} parent=0 // loop_exit
    _

</llo_original>
